<compile_context>
chip_gen: v7x
topology: tpu7x:2x2x1
jax: 0.10.0
libtpu: 0.0.40
codegen_flags: <defaults>
</compile_context>

<pallas_src>
import jax
import jax.numpy as jnp
from jax.experimental import pallas as pl
from jax.experimental.pallas import tpu as pltpu


def _cdiv(a: int, b: int) -> int:
    return -(-a // b)


def _round_up(x: int, m: int) -> int:
    return _cdiv(x, m) * m


def _pad_k(k: int) -> int:
    """Padded K: multiple of 128; if K-tiling will kick in, multiple of 640."""
    kp = _round_up(k, 128)
    if kp > 1024:
        kp = _round_up(kp, 640)   # 640 = 5*128 -> K tiles stay lane-aligned
    return kp


# ----------------------------------------------------------------------------
# Pallas kernels: out = relu(A @ B + bias).  bf16 operands, f32 accumulation.
# ----------------------------------------------------------------------------
def _mm_bias_relu_single_kernel(a_ref, b_ref, bias_ref, o_ref):
    # K fits in one tile: no scratch accumulator needed.
    acc = jnp.dot(a_ref[...], b_ref[...], preferred_element_type=jnp.float32)
    o_ref[...] = jnp.maximum(acc + bias_ref[...], 0.0).astype(o_ref.dtype)


def _mm_bias_relu_ktiled_kernel(a_ref, b_ref, bias_ref, o_ref, acc_ref):
    @pl.when(pl.program_id(1) == 0)
    def _():
        acc_ref[...] = jnp.zeros_like(acc_ref)

    acc_ref[...] += jnp.dot(a_ref[...], b_ref[...],
                            preferred_element_type=jnp.float32)   # MXU

    @pl.when(pl.program_id(1) == pl.num_programs(1) - 1)
    def _():
        o_ref[...] = jnp.maximum(acc_ref[...] + bias_ref[...], 0.0).astype(o_ref.dtype)


def matmul_bias_relu(a, w_p, bias_p, *, out_dtype):
    """relu(a @ w + bias).  w_p (Kp, Np) bf16 and bias_p (1, Np) f32 are pre-padded."""
    M, K = a.shape
    Kp, Np = w_p.shape
    assert K <= Kp and bias_p.shape == (1, Np)

    # M tiling: one block up to 1024 rows, else ~512-row (8-aligned) tiles.
    Mp = _round_up(max(M, 8), 8)
    if Mp <= 1024:
        tm, gm = Mp, 1
    else:
        gm = _cdiv(Mp, 512)
        tm = _round_up(_cdiv(Mp, gm), 8)
        Mp = tm * gm

    a_p = jnp.pad(a.astype(jnp.bfloat16), ((0, Mp - M), (0, Kp - K)))

    if Kp <= 1024:
        # ---- single-K fast path: no scratch accumulator --------------------
        out = pl.pallas_call(
            _mm_bias_relu_single_kernel,
            out_shape=jax.ShapeDtypeStruct((Mp, Np), out_dtype),
            grid_spec=pltpu.PrefetchScalarGridSpec(
                num_scalar_prefetch=0,
                grid=(gm,),
                in_specs=[
                    pl.BlockSpec((tm, Kp), lambda i: (i, 0)),
                    pl.BlockSpec((Kp, Np), lambda i: (0, 0)),
                    pl.BlockSpec((1, Np), lambda i: (0, 0)),
                ],
                out_specs=pl.BlockSpec((tm, Np), lambda i: (i, 0)),
            ),
            compiler_params=pltpu.CompilerParams(
                dimension_semantics=("parallel",),
                vmem_limit_bytes=32 * 1024 * 1024,
            ),
        )(a_p, w_p, bias_p)
    else:
        # ---- K-tiled accumulator path (fc layer) ----------------------------
        tk = 640
        assert Kp % tk == 0
        gk = Kp // tk
        out = pl.pallas_call(
            _mm_bias_relu_ktiled_kernel,
            out_shape=jax.ShapeDtypeStruct((Mp, Np), out_dtype),
            grid_spec=pltpu.PrefetchScalarGridSpec(
                num_scalar_prefetch=0,
                grid=(gm, gk),
                in_specs=[
                    pl.BlockSpec((tm, tk), lambda i, k: (i, k)),
                    pl.BlockSpec((tk, Np), lambda i, k: (k, 0)),
                    pl.BlockSpec((1, Np), lambda i, k: (0, 0)),
                ],
                out_specs=pl.BlockSpec((tm, Np), lambda i, k: (i, 0)),
                scratch_shapes=[pltpu.VMEM((tm, Np), jnp.float32)],
            ),
            compiler_params=pltpu.CompilerParams(
                dimension_semantics=("parallel", "arbitrary"),
                vmem_limit_bytes=32 * 1024 * 1024,
            ),
        )(a_p, w_p, bias_p)
    return out


# ----------------------------------------------------------------------------
# im2col glue (plain JAX: static strided slices + reshapes only).
# Patch column order is (c, i, j), matching OIHW weights reshaped to (O, C*kh*kw).
# ----------------------------------------------------------------------------
def _im2col_nhwc(x, kh, kw, stride):
    B, H, W, C = x.shape
    oh = (H - kh) // stride + 1
    ow = (W - kw) // stride + 1
    cols = []
    for i in range(kh):
        for j in range(kw):
            cols.append(
                x[:, i:i + stride * (oh - 1) + 1:stride,
                     j:j + stride * (ow - 1) + 1:stride, :]
            )
    p = jnp.stack(cols, axis=-1)                 # (B, oh, ow, C, kh*kw)
    p = p.reshape(B, oh, ow, C, kh, kw)
    return p.reshape(B * oh * ow, C * kh * kw), oh, ow


def _conv_relu(x_nhwc, w_p, bias_p, kh, kw, stride, out_channels):
    B = x_nhwc.shape[0]
    patches, oh, ow = _im2col_nhwc(x_nhwc, kh, kw, stride)
    out = matmul_bias_relu(patches, w_p, bias_p, out_dtype=jnp.bfloat16)
    return out[:B * oh * ow, :out_channels].reshape(B, oh, ow, out_channels)


# ----------------------------------------------------------------------------
# One-time parameter preparation (hoisted out of the forward pass).
# ----------------------------------------------------------------------------
def prepare_params(params):
    def prep(w_mat, b_vec):
        K, N = w_mat.shape
        Kp, Np = _pad_k(K), _round_up(N, 128)
        w_p = jnp.zeros((Kp, Np), jnp.bfloat16).at[:K, :N].set(
            w_mat.astype(jnp.bfloat16))
        b_p = jnp.zeros((1, Np), jnp.float32).at[0, :N].set(
            b_vec.astype(jnp.float32))
        return w_p, b_p

    w1 = params["w1"].astype(jnp.float32)
    # Fold x/255 - 0.5 into conv1:  w1' = w1/255,  b1' = b1 - 0.5 * sum(w1).
    w1_mat = (w1 / 255.0).reshape(32, 4 * 8 * 8).T                      # (256, 32)
    b1_fold = params["b1"] - 0.5 * jnp.sum(w1.reshape(32, -1), axis=1)  # (32,)

    w2_mat = params["w2"].reshape(64, 32 * 4 * 4).T                     # (512, 64)
    w3_mat = params["w3"].reshape(64, 64 * 3 * 3).T                     # (576, 64)
    # Permute fc input dim from NCHW-flatten (c,h,w) to NHWC-flatten (h,w,c)
    # order so the pre-fc transpose disappears.
    wfc_mat = params["wfc"].reshape(512, 64, 7, 7).transpose(2, 3, 1, 0)
    wfc_mat = wfc_mat.reshape(3136, 512)

    prep_p = {}
    prep_p["w1"], prep_p["b1"] = prep(w1_mat, b1_fold)
    prep_p["w2"], prep_p["b2"] = prep(w2_mat, params["b2"])
    prep_p["w3"], prep_p["b3"] = prep(w3_mat, params["b3"])
    prep_p["wfc"], prep_p["bfc"] = prep(wfc_mat, params["bfc"])
    return prep_p


# ----------------------------------------------------------------------------
# NatureCNN forward (expects prepared params).
# ----------------------------------------------------------------------------
def nature_cnn_forward(x_nchw, prep_p):
    x = jnp.transpose(x_nchw, (0, 2, 3, 1)).astype(jnp.bfloat16)      # NHWC pixels
    x = _conv_relu(x, prep_p["w1"], prep_p["b1"], 8, 8, 4, 32)        # (B,20,20,32)
    x = _conv_relu(x, prep_p["w2"], prep_p["b2"], 4, 4, 2, 64)        # (B, 9, 9,64)
    x = _conv_relu(x, prep_p["w3"], prep_p["b3"], 3, 3, 1, 64)        # (B, 7, 7,64)
    B = x.shape[0]
    feat = x.reshape(B, 7 * 7 * 64)                                   # NHWC flatten
    out = matmul_bias_relu(feat, prep_p["wfc"], prep_p["bfc"], out_dtype=jnp.float32)
    return out[:B, :512]


# ----------------------------------------------------------------------------
# Deterministic parameter init (same shapes as the nn.Module).
# ----------------------------------------------------------------------------
def init_params(key):
    def uniform(k, shape, fan_in):
        bound = 1.0 / jnp.sqrt(jnp.float32(fan_in))
        return jax.random.uniform(k, shape, jnp.float32, -bound, bound)

    ks = jax.random.split(key, 8)
    return {
        "w1": uniform(ks[0], (32, 4, 8, 8), 4 * 8 * 8),
        "b1": uniform(ks[1], (32,), 4 * 8 * 8),
        "w2": uniform(ks[2], (64, 32, 4, 4), 32 * 4 * 4),
        "b2": uniform(ks[3], (64,), 32 * 4 * 4),
        "w3": uniform(ks[4], (64, 64, 3, 3), 64 * 3 * 3),
        "b3": uniform(ks[5], (64,), 64 * 3 * 3),
        "wfc": uniform(ks[6], (512, 3136), 3136),
        "bfc": uniform(ks[7], (512,), 3136),
    }


# ----------------------------------------------------------------------------
# Pure-JAX f32 reference (correctness check only).
# ----------------------------------------------------------------------------
def _ref_forward(x_nchw, params):
    xf = x_nchw.astype(jnp.float32) / 255.0 - 0.5

    def conv(y, w, b, s):
        out = jax.lax.conv_general_dilated(
            y, w, (s, s), "VALID", dimension_numbers=("NCHW", "OIHW", "NCHW"))
        return jax.nn.relu(out + b[None, :, None, None])

    y = conv(xf, params["w1"], params["b1"], 4)
    y = conv(y, params["w2"], params["b2"], 2)
    y = conv(y, params["w3"], params["b3"], 1)
    y = y.reshape(y.shape[0], -1)
    return jax.nn.relu(y @ params["wfc"].T + params["bfc"])


if __name__ == "__main__":
    key = jax.random.PRNGKey(0)
    kx, kp = jax.random.split(key)

    # fc1 expects 3136 = 64*7*7, which pins the input spatial size to 84x84.
    B = 2
    x = jax.random.uniform(kx, (B, 4, 84, 84), jnp.float32, 0.0, 255.0)
    params = init_params(kp)

    prep_p = jax.block_until_ready(prepare_params(params))   # once, outside forward
    fwd = jax.jit(nature_cnn_forward)

    out = jax.block_until_ready(fwd(x, prep_p))
    assert out.shape == (B, 512), out.shape

    ref = jax.block_until_ready(_ref_forward(x, params))
    # bf16 MXU operands vs f32 reference -> loosen tolerance accordingly.
    max_err = float(jnp.max(jnp.abs(out - ref)))
    assert jnp.allclose(out, ref, atol=5e-2, rtol=5e-2), max_err

    print("KERNEL_OK")
</pallas_src>

<mosaic_0001>
module attributes {stable_mosaic.version = 11 : i64} {
  func.func @_mm_bias_relu_single_kernel(%arg0: i32, %arg1: memref<800x256xbf16, #tpu.memory_space<vmem>>, %arg2: memref<256x128xbf16, #tpu.memory_space<vmem>>, %arg3: memref<1x128xf32, #tpu.memory_space<vmem>>, %arg4: memref<800x128xbf16, #tpu.memory_space<vmem>>) attributes {dimension_semantics = [#tpu.dimension_semantics<parallel>], iteration_bounds = array<i64: 1>, scalar_prefetch = 0 : i64, scratch_operands = 0 : i64, tpu.core_type = #tpu.core_type<tc>, window_params = [{transform_indices = @transform_0, window_bounds = array<i64: 800, 256>}, {pipeline_mode = #tpu.pipeline_mode<synchronous>, transform_indices = @transform_1, window_bounds = array<i64: 256, 128>}, {pipeline_mode = #tpu.pipeline_mode<synchronous>, transform_indices = @transform_2, window_bounds = array<i64: 1, 128>}, {transform_indices = @transform_3, window_bounds = array<i64: 800, 128>}]} {
    %c0 = arith.constant 0 : index
    %c0_0 = arith.constant 0 : index
    %0 = vector.load %arg1[%c0, %c0_0] : memref<800x256xbf16, #tpu.memory_space<vmem>>, vector<800x256xbf16>
    %c0_1 = arith.constant 0 : index
    %c0_2 = arith.constant 0 : index
    %1 = vector.load %arg2[%c0_1, %c0_2] : memref<256x128xbf16, #tpu.memory_space<vmem>>, vector<256x128xbf16>
    %cst = arith.constant dense<0.000000e+00> : vector<800x128xf32>
    %2 = tpu.matmul %0, %1, %cst {dimension_numbers = #tpu.dot_dimension_numbers<[1], [0], [0], [1], [0, 0, 1, 1], [], []>} : vector<800x256xbf16>, vector<256x128xbf16>, vector<800x128xf32> -> vector<800x128xf32>
    %c0_3 = arith.constant 0 : index
    %c0_4 = arith.constant 0 : index
    %3 = vector.load %arg3[%c0_3, %c0_4] : memref<1x128xf32, #tpu.memory_space<vmem>>, vector<1x128xf32>
    %4 = vector.broadcast %3 : vector<1x128xf32> to vector<800x128xf32>
    %5 = arith.addf %2, %4 : vector<800x128xf32>
    %cst_5 = arith.constant 0.000000e+00 : f32
    %6 = vector.broadcast %cst_5 : f32 to vector<800x128xf32>
    %7 = arith.maximumf %5, %6 : vector<800x128xf32>
    %8 = arith.truncf %7 : vector<800x128xf32> to vector<800x128xbf16>
    %c0_6 = arith.constant 0 : index
    %c0_7 = arith.constant 0 : index
    %9 = vector.load %arg4[%c0_6, %c0_7] : memref<800x128xbf16, #tpu.memory_space<vmem>>, vector<800x128xbf16>
    tpu.vector_store %arg4[%c0_6, %c0_7], %8 {strides = array<i32>} : memref<800x128xbf16, #tpu.memory_space<vmem>>, vector<800x128xbf16>,
    return
  }
  func.func @transform_0(%arg0: i32) -> (i32, i32) {
    %c0_i32 = arith.constant 0 : i32
    %c0_i32_0 = arith.constant 0 : i32
    return %arg0, %c0_i32 : i32, i32
  }
  func.func @transform_1(%arg0: i32) -> (i32, i32) {
    %c0_i32 = arith.constant 0 : i32
    %c0_i32_0 = arith.constant 0 : i32
    %c0_i32_1 = arith.constant 0 : i32
    return %c0_i32, %c0_i32_0 : i32, i32
  }
  func.func @transform_2(%arg0: i32) -> (i32, i32) {
    %c0_i32 = arith.constant 0 : i32
    %c0_i32_0 = arith.constant 0 : i32
    %c0_i32_1 = arith.constant 0 : i32
    return %c0_i32, %c0_i32_0 : i32, i32
  }
  func.func @transform_3(%arg0: i32) -> (i32, i32) {
    %c0_i32 = arith.constant 0 : i32
    %c0_i32_0 = arith.constant 0 : i32
    return %arg0, %c0_i32 : i32, i32
  }
}

module attributes {stable_mosaic.version = 11 : i64} {
  func.func @_mm_bias_relu_single_kernel(%arg0: i32, %arg1: memref<168x512xbf16, #tpu.memory_space<vmem>>, %arg2: memref<512x128xbf16, #tpu.memory_space<vmem>>, %arg3: memref<1x128xf32, #tpu.memory_space<vmem>>, %arg4: memref<168x128xbf16, #tpu.memory_space<vmem>>) attributes {dimension_semantics = [#tpu.dimension_semantics<parallel>], iteration_bounds = array<i64: 1>, scalar_prefetch = 0 : i64, scratch_operands = 0 : i64, tpu.core_type = #tpu.core_type<tc>, window_params = [{transform_indices = @transform_0, window_bounds = array<i64: 168, 512>}, {pipeline_mode = #tpu.pipeline_mode<synchronous>, transform_indices = @transform_1, window_bounds = array<i64: 512, 128>}, {pipeline_mode = #tpu.pipeline_mode<synchronous>, transform_indices = @transform_2, window_bounds = array<i64: 1, 128>}, {transform_indices = @transform_3, window_bounds = array<i64: 168, 128>}]} {
    %c0 = arith.constant 0 : index
    %c0_0 = arith.constant 0 : index
    %0 = vector.load %arg1[%c0, %c0_0] : memref<168x512xbf16, #tpu.memory_space<vmem>>, vector<168x512xbf16>
    %c0_1 = arith.constant 0 : index
    %c0_2 = arith.constant 0 : index
    %1 = vector.load %arg2[%c0_1, %c0_2] : memref<512x128xbf16, #tpu.memory_space<vmem>>, vector<512x128xbf16>
    %cst = arith.constant dense<0.000000e+00> : vector<168x128xf32>
    %2 = tpu.matmul %0, %1, %cst {dimension_numbers = #tpu.dot_dimension_numbers<[1], [0], [0], [1], [0, 0, 1, 1], [], []>} : vector<168x512xbf16>, vector<512x128xbf16>, vector<168x128xf32> -> vector<168x128xf32>
    %c0_3 = arith.constant 0 : index
    %c0_4 = arith.constant 0 : index
    %3 = vector.load %arg3[%c0_3, %c0_4] : memref<1x128xf32, #tpu.memory_space<vmem>>, vector<1x128xf32>
    %4 = vector.broadcast %3 : vector<1x128xf32> to vector<168x128xf32>
    %5 = arith.addf %2, %4 : vector<168x128xf32>
    %cst_5 = arith.constant 0.000000e+00 : f32
    %6 = vector.broadcast %cst_5 : f32 to vector<168x128xf32>
    %7 = arith.maximumf %5, %6 : vector<168x128xf32>
    %8 = arith.truncf %7 : vector<168x128xf32> to vector<168x128xbf16>
    %c0_6 = arith.constant 0 : index
    %c0_7 = arith.constant 0 : index
    %9 = vector.load %arg4[%c0_6, %c0_7] : memref<168x128xbf16, #tpu.memory_space<vmem>>, vector<168x128xbf16>
    tpu.vector_store %arg4[%c0_6, %c0_7], %8 {strides = array<i32>} : memref<168x128xbf16, #tpu.memory_space<vmem>>, vector<168x128xbf16>,
    return
  }
  func.func @transform_0(%arg0: i32) -> (i32, i32) {
    %c0_i32 = arith.constant 0 : i32
    %c0_i32_0 = arith.constant 0 : i32
    return %arg0, %c0_i32 : i32, i32
  }
  func.func @transform_1(%arg0: i32) -> (i32, i32) {
    %c0_i32 = arith.constant 0 : i32
    %c0_i32_0 = arith.constant 0 : i32
    %c0_i32_1 = arith.constant 0 : i32
    return %c0_i32, %c0_i32_0 : i32, i32
  }
  func.func @transform_2(%arg0: i32) -> (i32, i32) {
    %c0_i32 = arith.constant 0 : i32
    %c0_i32_0 = arith.constant 0 : i32
    %c0_i32_1 = arith.constant 0 : i32
    return %c0_i32, %c0_i32_0 : i32, i32
  }
  func.func @transform_3(%arg0: i32) -> (i32, i32) {
    %c0_i32 = arith.constant 0 : i32
    %c0_i32_0 = arith.constant 0 : i32
    return %arg0, %c0_i32 : i32, i32
  }
}

module attributes {stable_mosaic.version = 11 : i64} {
  func.func @_mm_bias_relu_single_kernel(%arg0: i32, %arg1: memref<104x640xbf16, #tpu.memory_space<vmem>>, %arg2: memref<640x128xbf16, #tpu.memory_space<vmem>>, %arg3: memref<1x128xf32, #tpu.memory_space<vmem>>, %arg4: memref<104x128xbf16, #tpu.memory_space<vmem>>) attributes {dimension_semantics = [#tpu.dimension_semantics<parallel>], iteration_bounds = array<i64: 1>, scalar_prefetch = 0 : i64, scratch_operands = 0 : i64, tpu.core_type = #tpu.core_type<tc>, window_params = [{transform_indices = @transform_0, window_bounds = array<i64: 104, 640>}, {pipeline_mode = #tpu.pipeline_mode<synchronous>, transform_indices = @transform_1, window_bounds = array<i64: 640, 128>}, {pipeline_mode = #tpu.pipeline_mode<synchronous>, transform_indices = @transform_2, window_bounds = array<i64: 1, 128>}, {transform_indices = @transform_3, window_bounds = array<i64: 104, 128>}]} {
    %c0 = arith.constant 0 : index
    %c0_0 = arith.constant 0 : index
    %0 = vector.load %arg1[%c0, %c0_0] : memref<104x640xbf16, #tpu.memory_space<vmem>>, vector<104x640xbf16>
    %c0_1 = arith.constant 0 : index
    %c0_2 = arith.constant 0 : index
    %1 = vector.load %arg2[%c0_1, %c0_2] : memref<640x128xbf16, #tpu.memory_space<vmem>>, vector<640x128xbf16>
    %cst = arith.constant dense<0.000000e+00> : vector<104x128xf32>
    %2 = tpu.matmul %0, %1, %cst {dimension_numbers = #tpu.dot_dimension_numbers<[1], [0], [0], [1], [0, 0, 1, 1], [], []>} : vector<104x640xbf16>, vector<640x128xbf16>, vector<104x128xf32> -> vector<104x128xf32>
    %c0_3 = arith.constant 0 : index
    %c0_4 = arith.constant 0 : index
    %3 = vector.load %arg3[%c0_3, %c0_4] : memref<1x128xf32, #tpu.memory_space<vmem>>, vector<1x128xf32>
    %4 = vector.broadcast %3 : vector<1x128xf32> to vector<104x128xf32>
    %5 = arith.addf %2, %4 : vector<104x128xf32>
    %cst_5 = arith.constant 0.000000e+00 : f32
    %6 = vector.broadcast %cst_5 : f32 to vector<104x128xf32>
    %7 = arith.maximumf %5, %6 : vector<104x128xf32>
    %8 = arith.truncf %7 : vector<104x128xf32> to vector<104x128xbf16>
    %c0_6 = arith.constant 0 : index
    %c0_7 = arith.constant 0 : index
    %9 = vector.load %arg4[%c0_6, %c0_7] : memref<104x128xbf16, #tpu.memory_space<vmem>>, vector<104x128xbf16>
    tpu.vector_store %arg4[%c0_6, %c0_7], %8 {strides = array<i32>} : memref<104x128xbf16, #tpu.memory_space<vmem>>, vector<104x128xbf16>,
    return
  }
  func.func @transform_0(%arg0: i32) -> (i32, i32) {
    %c0_i32 = arith.constant 0 : i32
    %c0_i32_0 = arith.constant 0 : i32
    return %arg0, %c0_i32 : i32, i32
  }
  func.func @transform_1(%arg0: i32) -> (i32, i32) {
    %c0_i32 = arith.constant 0 : i32
    %c0_i32_0 = arith.constant 0 : i32
    %c0_i32_1 = arith.constant 0 : i32
    return %c0_i32, %c0_i32_0 : i32, i32
  }
  func.func @transform_2(%arg0: i32) -> (i32, i32) {
    %c0_i32 = arith.constant 0 : i32
    %c0_i32_0 = arith.constant 0 : i32
    %c0_i32_1 = arith.constant 0 : i32
    return %c0_i32, %c0_i32_0 : i32, i32
  }
  func.func @transform_3(%arg0: i32) -> (i32, i32) {
    %c0_i32 = arith.constant 0 : i32
    %c0_i32_0 = arith.constant 0 : i32
    return %arg0, %c0_i32 : i32, i32
  }
}

module attributes {stable_mosaic.version = 11 : i64} {
  func.func @_mm_bias_relu_ktiled_kernel(%arg0: i32, %arg1: i32, %arg2: memref<8x640xbf16, #tpu.memory_space<vmem>>, %arg3: memref<640x512xbf16, #tpu.memory_space<vmem>>, %arg4: memref<1x512xf32, #tpu.memory_space<vmem>>, %arg5: memref<8x512xf32, #tpu.memory_space<vmem>>, %arg6: memref<8x512xf32, #tpu.memory_space<vmem>>) attributes {dimension_semantics = [#tpu.dimension_semantics<parallel>, #tpu.dimension_semantics<arbitrary>], iteration_bounds = array<i64: 1, 5>, scalar_prefetch = 0 : i64, scratch_operands = 1 : i64, tpu.core_type = #tpu.core_type<tc>, window_params = [{transform_indices = @transform_0, window_bounds = array<i64: 8, 640>}, {transform_indices = @transform_1, window_bounds = array<i64: 640, 512>}, {pipeline_mode = #tpu.pipeline_mode<synchronous>, transform_indices = @transform_2, window_bounds = array<i64: 1, 512>}, {transform_indices = @transform_3, window_bounds = array<i64: 8, 512>}]} {
    %c0_i32 = arith.constant 0 : i32
    %0 = arith.cmpi eq, %arg1, %c0_i32 : i32
    %1 = arith.extui %0 : i1 to i32
    %c0_i32_0 = arith.constant 0 : i32
    %2 = arith.cmpi ne, %1, %c0_i32_0 : i32
    scf.if %2 {
      %cst_9 = arith.constant 0.000000e+00 : f32
      %12 = vector.broadcast %cst_9 : f32 to vector<8x512xf32>
      %c0_10 = arith.constant 0 : index
      %c0_11 = arith.constant 0 : index
      %13 = vector.load %arg6[%c0_10, %c0_11] : memref<8x512xf32, #tpu.memory_space<vmem>>, vector<8x512xf32>
      tpu.vector_store %arg6[%c0_10, %c0_11], %12 {strides = array<i32>} : memref<8x512xf32, #tpu.memory_space<vmem>>, vector<8x512xf32>,
    } else {
    }
    %c0 = arith.constant 0 : index
    %c0_1 = arith.constant 0 : index
    %3 = vector.load %arg6[%c0, %c0_1] : memref<8x512xf32, #tpu.memory_space<vmem>>, vector<8x512xf32>
    %c0_2 = arith.constant 0 : index
    %c0_3 = arith.constant 0 : index
    %4 = vector.load %arg2[%c0_2, %c0_3] : memref<8x640xbf16, #tpu.memory_space<vmem>>, vector<8x640xbf16>
    %c0_4 = arith.constant 0 : index
    %c0_5 = arith.constant 0 : index
    %5 = vector.load %arg3[%c0_4, %c0_5] : memref<640x512xbf16, #tpu.memory_space<vmem>>, vector<640x512xbf16>
    %cst = arith.constant dense<0.000000e+00> : vector<8x512xf32>
    %6 = tpu.matmul %4, %5, %cst {dimension_numbers = #tpu.dot_dimension_numbers<[1], [0], [0], [1], [0, 0, 1, 1], [], []>} : vector<8x640xbf16>, vector<640x512xbf16>, vector<8x512xf32> -> vector<8x512xf32>
    %7 = arith.addf %3, %6 : vector<8x512xf32>
    %c0_6 = arith.constant 0 : index
    %c0_7 = arith.constant 0 : index
    %8 = vector.load %arg6[%c0_6, %c0_7] : memref<8x512xf32, #tpu.memory_space<vmem>>, vector<8x512xf32>
    tpu.vector_store %arg6[%c0_6, %c0_7], %7 {strides = array<i32>} : memref<8x512xf32, #tpu.memory_space<vmem>>, vector<8x512xf32>,
    %c4_i32 = arith.constant 4 : i32
    %9 = arith.cmpi eq, %arg1, %c4_i32 : i32
    %10 = arith.extui %9 : i1 to i32
    %c0_i32_8 = arith.constant 0 : i32
    %11 = arith.cmpi ne, %10, %c0_i32_8 : i32
    scf.if %11 {
      %c0_9 = arith.constant 0 : index
      %c0_10 = arith.constant 0 : index
      %12 = vector.load %arg6[%c0_9, %c0_10] : memref<8x512xf32, #tpu.memory_space<vmem>>, vector<8x512xf32>
      %c0_11 = arith.constant 0 : index
      %c0_12 = arith.constant 0 : index
      %13 = vector.load %arg4[%c0_11, %c0_12] : memref<1x512xf32, #tpu.memory_space<vmem>>, vector<1x512xf32>
      %14 = vector.broadcast %13 : vector<1x512xf32> to vector<8x512xf32>
      %15 = arith.addf %12, %14 : vector<8x512xf32>
      %cst_13 = arith.constant 0.000000e+00 : f32
      %16 = vector.broadcast %cst_13 : f32 to vector<8x512xf32>
      %17 = arith.maximumf %15, %16 : vector<8x512xf32>
      %c0_14 = arith.constant 0 : index
      %c0_15 = arith.constant 0 : index
      %18 = vector.load %arg5[%c0_14, %c0_15] : memref<8x512xf32, #tpu.memory_space<vmem>>, vector<8x512xf32>
      tpu.vector_store %arg5[%c0_14, %c0_15], %17 {strides = array<i32>} : memref<8x512xf32, #tpu.memory_space<vmem>>, vector<8x512xf32>,
    } else {
    }
    return
  }
  func.func @transform_0(%arg0: i32, %arg1: i32) -> (i32, i32) {
    %c0_i32 = arith.constant 0 : i32
    return %arg0, %arg1 : i32, i32
  }
  func.func @transform_1(%arg0: i32, %arg1: i32) -> (i32, i32) {
    %c0_i32 = arith.constant 0 : i32
    %c0_i32_0 = arith.constant 0 : i32
    return %arg1, %c0_i32 : i32, i32
  }
  func.func @transform_2(%arg0: i32, %arg1: i32) -> (i32, i32) {
    %c0_i32 = arith.constant 0 : i32
    %c0_i32_0 = arith.constant 0 : i32
    %c0_i32_1 = arith.constant 0 : i32
    return %c0_i32, %c0_i32_0 : i32, i32
  }
  func.func @transform_3(%arg0: i32, %arg1: i32) -> (i32, i32) {
    %c0_i32 = arith.constant 0 : i32
    %c0_i32_0 = arith.constant 0 : i32
    return %arg0, %c0_i32 : i32, i32
  }
}

</mosaic_0001>

<llo_original>
// kernel: nature_cnn_forward.4
$region0: #{nature_cnn_forward.4}
  #allocation0 [shape = 'u32[]', space=smem, size = 0x4, offset = 0x4, fixed_abs, tag = 'smem constant byte address 0x4 - core index']
  #allocation1 [shape = 'u32[144,128]{1,0:T(1,128)}', space=vmem, size = 0x12000, scoped, tag = 'internal scratch']
  %s0 = inlined_call_operand.vmem [shape: bf16[800,256], index: 0, kind: input, shape index: {}]
  %s1 = inlined_call_operand.vmem [shape: bf16[256,128], index: 1, kind: input, shape index: {}]
  %s2 = inlined_call_operand.vmem [shape: f32[1,128], index: 2, kind: input, shape index: {}]
  %s3 = inlined_call_operand.vmem [shape: bf16[800,128], index: 3, kind: output, shape index: {}]
  %s4 = sld [smem:[#allocation0]]
  $region22: #{nature_cnn_forward.4} parent=0
    _
  %s6 = ssub.s32 1, %s4
  %s7 = scalar_select 0, %s6, %s4
  // Predicated region
  $region2: #{nature_cnn_forward.4} parent=0 // pred_check
    _
  $region3: #{nature_cnn_forward.4} parent=0 // pred_check_branch
    %9 = sbr.rel (0) target = $region5
  $region4: #{nature_cnn_forward.4} parent=0 // pred_region
    _
  $region5: #{nature_cnn_forward.4} parent=0 // pred_fallthru
    _
  // Predicated region
  $region6: #{nature_cnn_forward.4} parent=0 // pred_check
    _
  $region7: #{nature_cnn_forward.4} parent=0 // pred_check_branch
    %11 = sbr.rel (0) target = $region9
  $region8: #{nature_cnn_forward.4} parent=0 // pred_region
    _
  $region9: #{nature_cnn_forward.4} parent=0 // pred_fallthru
    _
  // Predicated region
  $region10: #{nature_cnn_forward.4} parent=0 // pred_check
    _
  $region11: #{nature_cnn_forward.4} parent=0 // pred_check_branch
    %13 = sbr.rel (0) target = $region13
  $region12: #{nature_cnn_forward.4} parent=0 // pred_region
    _
  $region13: #{nature_cnn_forward.4} parent=0 // pred_fallthru
    _
  %v15 = vld [vmem:[%s0] sm:$0xff]
  %v16 = vld [vmem:[%s0 + $0x8] sm:$0xff]
  %v17 = vld [vmem:[%s0 + $0x10] sm:$0xff]
  %v18 = vld [vmem:[%s0 + $0x18] sm:$0xff]
  %v19 = vld [vmem:[%s0 + $0x20] sm:$0xff]
  %v20 = vld [vmem:[%s0 + $0x28] sm:$0xff]
  %v21 = vld [vmem:[%s0 + $0x30] sm:$0xff]
  %v22 = vld [vmem:[%s0 + $0x38] sm:$0xff]
  %v23 = vld [vmem:[%s0 + $0x40] sm:$0xff]
  %v24 = vld [vmem:[%s0 + $0x48] sm:$0xff]
  %v25 = vld [vmem:[%s0 + $0x50] sm:$0xff]
  %v26 = vld [vmem:[%s0 + $0x58] sm:$0xff]
  %v27 = vld [vmem:[%s0 + $0x60] sm:$0xff]
  %v28 = vld [vmem:[%s0 + $0x68] sm:$0xff]
  %v29 = vld [vmem:[%s0 + $0x70] sm:$0xff]
  %v30 = vld [vmem:[%s0 + $0x78] sm:$0xff]
  %v31 = vld [vmem:[%s0 + $0x80] sm:$0xff]
  %v32 = vld [vmem:[%s0 + $0x88] sm:$0xff]
  %v33 = vld [vmem:[%s0 + $0x90] sm:$0xff]
  %v34 = vld [vmem:[%s0 + $0x98] sm:$0xff]
  %v35 = vld [vmem:[%s0 + $0xa0] sm:$0xff]
  %v36 = vld [vmem:[%s0 + $0xa8] sm:$0xff]
  %v37 = vld [vmem:[%s0 + $0xb0] sm:$0xff]
  %v38 = vld [vmem:[%s0 + $0xb8] sm:$0xff]
  %v39 = vld [vmem:[%s0 + $0xc0] sm:$0xff]
  %v40 = vld [vmem:[%s0 + $0xc8] sm:$0xff]
  %v41 = vld [vmem:[%s0 + $0xd0] sm:$0xff]
  %v42 = vld [vmem:[%s0 + $0xd8] sm:$0xff]
  %v43 = vld [vmem:[%s0 + $0xe0] sm:$0xff]
  %v44 = vld [vmem:[%s0 + $0xe8] sm:$0xff]
  %v45 = vld [vmem:[%s0 + $0xf0] sm:$0xff]
  %v46 = vld [vmem:[%s0 + $0xf8] sm:$0xff]
  %v47 = vld [vmem:[%s0 + $0x100] sm:$0xff]
  %v48 = vld [vmem:[%s0 + $0x108] sm:$0xff]
  %v49 = vld [vmem:[%s0 + $0x110] sm:$0xff]
  %v50 = vld [vmem:[%s0 + $0x118] sm:$0xff]
  %v51 = vld [vmem:[%s0 + $0x120] sm:$0xff]
  %v52 = vld [vmem:[%s0 + $0x128] sm:$0xff]
  %v53 = vld [vmem:[%s0 + $0x130] sm:$0xff]
  %v54 = vld [vmem:[%s0 + $0x138] sm:$0xff]
  %v55 = vld [vmem:[%s0 + $0x140] sm:$0xff]
  %v56 = vld [vmem:[%s0 + $0x148] sm:$0xff]
  %v57 = vld [vmem:[%s0 + $0x150] sm:$0xff]
  %v58 = vld [vmem:[%s0 + $0x158] sm:$0xff]
  %v59 = vld [vmem:[%s0 + $0x160] sm:$0xff]
  %v60 = vld [vmem:[%s0 + $0x168] sm:$0xff]
  %v61 = vld [vmem:[%s0 + $0x170] sm:$0xff]
  %v62 = vld [vmem:[%s0 + $0x178] sm:$0xff]
  %v63 = vld [vmem:[%s0 + $0x180] sm:$0xff]
  %v64 = vld [vmem:[%s0 + $0x188] sm:$0xff]
  %v65 = vld [vmem:[%s0 + $0x190] sm:$0xff]
  %v66 = vld [vmem:[%s0 + $0x198] sm:$0xff]
  %v67 = vld [vmem:[%s0 + $0x1a0] sm:$0xff]
  %v68 = vld [vmem:[%s0 + $0x1a8] sm:$0xff]
  %v69 = vld [vmem:[%s0 + $0x1b0] sm:$0xff]
  %v70 = vld [vmem:[%s0 + $0x1b8] sm:$0xff]
  %v71 = vld [vmem:[%s0 + $0x1c0] sm:$0xff]
  %v72 = vld [vmem:[%s0 + $0x1c8] sm:$0xff]
  %v73 = vld [vmem:[%s0 + $0x1d0] sm:$0xff]
  %v74 = vld [vmem:[%s0 + $0x1d8] sm:$0xff]
  %v75 = vld [vmem:[%s0 + $0x1e0] sm:$0xff]
  %v76 = vld [vmem:[%s0 + $0x1e8] sm:$0xff]
  %v77 = vld [vmem:[%s0 + $0x1f0] sm:$0xff]
  %v78 = vld [vmem:[%s0 + $0x1f8] sm:$0xff]
  %v79 = vld [vmem:[%s0 + $0x200] sm:$0xff]
  %v80 = vld [vmem:[%s0 + $0x208] sm:$0xff]
  %v81 = vld [vmem:[%s0 + $0x210] sm:$0xff]
  %v82 = vld [vmem:[%s0 + $0x218] sm:$0xff]
  %v83 = vld [vmem:[%s0 + $0x220] sm:$0xff]
  %v84 = vld [vmem:[%s0 + $0x228] sm:$0xff]
  %v85 = vld [vmem:[%s0 + $0x230] sm:$0xff]
  %v86 = vld [vmem:[%s0 + $0x238] sm:$0xff]
  %v87 = vld [vmem:[%s0 + $0x240] sm:$0xff]
  %v88 = vld [vmem:[%s0 + $0x248] sm:$0xff]
  %v89 = vld [vmem:[%s0 + $0x250] sm:$0xff]
  %v90 = vld [vmem:[%s0 + $0x258] sm:$0xff]
  %v91 = vld [vmem:[%s0 + $0x260] sm:$0xff]
  %v92 = vld [vmem:[%s0 + $0x268] sm:$0xff]
  %v93 = vld [vmem:[%s0 + $0x270] sm:$0xff]
  %v94 = vld [vmem:[%s0 + $0x278] sm:$0xff]
  %v95 = vld [vmem:[%s0 + $0x280] sm:$0xff]
  %v96 = vld [vmem:[%s0 + $0x288] sm:$0xff]
  %v97 = vld [vmem:[%s0 + $0x290] sm:$0xff]
  %v98 = vld [vmem:[%s0 + $0x298] sm:$0xff]
  %v99 = vld [vmem:[%s0 + $0x2a0] sm:$0xff]
  %v100 = vld [vmem:[%s0 + $0x2a8] sm:$0xff]
  %v101 = vld [vmem:[%s0 + $0x2b0] sm:$0xff]
  %v102 = vld [vmem:[%s0 + $0x2b8] sm:$0xff]
  %v103 = vld [vmem:[%s0 + $0x2c0] sm:$0xff]
  %v104 = vld [vmem:[%s0 + $0x2c8] sm:$0xff]
  %v105 = vld [vmem:[%s0 + $0x2d0] sm:$0xff]
  %v106 = vld [vmem:[%s0 + $0x2d8] sm:$0xff]
  %v107 = vld [vmem:[%s0 + $0x2e0] sm:$0xff]
  %v108 = vld [vmem:[%s0 + $0x2e8] sm:$0xff]
  %v109 = vld [vmem:[%s0 + $0x2f0] sm:$0xff]
  %v110 = vld [vmem:[%s0 + $0x2f8] sm:$0xff]
  %v111 = vld [vmem:[%s0 + $0x300] sm:$0xff]
  %v112 = vld [vmem:[%s0 + $0x308] sm:$0xff]
  %v113 = vld [vmem:[%s0 + $0x310] sm:$0xff]
  %v114 = vld [vmem:[%s0 + $0x318] sm:$0xff]
  %v115 = vld [vmem:[%s1] sm:$0xf]
  %v116 = vld [vmem:[%s1 + $0x4] sm:$0xf]
  %v117 = vld [vmem:[%s1 + $0x8] sm:$0xf]
  %v118 = vld [vmem:[%s1 + $0xc] sm:$0xf]
  %v119 = vld [vmem:[%s1 + $0x10] sm:$0xf]
  %v120 = vld [vmem:[%s1 + $0x14] sm:$0xf]
  %v121 = vld [vmem:[%s1 + $0x18] sm:$0xf]
  %v122 = vld [vmem:[%s1 + $0x1c] sm:$0xf]
  %v123 = vld [vmem:[%s1 + $0x20] sm:$0xf]
  %v124 = vld [vmem:[%s1 + $0x24] sm:$0xf]
  %v125 = vld [vmem:[%s1 + $0x28] sm:$0xf]
  %v126 = vld [vmem:[%s1 + $0x2c] sm:$0xf]
  %v127 = vld [vmem:[%s1 + $0x30] sm:$0xf]
  %v128 = vld [vmem:[%s1 + $0x34] sm:$0xf]
  %v129 = vld [vmem:[%s1 + $0x38] sm:$0xf]
  %v130 = vld [vmem:[%s1 + $0x3c] sm:$0xf]
  %v131 = vld [vmem:[%s1 + $0x40] sm:$0xf]
  %v132 = vld [vmem:[%s1 + $0x44] sm:$0xf]
  %v133 = vld [vmem:[%s1 + $0x48] sm:$0xf]
  %v134 = vld [vmem:[%s1 + $0x4c] sm:$0xf]
  %v135 = vld [vmem:[%s1 + $0x50] sm:$0xf]
  %v136 = vld [vmem:[%s1 + $0x54] sm:$0xf]
  %v137 = vld [vmem:[%s1 + $0x58] sm:$0xf]
  %v138 = vld [vmem:[%s1 + $0x5c] sm:$0xf]
  %v139 = vld [vmem:[%s1 + $0x60] sm:$0xf]
  %v140 = vld [vmem:[%s1 + $0x64] sm:$0xf]
  %v141 = vld [vmem:[%s1 + $0x68] sm:$0xf]
  %v142 = vld [vmem:[%s1 + $0x6c] sm:$0xf]
  %v143 = vld [vmem:[%s1 + $0x70] sm:$0xf]
  %v144 = vld [vmem:[%s1 + $0x74] sm:$0xf]
  %v145 = vld [vmem:[%s1 + $0x78] sm:$0xf]
  %v146 = vld [vmem:[%s1 + $0x7c] sm:$0xf]
  %v147 = vld [vmem:[%s2] sm:$0x1]
  %v149 = vlaneseq
  %v150 = vshrl.u32 %v149, 7
  %v151 = vsub.s32 0, %v150
  %v152 = vrot.slane %v147, %v151
  %v254 = vunpack.c.l.b16 %v15
  %v255 = vunpack.c.h.b16 %v15
  %v256 = vunpack.c.l.b16 %v16
  %v257 = vunpack.c.h.b16 %v16
  %v258 = vunpack.c.l.b16 %v17
  %v259 = vunpack.c.h.b16 %v17
  %v260 = vunpack.c.l.b16 %v18
  %v261 = vunpack.c.h.b16 %v18
  %v262 = vunpack.c.l.b16 %v19
  %v263 = vunpack.c.h.b16 %v19
  %v264 = vunpack.c.l.b16 %v20
  %v265 = vunpack.c.h.b16 %v20
  %v266 = vunpack.c.l.b16 %v21
  %v267 = vunpack.c.h.b16 %v21
  %v268 = vunpack.c.l.b16 %v22
  %v269 = vunpack.c.h.b16 %v22
  %v270 = vunpack.c.l.b16 %v23
  %v271 = vunpack.c.h.b16 %v23
  %v272 = vunpack.c.l.b16 %v24
  %v273 = vunpack.c.h.b16 %v24
  %v274 = vunpack.c.l.b16 %v25
  %v275 = vunpack.c.h.b16 %v25
  %v276 = vunpack.c.l.b16 %v26
  %v277 = vunpack.c.h.b16 %v26
  %v278 = vunpack.c.l.b16 %v27
  %v279 = vunpack.c.h.b16 %v27
  %v280 = vunpack.c.l.b16 %v28
  %v281 = vunpack.c.h.b16 %v28
  %v282 = vunpack.c.l.b16 %v29
  %v283 = vunpack.c.h.b16 %v29
  %v284 = vunpack.c.l.b16 %v30
  %v285 = vunpack.c.h.b16 %v30
  %v286 = vunpack.c.l.b16 %v31
  %v287 = vunpack.c.h.b16 %v31
  %v288 = vunpack.c.l.b16 %v32
  %v289 = vunpack.c.h.b16 %v32
  %v290 = vunpack.c.l.b16 %v33
  %v291 = vunpack.c.h.b16 %v33
  %v292 = vunpack.c.l.b16 %v34
  %v293 = vunpack.c.h.b16 %v34
  %v294 = vunpack.c.l.b16 %v35
  %v295 = vunpack.c.h.b16 %v35
  %v296 = vunpack.c.l.b16 %v36
  %v297 = vunpack.c.h.b16 %v36
  %v298 = vunpack.c.l.b16 %v37
  %v299 = vunpack.c.h.b16 %v37
  %v300 = vunpack.c.l.b16 %v38
  %v301 = vunpack.c.h.b16 %v38
  %v302 = vunpack.c.l.b16 %v39
  %v303 = vunpack.c.h.b16 %v39
  %v304 = vunpack.c.l.b16 %v40
  %v305 = vunpack.c.h.b16 %v40
  %v306 = vunpack.c.l.b16 %v41
  %v307 = vunpack.c.h.b16 %v41
  %v308 = vunpack.c.l.b16 %v42
  %v309 = vunpack.c.h.b16 %v42
  %v310 = vunpack.c.l.b16 %v43
  %v311 = vunpack.c.h.b16 %v43
  %v312 = vunpack.c.l.b16 %v44
  %v313 = vunpack.c.h.b16 %v44
  %v314 = vunpack.c.l.b16 %v45
  %v315 = vunpack.c.h.b16 %v45
  %v316 = vunpack.c.l.b16 %v46
  %v317 = vunpack.c.h.b16 %v46
  %v318 = vunpack.c.l.b16 %v47
  %v319 = vunpack.c.h.b16 %v47
  %v320 = vunpack.c.l.b16 %v48
  %v321 = vunpack.c.h.b16 %v48
  %v322 = vunpack.c.l.b16 %v49
  %v323 = vunpack.c.h.b16 %v49
  %v324 = vunpack.c.l.b16 %v50
  %v325 = vunpack.c.h.b16 %v50
  %v326 = vunpack.c.l.b16 %v51
  %v327 = vunpack.c.h.b16 %v51
  %v328 = vunpack.c.l.b16 %v52
  %v329 = vunpack.c.h.b16 %v52
  %v330 = vunpack.c.l.b16 %v53
  %v331 = vunpack.c.h.b16 %v53
  %v332 = vunpack.c.l.b16 %v54
  %v333 = vunpack.c.h.b16 %v54
  %v334 = vunpack.c.l.b16 %v55
  %v335 = vunpack.c.h.b16 %v55
  %v336 = vunpack.c.l.b16 %v56
  %v337 = vunpack.c.h.b16 %v56
  %v338 = vunpack.c.l.b16 %v57
  %v339 = vunpack.c.h.b16 %v57
  %v340 = vunpack.c.l.b16 %v58
  %v341 = vunpack.c.h.b16 %v58
  %v342 = vunpack.c.l.b16 %v59
  %v343 = vunpack.c.h.b16 %v59
  %v344 = vunpack.c.l.b16 %v60
  %v345 = vunpack.c.h.b16 %v60
  %v346 = vunpack.c.l.b16 %v61
  %v347 = vunpack.c.h.b16 %v61
  %v348 = vunpack.c.l.b16 %v62
  %v349 = vunpack.c.h.b16 %v62
  %v350 = vunpack.c.l.b16 %v63
  %v351 = vunpack.c.h.b16 %v63
  %v352 = vunpack.c.l.b16 %v64
  %v353 = vunpack.c.h.b16 %v64
  %v354 = vunpack.c.l.b16 %v65
  %v355 = vunpack.c.h.b16 %v65
  %v356 = vunpack.c.l.b16 %v66
  %v357 = vunpack.c.h.b16 %v66
  %v358 = vunpack.c.l.b16 %v67
  %v359 = vunpack.c.h.b16 %v67
  %v360 = vunpack.c.l.b16 %v68
  %v361 = vunpack.c.h.b16 %v68
  %v362 = vunpack.c.l.b16 %v69
  %v363 = vunpack.c.h.b16 %v69
  %v364 = vunpack.c.l.b16 %v70
  %v365 = vunpack.c.h.b16 %v70
  %v366 = vunpack.c.l.b16 %v71
  %v367 = vunpack.c.h.b16 %v71
  %v368 = vunpack.c.l.b16 %v72
  %v369 = vunpack.c.h.b16 %v72
  %v370 = vunpack.c.l.b16 %v73
  %v371 = vunpack.c.h.b16 %v73
  %v372 = vunpack.c.l.b16 %v74
  %v373 = vunpack.c.h.b16 %v74
  %v374 = vunpack.c.l.b16 %v75
  %v375 = vunpack.c.h.b16 %v75
  %v376 = vunpack.c.l.b16 %v76
  %v377 = vunpack.c.h.b16 %v76
  %v378 = vunpack.c.l.b16 %v77
  %v379 = vunpack.c.h.b16 %v77
  %v380 = vunpack.c.l.b16 %v78
  %v381 = vunpack.c.h.b16 %v78
  %v382 = vunpack.c.l.b16 %v79
  %v383 = vunpack.c.h.b16 %v79
  %v384 = vunpack.c.l.b16 %v80
  %v385 = vunpack.c.h.b16 %v80
  %v386 = vunpack.c.l.b16 %v81
  %v387 = vunpack.c.h.b16 %v81
  %v388 = vunpack.c.l.b16 %v82
  %v389 = vunpack.c.h.b16 %v82
  %v390 = vunpack.c.l.b16 %v83
  %v391 = vunpack.c.h.b16 %v83
  %v392 = vunpack.c.l.b16 %v84
  %v393 = vunpack.c.h.b16 %v84
  %v394 = vunpack.c.l.b16 %v85
  %v395 = vunpack.c.h.b16 %v85
  %v396 = vunpack.c.l.b16 %v86
  %v397 = vunpack.c.h.b16 %v86
  %v398 = vunpack.c.l.b16 %v87
  %v399 = vunpack.c.h.b16 %v87
  %v400 = vunpack.c.l.b16 %v88
  %v401 = vunpack.c.h.b16 %v88
  %v402 = vunpack.c.l.b16 %v89
  %v403 = vunpack.c.h.b16 %v89
  %v404 = vunpack.c.l.b16 %v90
  %v405 = vunpack.c.h.b16 %v90
  %v406 = vunpack.c.l.b16 %v91
  %v407 = vunpack.c.h.b16 %v91
  %v408 = vunpack.c.l.b16 %v92
  %v409 = vunpack.c.h.b16 %v92
  %v410 = vunpack.c.l.b16 %v93
  %v411 = vunpack.c.h.b16 %v93
  %v412 = vunpack.c.l.b16 %v94
  %v413 = vunpack.c.h.b16 %v94
  %v414 = vunpack.c.l.b16 %v95
  %v415 = vunpack.c.h.b16 %v95
  %v416 = vunpack.c.l.b16 %v96
  %v417 = vunpack.c.h.b16 %v96
  %v418 = vunpack.c.l.b16 %v97
  %v419 = vunpack.c.h.b16 %v97
  %v420 = vunpack.c.l.b16 %v98
  %v421 = vunpack.c.h.b16 %v98
  %v422 = vunpack.c.l.b16 %v99
  %v423 = vunpack.c.h.b16 %v99
  %v424 = vunpack.c.l.b16 %v100
  %v425 = vunpack.c.h.b16 %v100
  %v426 = vunpack.c.l.b16 %v101
  %v427 = vunpack.c.h.b16 %v101
  %v428 = vunpack.c.l.b16 %v102
  %v429 = vunpack.c.h.b16 %v102
  %v430 = vunpack.c.l.b16 %v103
  %v431 = vunpack.c.h.b16 %v103
  %v432 = vunpack.c.l.b16 %v104
  %v433 = vunpack.c.h.b16 %v104
  %v434 = vunpack.c.l.b16 %v105
  %v435 = vunpack.c.h.b16 %v105
  %v436 = vunpack.c.l.b16 %v106
  %v437 = vunpack.c.h.b16 %v106
  %v438 = vunpack.c.l.b16 %v107
  %v439 = vunpack.c.h.b16 %v107
  %v440 = vunpack.c.l.b16 %v108
  %v441 = vunpack.c.h.b16 %v108
  %v442 = vunpack.c.l.b16 %v109
  %v443 = vunpack.c.h.b16 %v109
  %v444 = vunpack.c.l.b16 %v110
  %v445 = vunpack.c.h.b16 %v110
  %v446 = vunpack.c.l.b16 %v111
  %v447 = vunpack.c.h.b16 %v111
  %v448 = vunpack.c.l.b16 %v112
  %v449 = vunpack.c.h.b16 %v112
  %v450 = vunpack.c.l.b16 %v113
  %v451 = vunpack.c.h.b16 %v113
  %v452 = vunpack.c.l.b16 %v114
  %v453 = vunpack.c.h.b16 %v114
  %v454 = vpack.c.b16 %v256, %v254
  %v455 = vpack.c.b16 %v257, %v255
  %v456 = vpack.c.b16 %v260, %v258
  %v457 = vpack.c.b16 %v261, %v259
  %v458 = vpack.c.b16 %v264, %v262
  %v459 = vpack.c.b16 %v265, %v263
  %v460 = vpack.c.b16 %v268, %v266
  %v461 = vpack.c.b16 %v269, %v267
  %v462 = vpack.c.b16 %v272, %v270
  %v463 = vpack.c.b16 %v273, %v271
  %v464 = vpack.c.b16 %v276, %v274
  %v465 = vpack.c.b16 %v277, %v275
  %v466 = vpack.c.b16 %v280, %v278
  %v467 = vpack.c.b16 %v281, %v279
  %v468 = vpack.c.b16 %v284, %v282
  %v469 = vpack.c.b16 %v285, %v283
  %v470 = vpack.c.b16 %v288, %v286
  %v471 = vpack.c.b16 %v289, %v287
  %v472 = vpack.c.b16 %v292, %v290
  %v473 = vpack.c.b16 %v293, %v291
  %v474 = vpack.c.b16 %v296, %v294
  %v475 = vpack.c.b16 %v297, %v295
  %v476 = vpack.c.b16 %v300, %v298
  %v477 = vpack.c.b16 %v301, %v299
  %v478 = vpack.c.b16 %v304, %v302
  %v479 = vpack.c.b16 %v305, %v303
  %v480 = vpack.c.b16 %v308, %v306
  %v481 = vpack.c.b16 %v309, %v307
  %v482 = vpack.c.b16 %v312, %v310
  %v483 = vpack.c.b16 %v313, %v311
  %v484 = vpack.c.b16 %v316, %v314
  %v485 = vpack.c.b16 %v317, %v315
  %v486 = vpack.c.b16 %v320, %v318
  %v487 = vpack.c.b16 %v321, %v319
  %v488 = vpack.c.b16 %v324, %v322
  %v489 = vpack.c.b16 %v325, %v323
  %v490 = vpack.c.b16 %v328, %v326
  %v491 = vpack.c.b16 %v329, %v327
  %v492 = vpack.c.b16 %v332, %v330
  %v493 = vpack.c.b16 %v333, %v331
  %v494 = vpack.c.b16 %v336, %v334
  %v495 = vpack.c.b16 %v337, %v335
  %v496 = vpack.c.b16 %v340, %v338
  %v497 = vpack.c.b16 %v341, %v339
  %v498 = vpack.c.b16 %v344, %v342
  %v499 = vpack.c.b16 %v345, %v343
  %v500 = vpack.c.b16 %v348, %v346
  %v501 = vpack.c.b16 %v349, %v347
  %v502 = vpack.c.b16 %v352, %v350
  %v503 = vpack.c.b16 %v353, %v351
  %v504 = vpack.c.b16 %v356, %v354
  %v505 = vpack.c.b16 %v357, %v355
  %v506 = vpack.c.b16 %v360, %v358
  %v507 = vpack.c.b16 %v361, %v359
  %v508 = vpack.c.b16 %v364, %v362
  %v509 = vpack.c.b16 %v365, %v363
  %v510 = vpack.c.b16 %v368, %v366
  %v511 = vpack.c.b16 %v369, %v367
  %v512 = vpack.c.b16 %v372, %v370
  %v513 = vpack.c.b16 %v373, %v371
  %v514 = vpack.c.b16 %v376, %v374
  %v515 = vpack.c.b16 %v377, %v375
  %v516 = vpack.c.b16 %v380, %v378
  %v517 = vpack.c.b16 %v381, %v379
  %v518 = vpack.c.b16 %v384, %v382
  %v519 = vpack.c.b16 %v385, %v383
  %v520 = vpack.c.b16 %v388, %v386
  %v521 = vpack.c.b16 %v389, %v387
  %v522 = vpack.c.b16 %v392, %v390
  %v523 = vpack.c.b16 %v393, %v391
  %v524 = vpack.c.b16 %v396, %v394
  %v525 = vpack.c.b16 %v397, %v395
  %v526 = vpack.c.b16 %v400, %v398
  %v527 = vpack.c.b16 %v401, %v399
  %v528 = vpack.c.b16 %v404, %v402
  %v529 = vpack.c.b16 %v405, %v403
  %v530 = vpack.c.b16 %v408, %v406
  %v531 = vpack.c.b16 %v409, %v407
  %v532 = vpack.c.b16 %v412, %v410
  %v533 = vpack.c.b16 %v413, %v411
  %v534 = vpack.c.b16 %v416, %v414
  %v535 = vpack.c.b16 %v417, %v415
  %v536 = vpack.c.b16 %v420, %v418
  %v537 = vpack.c.b16 %v421, %v419
  %v538 = vpack.c.b16 %v424, %v422
  %v539 = vpack.c.b16 %v425, %v423
  %v540 = vpack.c.b16 %v428, %v426
  %v541 = vpack.c.b16 %v429, %v427
  %v542 = vpack.c.b16 %v432, %v430
  %v543 = vpack.c.b16 %v433, %v431
  %v544 = vpack.c.b16 %v436, %v434
  %v545 = vpack.c.b16 %v437, %v435
  %v546 = vpack.c.b16 %v440, %v438
  %v547 = vpack.c.b16 %v441, %v439
  %v548 = vpack.c.b16 %v444, %v442
  %v549 = vpack.c.b16 %v445, %v443
  %v550 = vpack.c.b16 %v448, %v446
  %v551 = vpack.c.b16 %v449, %v447
  %v552 = vpack.c.b16 %v452, %v450
  %v553 = vpack.c.b16 %v453, %v451
  %v686 = vunpack.c.l.b16 %v115
  %v687 = vunpack.c.l.b16 %v116
  %v688 = vunpack.c.l.b16 %v117
  %v689 = vunpack.c.l.b16 %v118
  %v690 = vunpack.c.l.b16 %v119
  %v691 = vunpack.c.l.b16 %v120
  %v692 = vunpack.c.l.b16 %v121
  %v693 = vunpack.c.l.b16 %v122
  %v694 = vunpack.c.l.b16 %v123
  %v695 = vunpack.c.l.b16 %v124
  %v696 = vunpack.c.l.b16 %v125
  %v697 = vunpack.c.l.b16 %v126
  %v698 = vunpack.c.l.b16 %v127
  %v699 = vunpack.c.l.b16 %v128
  %v700 = vunpack.c.l.b16 %v129
  %v701 = vunpack.c.l.b16 %v130
  %v702 = vunpack.c.l.b16 %v131
  %v703 = vunpack.c.l.b16 %v132
  %v704 = vunpack.c.l.b16 %v133
  %v705 = vunpack.c.l.b16 %v134
  %v706 = vunpack.c.l.b16 %v135
  %v707 = vunpack.c.l.b16 %v136
  %v708 = vunpack.c.l.b16 %v137
  %v709 = vunpack.c.l.b16 %v138
  %v710 = vunpack.c.l.b16 %v139
  %v711 = vunpack.c.l.b16 %v140
  %v712 = vunpack.c.l.b16 %v141
  %v713 = vunpack.c.l.b16 %v142
  %v714 = vunpack.c.l.b16 %v143
  %v715 = vunpack.c.l.b16 %v144
  %v716 = vunpack.c.l.b16 %v145
  %v717 = vunpack.c.l.b16 %v146
  %v718 = vpack.c.b16 %v687, %v686
  %v719 = vpack.c.b16 %v689, %v688
  %v720 = vpack.c.b16 %v691, %v690
  %v721 = vpack.c.b16 %v693, %v692
  %v722 = vpack.c.b16 %v695, %v694
  %v723 = vpack.c.b16 %v697, %v696
  %v724 = vpack.c.b16 %v699, %v698
  %v725 = vpack.c.b16 %v701, %v700
  %v726 = vpack.c.b16 %v703, %v702
  %v727 = vpack.c.b16 %v705, %v704
  %v728 = vpack.c.b16 %v707, %v706
  %v729 = vpack.c.b16 %v709, %v708
  %v730 = vpack.c.b16 %v711, %v710
  %v731 = vpack.c.b16 %v713, %v712
  %v732 = vpack.c.b16 %v715, %v714
  %v733 = vpack.c.b16 %v717, %v716
  %750 = vmatprep.subr.bf16.mxu0 0
  %751 = vmatpush1.bf16.msra.mxu0 %v718
  %752 = vmatprep.subr.bf16.mxu0 0
  %753 = vmatpush1.bf16.msra.mxu0 %v719
  %754 = vmatprep.subr.bf16.mxu0 0
  %755 = vmatpush1.bf16.msra.mxu0 %v720
  %756 = vmatprep.subr.bf16.mxu0 0
  %757 = vmatpush1.bf16.msra.mxu0 %v721
  %758 = vmatprep.subr.bf16.mxu0 0
  %759 = vmatpush1.bf16.msra.mxu0 %v722
  %760 = vmatprep.subr.bf16.mxu0 0
  %761 = vmatpush1.bf16.msra.mxu0 %v723
  %762 = vmatprep.subr.bf16.mxu0 0
  %763 = vmatpush1.bf16.msra.mxu0 %v724
  %764 = vmatprep.subr.bf16.mxu0 0
  %765 = vmatpush1.bf16.msra.mxu0 %v725
  %766 = vmatprep.subr.bf16.mxu0 0
  %767 = vmatpush1.bf16.msra.mxu0 %v726
  %768 = vmatprep.subr.bf16.mxu0 0
  %769 = vmatpush1.bf16.msra.mxu0 %v727
  %770 = vmatprep.subr.bf16.mxu0 0
  %771 = vmatpush1.bf16.msra.mxu0 %v728
  %772 = vmatprep.subr.bf16.mxu0 0
  %773 = vmatpush1.bf16.msra.mxu0 %v729
  %774 = vmatprep.subr.bf16.mxu0 0
  %775 = vmatpush1.bf16.msra.mxu0 %v730
  %776 = vmatprep.subr.bf16.mxu0 0
  %777 = vmatpush1.bf16.msra.mxu0 %v731
  %778 = vmatprep.subr.bf16.mxu0 0
  %779 = vmatpush1.bf16.msra.mxu0 %v732
  %780 = vmatprep.subr.bf16.mxu0 0
  %781 = vmatpush1.bf16.msra.mxu0 %v733
  %782 = vmatprep.mubr.bf16.mxu0 %v455
  %783 = vmatmul.mubr.bf16.gmra.mrb[0].mxu0 %v454
  %v784 = vpop.f32.mrb[0].mxu0
  %v785 = vadd.f32 %v152, %v784
  %v786 = vpop.f32.mrb[0].mxu0
  %v787 = vpop.f32.mrb[0].mxu0
  %v788 = vadd.f32 %v152, %v787
  %v789 = vpop.f32.mrb[0].mxu0
  %790 = vmatprep.mubr.bf16.mxu0 %v457
  %791 = vmatmul.mubr.bf16.gmra.mrb[0].mxu0 %v456
  %v792 = vpop.f32.mrb[0].mxu0
  %v793 = vadd.f32 %v152, %v792
  %v794 = vpop.f32.mrb[0].mxu0
  %v795 = vpop.f32.mrb[0].mxu0
  %v796 = vadd.f32 %v152, %v795
  %v797 = vpop.f32.mrb[0].mxu0
  %798 = vmatprep.mubr.bf16.mxu0 %v459
  %799 = vmatmul.mubr.bf16.gmra.mrb[0].mxu0 %v458
  %v800 = vpop.f32.mrb[0].mxu0
  %v801 = vadd.f32 %v152, %v800
  %v802 = vpop.f32.mrb[0].mxu0
  %v803 = vpop.f32.mrb[0].mxu0
  %v804 = vadd.f32 %v152, %v803
  %v805 = vpop.f32.mrb[0].mxu0
  %806 = vmatprep.mubr.bf16.mxu0 %v461
  %807 = vmatmul.mubr.bf16.gmra.mrb[0].mxu0 %v460
  %v808 = vpop.f32.mrb[0].mxu0
  %v809 = vadd.f32 %v152, %v808
  %v810 = vpop.f32.mrb[0].mxu0
  %v811 = vpop.f32.mrb[0].mxu0
  %v812 = vadd.f32 %v152, %v811
  %v813 = vpop.f32.mrb[0].mxu0
  %814 = vmatprep.mubr.bf16.mxu0 %v463
  %815 = vmatmul.mubr.bf16.gmra.mrb[0].mxu0 %v462
  %v816 = vpop.f32.mrb[0].mxu0
  %v817 = vadd.f32 %v152, %v816
  %v818 = vpop.f32.mrb[0].mxu0
  %v819 = vpop.f32.mrb[0].mxu0
  %v820 = vadd.f32 %v152, %v819
  %v821 = vpop.f32.mrb[0].mxu0
  %822 = vmatprep.mubr.bf16.mxu0 %v465
  %823 = vmatmul.mubr.bf16.gmra.mrb[0].mxu0 %v464
  %v824 = vpop.f32.mrb[0].mxu0
  %v825 = vadd.f32 %v152, %v824
  %v826 = vpop.f32.mrb[0].mxu0
  %v827 = vpop.f32.mrb[0].mxu0
  %v828 = vadd.f32 %v152, %v827
  %v829 = vpop.f32.mrb[0].mxu0
  %830 = vmatprep.mubr.bf16.mxu0 %v467
  %831 = vmatmul.mubr.bf16.gmra.mrb[0].mxu0 %v466
  %v832 = vpop.f32.mrb[0].mxu0
  %v833 = vadd.f32 %v152, %v832
  %v834 = vpop.f32.mrb[0].mxu0
  %v835 = vpop.f32.mrb[0].mxu0
  %v836 = vadd.f32 %v152, %v835
  %v837 = vpop.f32.mrb[0].mxu0
  %838 = vmatprep.mubr.bf16.mxu0 %v469
  %839 = vmatmul.mubr.bf16.gmra.mrb[0].mxu0 %v468
  %v840 = vpop.f32.mrb[0].mxu0
  %v841 = vadd.f32 %v152, %v840
  %v842 = vpop.f32.mrb[0].mxu0
  %v843 = vpop.f32.mrb[0].mxu0
  %v844 = vadd.f32 %v152, %v843
  %v845 = vpop.f32.mrb[0].mxu0
  %846 = vmatprep.mubr.bf16.mxu0 %v471
  %847 = vmatmul.mubr.bf16.gmra.mrb[0].mxu0 %v470
  %v848 = vpop.f32.mrb[0].mxu0
  %v849 = vadd.f32 %v152, %v848
  %v850 = vpop.f32.mrb[0].mxu0
  %v851 = vpop.f32.mrb[0].mxu0
  %v852 = vadd.f32 %v152, %v851
  %v853 = vpop.f32.mrb[0].mxu0
  %854 = vmatprep.mubr.bf16.mxu0 %v473
  %855 = vmatmul.mubr.bf16.gmra.mrb[0].mxu0 %v472
  %v856 = vpop.f32.mrb[0].mxu0
  %v857 = vadd.f32 %v152, %v856
  %v858 = vpop.f32.mrb[0].mxu0
  %v859 = vpop.f32.mrb[0].mxu0
  %v860 = vadd.f32 %v152, %v859
  %v861 = vpop.f32.mrb[0].mxu0
  %862 = vmatprep.mubr.bf16.mxu0 %v475
  %863 = vmatmul.mubr.bf16.gmra.mrb[0].mxu0 %v474
  %v864 = vpop.f32.mrb[0].mxu0
  %v865 = vadd.f32 %v152, %v864
  %v866 = vpop.f32.mrb[0].mxu0
  %v867 = vpop.f32.mrb[0].mxu0
  %v868 = vadd.f32 %v152, %v867
  %v869 = vpop.f32.mrb[0].mxu0
  %870 = vmatprep.mubr.bf16.mxu0 %v477
  %871 = vmatmul.mubr.bf16.gmra.mrb[0].mxu0 %v476
  %v872 = vpop.f32.mrb[0].mxu0
  %v873 = vadd.f32 %v152, %v872
  %v874 = vpop.f32.mrb[0].mxu0
  %v875 = vpop.f32.mrb[0].mxu0
  %v876 = vadd.f32 %v152, %v875
  %v877 = vpop.f32.mrb[0].mxu0
  %878 = vmatprep.mubr.bf16.mxu0 %v479
  %879 = vmatmul.mubr.bf16.gmra.mrb[0].mxu0 %v478
  %v880 = vpop.f32.mrb[0].mxu0
  %v881 = vadd.f32 %v152, %v880
  %v882 = vpop.f32.mrb[0].mxu0
  %v883 = vpop.f32.mrb[0].mxu0
  %v884 = vadd.f32 %v152, %v883
  %v885 = vpop.f32.mrb[0].mxu0
  %886 = vmatprep.mubr.bf16.mxu0 %v481
  %887 = vmatmul.mubr.bf16.gmra.mrb[0].mxu0 %v480
  %v888 = vpop.f32.mrb[0].mxu0
  %v889 = vadd.f32 %v152, %v888
  %v890 = vpop.f32.mrb[0].mxu0
  %v891 = vpop.f32.mrb[0].mxu0
  %v892 = vadd.f32 %v152, %v891
  %v893 = vpop.f32.mrb[0].mxu0
  %894 = vmatprep.mubr.bf16.mxu0 %v483
  %895 = vmatmul.mubr.bf16.gmra.mrb[0].mxu0 %v482
  %v896 = vpop.f32.mrb[0].mxu0
  %v897 = vadd.f32 %v152, %v896
  %v898 = vpop.f32.mrb[0].mxu0
  %v899 = vpop.f32.mrb[0].mxu0
  %v900 = vadd.f32 %v152, %v899
  %v901 = vpop.f32.mrb[0].mxu0
  %902 = vmatprep.mubr.bf16.mxu0 %v485
  %903 = vmatmul.mubr.bf16.gmra.mrb[0].mxu0 %v484
  %v904 = vpop.f32.mrb[0].mxu0
  %v905 = vadd.f32 %v152, %v904
  %v906 = vpop.f32.mrb[0].mxu0
  %v907 = vpop.f32.mrb[0].mxu0
  %v908 = vadd.f32 %v152, %v907
  %v909 = vpop.f32.mrb[0].mxu0
  %910 = vmatprep.mubr.bf16.mxu0 %v487
  %911 = vmatmul.mubr.bf16.gmra.mrb[0].mxu0 %v486
  %v912 = vpop.f32.mrb[0].mxu0
  %v913 = vadd.f32 %v152, %v912
  %v914 = vpop.f32.mrb[0].mxu0
  %v915 = vpop.f32.mrb[0].mxu0
  %v916 = vadd.f32 %v152, %v915
  %v917 = vpop.f32.mrb[0].mxu0
  %918 = vmatprep.mubr.bf16.mxu0 %v489
  %919 = vmatmul.mubr.bf16.gmra.mrb[0].mxu0 %v488
  %v920 = vpop.f32.mrb[0].mxu0
  %v921 = vadd.f32 %v152, %v920
  %v922 = vpop.f32.mrb[0].mxu0
  %v923 = vpop.f32.mrb[0].mxu0
  %v924 = vadd.f32 %v152, %v923
  %v925 = vpop.f32.mrb[0].mxu0
  %926 = vmatprep.mubr.bf16.mxu0 %v491
  %927 = vmatmul.mubr.bf16.gmra.mrb[0].mxu0 %v490
  %v928 = vpop.f32.mrb[0].mxu0
  %v929 = vadd.f32 %v152, %v928
  %v930 = vpop.f32.mrb[0].mxu0
  %v931 = vpop.f32.mrb[0].mxu0
  %v932 = vadd.f32 %v152, %v931
  %v933 = vpop.f32.mrb[0].mxu0
  %934 = vmatprep.mubr.bf16.mxu0 %v493
  %935 = vmatmul.mubr.bf16.gmra.mrb[0].mxu0 %v492
  %v936 = vpop.f32.mrb[0].mxu0
  %v937 = vadd.f32 %v152, %v936
  %v938 = vpop.f32.mrb[0].mxu0
  %v939 = vpop.f32.mrb[0].mxu0
  %v940 = vadd.f32 %v152, %v939
  %v941 = vpop.f32.mrb[0].mxu0
  %942 = vmatprep.mubr.bf16.mxu0 %v495
  %943 = vmatmul.mubr.bf16.gmra.mrb[0].mxu0 %v494
  %v944 = vpop.f32.mrb[0].mxu0
  %v945 = vadd.f32 %v152, %v944
  %v946 = vpop.f32.mrb[0].mxu0
  %v947 = vpop.f32.mrb[0].mxu0
  %v948 = vadd.f32 %v152, %v947
  %v949 = vpop.f32.mrb[0].mxu0
  %950 = vmatprep.mubr.bf16.mxu0 %v497
  %951 = vmatmul.mubr.bf16.gmra.mrb[0].mxu0 %v496
  %v952 = vpop.f32.mrb[0].mxu0
  %v953 = vadd.f32 %v152, %v952
  %v954 = vpop.f32.mrb[0].mxu0
  %v955 = vpop.f32.mrb[0].mxu0
  %v956 = vadd.f32 %v152, %v955
  %v957 = vpop.f32.mrb[0].mxu0
  %958 = vmatprep.mubr.bf16.mxu0 %v499
  %959 = vmatmul.mubr.bf16.gmra.mrb[0].mxu0 %v498
  %v960 = vpop.f32.mrb[0].mxu0
  %v961 = vadd.f32 %v152, %v960
  %v962 = vpop.f32.mrb[0].mxu0
  %v963 = vpop.f32.mrb[0].mxu0
  %v964 = vadd.f32 %v152, %v963
  %v965 = vpop.f32.mrb[0].mxu0
  %966 = vmatprep.mubr.bf16.mxu0 %v501
  %967 = vmatmul.mubr.bf16.gmra.mrb[0].mxu0 %v500
  %v968 = vpop.f32.mrb[0].mxu0
  %v969 = vadd.f32 %v152, %v968
  %v970 = vpop.f32.mrb[0].mxu0
  %v971 = vpop.f32.mrb[0].mxu0
  %v972 = vadd.f32 %v152, %v971
  %v973 = vpop.f32.mrb[0].mxu0
  %974 = vmatprep.mubr.bf16.mxu0 %v503
  %975 = vmatmul.mubr.bf16.gmra.mrb[0].mxu0 %v502
  %v976 = vpop.f32.mrb[0].mxu0
  %v977 = vadd.f32 %v152, %v976
  %v978 = vpop.f32.mrb[0].mxu0
  %v979 = vpop.f32.mrb[0].mxu0
  %v980 = vadd.f32 %v152, %v979
  %v981 = vpop.f32.mrb[0].mxu0
  %982 = vmatprep.mubr.bf16.mxu0 %v505
  %983 = vmatmul.mubr.bf16.gmra.mrb[0].mxu0 %v504
  %v984 = vpop.f32.mrb[0].mxu0
  %v985 = vadd.f32 %v152, %v984
  %v986 = vpop.f32.mrb[0].mxu0
  %v987 = vpop.f32.mrb[0].mxu0
  %v988 = vadd.f32 %v152, %v987
  %v989 = vpop.f32.mrb[0].mxu0
  %990 = vmatprep.mubr.bf16.mxu0 %v507
  %991 = vmatmul.mubr.bf16.gmra.mrb[0].mxu0 %v506
  %v992 = vpop.f32.mrb[0].mxu0
  %v993 = vadd.f32 %v152, %v992
  %v994 = vpop.f32.mrb[0].mxu0
  %v995 = vpop.f32.mrb[0].mxu0
  %v996 = vadd.f32 %v152, %v995
  %v997 = vpop.f32.mrb[0].mxu0
  %998 = vmatprep.mubr.bf16.mxu0 %v509
  %999 = vmatmul.mubr.bf16.gmra.mrb[0].mxu0 %v508
  %v1000 = vpop.f32.mrb[0].mxu0
  %v1001 = vadd.f32 %v152, %v1000
  %v1002 = vpop.f32.mrb[0].mxu0
  %v1003 = vpop.f32.mrb[0].mxu0
  %v1004 = vadd.f32 %v152, %v1003
  %v1005 = vpop.f32.mrb[0].mxu0
  %1006 = vmatprep.mubr.bf16.mxu0 %v511
  %1007 = vmatmul.mubr.bf16.gmra.mrb[0].mxu0 %v510
  %v1008 = vpop.f32.mrb[0].mxu0
  %v1009 = vadd.f32 %v152, %v1008
  %v1010 = vpop.f32.mrb[0].mxu0
  %v1011 = vpop.f32.mrb[0].mxu0
  %v1012 = vadd.f32 %v152, %v1011
  %v1013 = vpop.f32.mrb[0].mxu0
  %1014 = vmatprep.mubr.bf16.mxu0 %v513
  %1015 = vmatmul.mubr.bf16.gmra.mrb[0].mxu0 %v512
  %v1016 = vpop.f32.mrb[0].mxu0
  %v1017 = vadd.f32 %v152, %v1016
  %v1018 = vpop.f32.mrb[0].mxu0
  %v1019 = vpop.f32.mrb[0].mxu0
  %v1020 = vadd.f32 %v152, %v1019
  %v1021 = vpop.f32.mrb[0].mxu0
  %1022 = vmatprep.mubr.bf16.mxu0 %v515
  %1023 = vmatmul.mubr.bf16.gmra.mrb[0].mxu0 %v514
  %v1024 = vpop.f32.mrb[0].mxu0
  %v1025 = vadd.f32 %v152, %v1024
  %v1026 = vpop.f32.mrb[0].mxu0
  %v1027 = vpop.f32.mrb[0].mxu0
  %v1028 = vadd.f32 %v152, %v1027
  %v1029 = vpop.f32.mrb[0].mxu0
  %1030 = vmatprep.mubr.bf16.mxu0 %v517
  %1031 = vmatmul.mubr.bf16.gmra.mrb[0].mxu0 %v516
  %v1032 = vpop.f32.mrb[0].mxu0
  %v1033 = vadd.f32 %v152, %v1032
  %v1034 = vpop.f32.mrb[0].mxu0
  %v1035 = vpop.f32.mrb[0].mxu0
  %v1036 = vadd.f32 %v152, %v1035
  %v1037 = vpop.f32.mrb[0].mxu0
  %1038 = vmatprep.mubr.bf16.mxu0 %v519
  %1039 = vmatmul.mubr.bf16.gmra.mrb[0].mxu0 %v518
  %v1040 = vpop.f32.mrb[0].mxu0
  %v1041 = vadd.f32 %v152, %v1040
  %v1042 = vpop.f32.mrb[0].mxu0
  %v1043 = vpop.f32.mrb[0].mxu0
  %v1044 = vadd.f32 %v152, %v1043
  %v1045 = vpop.f32.mrb[0].mxu0
  %1046 = vmatprep.mubr.bf16.mxu0 %v521
  %1047 = vmatmul.mubr.bf16.gmra.mrb[0].mxu0 %v520
  %v1048 = vpop.f32.mrb[0].mxu0
  %v1049 = vadd.f32 %v152, %v1048
  %v1050 = vpop.f32.mrb[0].mxu0
  %v1051 = vpop.f32.mrb[0].mxu0
  %v1052 = vadd.f32 %v152, %v1051
  %v1053 = vpop.f32.mrb[0].mxu0
  %1054 = vmatprep.mubr.bf16.mxu0 %v523
  %1055 = vmatmul.mubr.bf16.gmra.mrb[0].mxu0 %v522
  %v1056 = vpop.f32.mrb[0].mxu0
  %v1057 = vadd.f32 %v152, %v1056
  %v1058 = vpop.f32.mrb[0].mxu0
  %v1059 = vpop.f32.mrb[0].mxu0
  %v1060 = vadd.f32 %v152, %v1059
  %v1061 = vpop.f32.mrb[0].mxu0
  %1062 = vmatprep.mubr.bf16.mxu0 %v525
  %1063 = vmatmul.mubr.bf16.gmra.mrb[0].mxu0 %v524
  %v1064 = vpop.f32.mrb[0].mxu0
  %v1065 = vadd.f32 %v152, %v1064
  %v1066 = vpop.f32.mrb[0].mxu0
  %v1067 = vpop.f32.mrb[0].mxu0
  %v1068 = vadd.f32 %v152, %v1067
  %v1069 = vpop.f32.mrb[0].mxu0
  %1070 = vmatprep.mubr.bf16.mxu0 %v527
  %1071 = vmatmul.mubr.bf16.gmra.mrb[0].mxu0 %v526
  %v1072 = vpop.f32.mrb[0].mxu0
  %v1073 = vadd.f32 %v152, %v1072
  %v1074 = vpop.f32.mrb[0].mxu0
  %v1075 = vpop.f32.mrb[0].mxu0
  %v1076 = vadd.f32 %v152, %v1075
  %v1077 = vpop.f32.mrb[0].mxu0
  %1078 = vmatprep.mubr.bf16.mxu0 %v529
  %1079 = vmatmul.mubr.bf16.gmra.mrb[0].mxu0 %v528
  %v1080 = vpop.f32.mrb[0].mxu0
  %v1081 = vadd.f32 %v152, %v1080
  %v1082 = vpop.f32.mrb[0].mxu0
  %v1083 = vpop.f32.mrb[0].mxu0
  %v1084 = vadd.f32 %v152, %v1083
  %v1085 = vpop.f32.mrb[0].mxu0
  %1086 = vmatprep.mubr.bf16.mxu0 %v531
  %1087 = vmatmul.mubr.bf16.gmra.mrb[0].mxu0 %v530
  %v1088 = vpop.f32.mrb[0].mxu0
  %v1089 = vadd.f32 %v152, %v1088
  %v1090 = vpop.f32.mrb[0].mxu0
  %v1091 = vpop.f32.mrb[0].mxu0
  %v1092 = vadd.f32 %v152, %v1091
  %v1093 = vpop.f32.mrb[0].mxu0
  %1094 = vmatprep.mubr.bf16.mxu0 %v533
  %1095 = vmatmul.mubr.bf16.gmra.mrb[0].mxu0 %v532
  %v1096 = vpop.f32.mrb[0].mxu0
  %v1097 = vadd.f32 %v152, %v1096
  %v1098 = vpop.f32.mrb[0].mxu0
  %v1099 = vpop.f32.mrb[0].mxu0
  %v1100 = vadd.f32 %v152, %v1099
  %v1101 = vpop.f32.mrb[0].mxu0
  %1102 = vmatprep.mubr.bf16.mxu0 %v535
  %1103 = vmatmul.mubr.bf16.gmra.mrb[0].mxu0 %v534
  %v1104 = vpop.f32.mrb[0].mxu0
  %v1105 = vadd.f32 %v152, %v1104
  %v1106 = vpop.f32.mrb[0].mxu0
  %v1107 = vpop.f32.mrb[0].mxu0
  %v1108 = vadd.f32 %v152, %v1107
  %v1109 = vpop.f32.mrb[0].mxu0
  %1110 = vmatprep.mubr.bf16.mxu0 %v537
  %1111 = vmatmul.mubr.bf16.gmra.mrb[0].mxu0 %v536
  %v1112 = vpop.f32.mrb[0].mxu0
  %v1113 = vadd.f32 %v152, %v1112
  %v1114 = vpop.f32.mrb[0].mxu0
  %v1115 = vpop.f32.mrb[0].mxu0
  %v1116 = vadd.f32 %v152, %v1115
  %v1117 = vpop.f32.mrb[0].mxu0
  %1118 = vmatprep.mubr.bf16.mxu0 %v539
  %1119 = vmatmul.mubr.bf16.gmra.mrb[0].mxu0 %v538
  %v1120 = vpop.f32.mrb[0].mxu0
  %v1121 = vadd.f32 %v152, %v1120
  %v1122 = vpop.f32.mrb[0].mxu0
  %v1123 = vpop.f32.mrb[0].mxu0
  %v1124 = vadd.f32 %v152, %v1123
  %v1125 = vpop.f32.mrb[0].mxu0
  %1126 = vmatprep.mubr.bf16.mxu0 %v541
  %1127 = vmatmul.mubr.bf16.gmra.mrb[0].mxu0 %v540
  %v1128 = vpop.f32.mrb[0].mxu0
  %v1129 = vadd.f32 %v152, %v1128
  %v1130 = vpop.f32.mrb[0].mxu0
  %v1131 = vpop.f32.mrb[0].mxu0
  %v1132 = vadd.f32 %v152, %v1131
  %v1133 = vpop.f32.mrb[0].mxu0
  %1134 = vmatprep.mubr.bf16.mxu0 %v543
  %1135 = vmatmul.mubr.bf16.gmra.mrb[0].mxu0 %v542
  %v1136 = vpop.f32.mrb[0].mxu0
  %v1137 = vadd.f32 %v152, %v1136
  %v1138 = vpop.f32.mrb[0].mxu0
  %v1139 = vpop.f32.mrb[0].mxu0
  %v1140 = vadd.f32 %v152, %v1139
  %v1141 = vpop.f32.mrb[0].mxu0
  %1142 = vmatprep.mubr.bf16.mxu0 %v545
  %1143 = vmatmul.mubr.bf16.gmra.mrb[0].mxu0 %v544
  %v1144 = vpop.f32.mrb[0].mxu0
  %v1145 = vadd.f32 %v152, %v1144
  %v1146 = vpop.f32.mrb[0].mxu0
  %v1147 = vpop.f32.mrb[0].mxu0
  %v1148 = vadd.f32 %v152, %v1147
  %v1149 = vpop.f32.mrb[0].mxu0
  %1150 = vmatprep.mubr.bf16.mxu0 %v547
  %1151 = vmatmul.mubr.bf16.gmra.mrb[0].mxu0 %v546
  %v1152 = vpop.f32.mrb[0].mxu0
  %v1153 = vadd.f32 %v152, %v1152
  %v1154 = vpop.f32.mrb[0].mxu0
  %v1155 = vpop.f32.mrb[0].mxu0
  %v1156 = vadd.f32 %v152, %v1155
  %v1157 = vpop.f32.mrb[0].mxu0
  %1158 = vmatprep.mubr.bf16.mxu0 %v549
  %1159 = vmatmul.mubr.bf16.gmra.mrb[0].mxu0 %v548
  %v1160 = vpop.f32.mrb[0].mxu0
  %v1161 = vadd.f32 %v152, %v1160
  %v1162 = vpop.f32.mrb[0].mxu0
  %v1163 = vpop.f32.mrb[0].mxu0
  %v1164 = vadd.f32 %v152, %v1163
  %v1165 = vpop.f32.mrb[0].mxu0
  %1166 = vmatprep.mubr.bf16.mxu0 %v551
  %1167 = vmatmul.mubr.bf16.gmra.mrb[0].mxu0 %v550
  %v1168 = vpop.f32.mrb[0].mxu0
  %v1169 = vadd.f32 %v152, %v1168
  %v1170 = vpop.f32.mrb[0].mxu0
  %v1171 = vpop.f32.mrb[0].mxu0
  %v1172 = vadd.f32 %v152, %v1171
  %v1173 = vpop.f32.mrb[0].mxu0
  %1174 = vmatprep.mubr.bf16.mxu0 %v553
  %1175 = vmatmul.mubr.bf16.gmra.mrb[0].mxu0 %v552
  %v1176 = vpop.f32.mrb[0].mxu0
  %v1177 = vadd.f32 %v152, %v1176
  %v1178 = vpop.f32.mrb[0].mxu0
  %v1179 = vpop.f32.mrb[0].mxu0
  %v1180 = vadd.f32 %v152, %v1179
  %v1181 = vpop.f32.mrb[0].mxu0
  %1182 = vdwg.mxu0
  %v1183 = vmax.f32 %v785, 0.0
  %v1184 = vmax.f32 %v788, 0.0
  %v1185 = vmax.f32 %v793, 0.0
  %v1186 = vmax.f32 %v796, 0.0
  %v1187 = vmax.f32 %v801, 0.0
  %v1188 = vmax.f32 %v804, 0.0
  %v1189 = vmax.f32 %v809, 0.0
  %v1190 = vmax.f32 %v812, 0.0
  %v1191 = vmax.f32 %v817, 0.0
  %v1192 = vmax.f32 %v820, 0.0
  %v1193 = vmax.f32 %v825, 0.0
  %v1194 = vmax.f32 %v828, 0.0
  %v1195 = vmax.f32 %v833, 0.0
  %v1196 = vmax.f32 %v836, 0.0
  %v1197 = vmax.f32 %v841, 0.0
  %v1198 = vmax.f32 %v844, 0.0
  %v1199 = vmax.f32 %v849, 0.0
  %v1200 = vmax.f32 %v852, 0.0
  %v1201 = vmax.f32 %v857, 0.0
  %v1202 = vmax.f32 %v860, 0.0
  %v1203 = vmax.f32 %v865, 0.0
  %v1204 = vmax.f32 %v868, 0.0
  %v1205 = vmax.f32 %v873, 0.0
  %v1206 = vmax.f32 %v876, 0.0
  %v1207 = vmax.f32 %v881, 0.0
  %v1208 = vmax.f32 %v884, 0.0
  %v1209 = vmax.f32 %v889, 0.0
  %v1210 = vmax.f32 %v892, 0.0
  %v1211 = vmax.f32 %v897, 0.0
  %v1212 = vmax.f32 %v900, 0.0
  %v1213 = vmax.f32 %v905, 0.0
  %v1214 = vmax.f32 %v908, 0.0
  %v1215 = vmax.f32 %v913, 0.0
  %v1216 = vmax.f32 %v916, 0.0
  %v1217 = vmax.f32 %v921, 0.0
  %v1218 = vmax.f32 %v924, 0.0
  %v1219 = vmax.f32 %v929, 0.0
  %v1220 = vmax.f32 %v932, 0.0
  %v1221 = vmax.f32 %v937, 0.0
  %v1222 = vmax.f32 %v940, 0.0
  %v1223 = vmax.f32 %v945, 0.0
  %v1224 = vmax.f32 %v948, 0.0
  %v1225 = vmax.f32 %v953, 0.0
  %v1226 = vmax.f32 %v956, 0.0
  %v1227 = vmax.f32 %v961, 0.0
  %v1228 = vmax.f32 %v964, 0.0
  %v1229 = vmax.f32 %v969, 0.0
  %v1230 = vmax.f32 %v972, 0.0
  %v1231 = vmax.f32 %v977, 0.0
  %v1232 = vmax.f32 %v980, 0.0
  %v1233 = vmax.f32 %v985, 0.0
  %v1234 = vmax.f32 %v988, 0.0
  %v1235 = vmax.f32 %v993, 0.0
  %v1236 = vmax.f32 %v996, 0.0
  %v1237 = vmax.f32 %v1001, 0.0
  %v1238 = vmax.f32 %v1004, 0.0
  %v1239 = vmax.f32 %v1009, 0.0
  %v1240 = vmax.f32 %v1012, 0.0
  %v1241 = vmax.f32 %v1017, 0.0
  %v1242 = vmax.f32 %v1020, 0.0
  %v1243 = vmax.f32 %v1025, 0.0
  %v1244 = vmax.f32 %v1028, 0.0
  %v1245 = vmax.f32 %v1033, 0.0
  %v1246 = vmax.f32 %v1036, 0.0
  %v1247 = vmax.f32 %v1041, 0.0
  %v1248 = vmax.f32 %v1044, 0.0
  %v1249 = vmax.f32 %v1049, 0.0
  %v1250 = vmax.f32 %v1052, 0.0
  %v1251 = vmax.f32 %v1057, 0.0
  %v1252 = vmax.f32 %v1060, 0.0
  %v1253 = vmax.f32 %v1065, 0.0
  %v1254 = vmax.f32 %v1068, 0.0
  %v1255 = vmax.f32 %v1073, 0.0
  %v1256 = vmax.f32 %v1076, 0.0
  %v1257 = vmax.f32 %v1081, 0.0
  %v1258 = vmax.f32 %v1084, 0.0
  %v1259 = vmax.f32 %v1089, 0.0
  %v1260 = vmax.f32 %v1092, 0.0
  %v1261 = vmax.f32 %v1097, 0.0
  %v1262 = vmax.f32 %v1100, 0.0
  %v1263 = vmax.f32 %v1105, 0.0
  %v1264 = vmax.f32 %v1108, 0.0
  %v1265 = vmax.f32 %v1113, 0.0
  %v1266 = vmax.f32 %v1116, 0.0
  %v1267 = vmax.f32 %v1121, 0.0
  %v1268 = vmax.f32 %v1124, 0.0
  %v1269 = vmax.f32 %v1129, 0.0
  %v1270 = vmax.f32 %v1132, 0.0
  %v1271 = vmax.f32 %v1137, 0.0
  %v1272 = vmax.f32 %v1140, 0.0
  %v1273 = vmax.f32 %v1145, 0.0
  %v1274 = vmax.f32 %v1148, 0.0
  %v1275 = vmax.f32 %v1153, 0.0
  %v1276 = vmax.f32 %v1156, 0.0
  %v1277 = vmax.f32 %v1161, 0.0
  %v1278 = vmax.f32 %v1164, 0.0
  %v1279 = vmax.f32 %v1169, 0.0
  %v1280 = vmax.f32 %v1172, 0.0
  %v1281 = vmax.f32 %v1177, 0.0
  %v1282 = vmax.f32 %v1180, 0.0
  %v1283 = vpack.c.bf16 %v1184, %v1183
  %v1284 = vpack.c.bf16 %v1186, %v1185
  %v1285 = vpack.c.bf16 %v1188, %v1187
  %v1286 = vpack.c.bf16 %v1190, %v1189
  %v1287 = vpack.c.bf16 %v1192, %v1191
  %v1288 = vpack.c.bf16 %v1194, %v1193
  %v1289 = vpack.c.bf16 %v1196, %v1195
  %v1290 = vpack.c.bf16 %v1198, %v1197
  %v1291 = vpack.c.bf16 %v1200, %v1199
  %v1292 = vpack.c.bf16 %v1202, %v1201
  %v1293 = vpack.c.bf16 %v1204, %v1203
  %v1294 = vpack.c.bf16 %v1206, %v1205
  %v1295 = vpack.c.bf16 %v1208, %v1207
  %v1296 = vpack.c.bf16 %v1210, %v1209
  %v1297 = vpack.c.bf16 %v1212, %v1211
  %v1298 = vpack.c.bf16 %v1214, %v1213
  %v1299 = vpack.c.bf16 %v1216, %v1215
  %v1300 = vpack.c.bf16 %v1218, %v1217
  %v1301 = vpack.c.bf16 %v1220, %v1219
  %v1302 = vpack.c.bf16 %v1222, %v1221
  %v1303 = vpack.c.bf16 %v1224, %v1223
  %v1304 = vpack.c.bf16 %v1226, %v1225
  %v1305 = vpack.c.bf16 %v1228, %v1227
  %v1306 = vpack.c.bf16 %v1230, %v1229
  %v1307 = vpack.c.bf16 %v1232, %v1231
  %v1308 = vpack.c.bf16 %v1234, %v1233
  %v1309 = vpack.c.bf16 %v1236, %v1235
  %v1310 = vpack.c.bf16 %v1238, %v1237
  %v1311 = vpack.c.bf16 %v1240, %v1239
  %v1312 = vpack.c.bf16 %v1242, %v1241
  %v1313 = vpack.c.bf16 %v1244, %v1243
  %v1314 = vpack.c.bf16 %v1246, %v1245
  %v1315 = vpack.c.bf16 %v1248, %v1247
  %v1316 = vpack.c.bf16 %v1250, %v1249
  %v1317 = vpack.c.bf16 %v1252, %v1251
  %v1318 = vpack.c.bf16 %v1254, %v1253
  %v1319 = vpack.c.bf16 %v1256, %v1255
  %v1320 = vpack.c.bf16 %v1258, %v1257
  %v1321 = vpack.c.bf16 %v1260, %v1259
  %v1322 = vpack.c.bf16 %v1262, %v1261
  %v1323 = vpack.c.bf16 %v1264, %v1263
  %v1324 = vpack.c.bf16 %v1266, %v1265
  %v1325 = vpack.c.bf16 %v1268, %v1267
  %v1326 = vpack.c.bf16 %v1270, %v1269
  %v1327 = vpack.c.bf16 %v1272, %v1271
  %v1328 = vpack.c.bf16 %v1274, %v1273
  %v1329 = vpack.c.bf16 %v1276, %v1275
  %v1330 = vpack.c.bf16 %v1278, %v1277
  %v1331 = vpack.c.bf16 %v1280, %v1279
  %v1332 = vpack.c.bf16 %v1282, %v1281
  %v1383 = vunpack.c.l.b16 %v1283
  %v1384 = vunpack.c.h.b16 %v1283
  %v1385 = vunpack.c.l.b16 %v1284
  %v1386 = vunpack.c.h.b16 %v1284
  %v1387 = vunpack.c.l.b16 %v1285
  %v1388 = vunpack.c.h.b16 %v1285
  %v1389 = vunpack.c.l.b16 %v1286
  %v1390 = vunpack.c.h.b16 %v1286
  %v1391 = vunpack.c.l.b16 %v1287
  %v1392 = vunpack.c.h.b16 %v1287
  %v1393 = vunpack.c.l.b16 %v1288
  %v1394 = vunpack.c.h.b16 %v1288
  %v1395 = vunpack.c.l.b16 %v1289
  %v1396 = vunpack.c.h.b16 %v1289
  %v1397 = vunpack.c.l.b16 %v1290
  %v1398 = vunpack.c.h.b16 %v1290
  %v1399 = vunpack.c.l.b16 %v1291
  %v1400 = vunpack.c.h.b16 %v1291
  %v1401 = vunpack.c.l.b16 %v1292
  %v1402 = vunpack.c.h.b16 %v1292
  %v1403 = vunpack.c.l.b16 %v1293
  %v1404 = vunpack.c.h.b16 %v1293
  %v1405 = vunpack.c.l.b16 %v1294
  %v1406 = vunpack.c.h.b16 %v1294
  %v1407 = vunpack.c.l.b16 %v1295
  %v1408 = vunpack.c.h.b16 %v1295
  %v1409 = vunpack.c.l.b16 %v1296
  %v1410 = vunpack.c.h.b16 %v1296
  %v1411 = vunpack.c.l.b16 %v1297
  %v1412 = vunpack.c.h.b16 %v1297
  %v1413 = vunpack.c.l.b16 %v1298
  %v1414 = vunpack.c.h.b16 %v1298
  %v1415 = vunpack.c.l.b16 %v1299
  %v1416 = vunpack.c.h.b16 %v1299
  %v1417 = vunpack.c.l.b16 %v1300
  %v1418 = vunpack.c.h.b16 %v1300
  %v1419 = vunpack.c.l.b16 %v1301
  %v1420 = vunpack.c.h.b16 %v1301
  %v1421 = vunpack.c.l.b16 %v1302
  %v1422 = vunpack.c.h.b16 %v1302
  %v1423 = vunpack.c.l.b16 %v1303
  %v1424 = vunpack.c.h.b16 %v1303
  %v1425 = vunpack.c.l.b16 %v1304
  %v1426 = vunpack.c.h.b16 %v1304
  %v1427 = vunpack.c.l.b16 %v1305
  %v1428 = vunpack.c.h.b16 %v1305
  %v1429 = vunpack.c.l.b16 %v1306
  %v1430 = vunpack.c.h.b16 %v1306
  %v1431 = vunpack.c.l.b16 %v1307
  %v1432 = vunpack.c.h.b16 %v1307
  %v1433 = vunpack.c.l.b16 %v1308
  %v1434 = vunpack.c.h.b16 %v1308
  %v1435 = vunpack.c.l.b16 %v1309
  %v1436 = vunpack.c.h.b16 %v1309
  %v1437 = vunpack.c.l.b16 %v1310
  %v1438 = vunpack.c.h.b16 %v1310
  %v1439 = vunpack.c.l.b16 %v1311
  %v1440 = vunpack.c.h.b16 %v1311
  %v1441 = vunpack.c.l.b16 %v1312
  %v1442 = vunpack.c.h.b16 %v1312
  %v1443 = vunpack.c.l.b16 %v1313
  %v1444 = vunpack.c.h.b16 %v1313
  %v1445 = vunpack.c.l.b16 %v1314
  %v1446 = vunpack.c.h.b16 %v1314
  %v1447 = vunpack.c.l.b16 %v1315
  %v1448 = vunpack.c.h.b16 %v1315
  %v1449 = vunpack.c.l.b16 %v1316
  %v1450 = vunpack.c.h.b16 %v1316
  %v1451 = vunpack.c.l.b16 %v1317
  %v1452 = vunpack.c.h.b16 %v1317
  %v1453 = vunpack.c.l.b16 %v1318
  %v1454 = vunpack.c.h.b16 %v1318
  %v1455 = vunpack.c.l.b16 %v1319
  %v1456 = vunpack.c.h.b16 %v1319
  %v1457 = vunpack.c.l.b16 %v1320
  %v1458 = vunpack.c.h.b16 %v1320
  %v1459 = vunpack.c.l.b16 %v1321
  %v1460 = vunpack.c.h.b16 %v1321
  %v1461 = vunpack.c.l.b16 %v1322
  %v1462 = vunpack.c.h.b16 %v1322
  %v1463 = vunpack.c.l.b16 %v1323
  %v1464 = vunpack.c.h.b16 %v1323
  %v1465 = vunpack.c.l.b16 %v1324
  %v1466 = vunpack.c.h.b16 %v1324
  %v1467 = vunpack.c.l.b16 %v1325
  %v1468 = vunpack.c.h.b16 %v1325
  %v1469 = vunpack.c.l.b16 %v1326
  %v1470 = vunpack.c.h.b16 %v1326
  %v1471 = vunpack.c.l.b16 %v1327
  %v1472 = vunpack.c.h.b16 %v1327
  %v1473 = vunpack.c.l.b16 %v1328
  %v1474 = vunpack.c.h.b16 %v1328
  %v1475 = vunpack.c.l.b16 %v1329
  %v1476 = vunpack.c.h.b16 %v1329
  %v1477 = vunpack.c.l.b16 %v1330
  %v1478 = vunpack.c.h.b16 %v1330
  %v1479 = vunpack.c.l.b16 %v1331
  %v1480 = vunpack.c.h.b16 %v1331
  %v1481 = vunpack.c.l.b16 %v1332
  %v1482 = vunpack.c.h.b16 %v1332
  %v1483 = vpack.c.b16 %v1383, %v1383
  %v1484 = vpack.c.b16 %v1384, %v1384
  %v1485 = vpack.c.b16 %v1385, %v1385
  %v1486 = vpack.c.b16 %v1386, %v1386
  %v1487 = vpack.c.b16 %v1387, %v1387
  %v1488 = vpack.c.b16 %v1388, %v1388
  %v1489 = vpack.c.b16 %v1389, %v1389
  %v1490 = vpack.c.b16 %v1390, %v1390
  %v1491 = vpack.c.b16 %v1391, %v1391
  %v1492 = vpack.c.b16 %v1392, %v1392
  %v1493 = vpack.c.b16 %v1393, %v1393
  %v1494 = vpack.c.b16 %v1394, %v1394
  %v1495 = vpack.c.b16 %v1395, %v1395
  %v1496 = vpack.c.b16 %v1396, %v1396
  %v1497 = vpack.c.b16 %v1397, %v1397
  %v1498 = vpack.c.b16 %v1398, %v1398
  %v1499 = vpack.c.b16 %v1399, %v1399
  %v1500 = vpack.c.b16 %v1400, %v1400
  %v1501 = vpack.c.b16 %v1401, %v1401
  %v1502 = vpack.c.b16 %v1402, %v1402
  %v1503 = vpack.c.b16 %v1403, %v1403
  %v1504 = vpack.c.b16 %v1404, %v1404
  %v1505 = vpack.c.b16 %v1405, %v1405
  %v1506 = vpack.c.b16 %v1406, %v1406
  %v1507 = vpack.c.b16 %v1407, %v1407
  %v1508 = vpack.c.b16 %v1408, %v1408
  %v1509 = vpack.c.b16 %v1409, %v1409
  %v1510 = vpack.c.b16 %v1410, %v1410
  %v1511 = vpack.c.b16 %v1411, %v1411
  %v1512 = vpack.c.b16 %v1412, %v1412
  %v1513 = vpack.c.b16 %v1413, %v1413
  %v1514 = vpack.c.b16 %v1414, %v1414
  %v1515 = vpack.c.b16 %v1415, %v1415
  %v1516 = vpack.c.b16 %v1416, %v1416
  %v1517 = vpack.c.b16 %v1417, %v1417
  %v1518 = vpack.c.b16 %v1418, %v1418
  %v1519 = vpack.c.b16 %v1419, %v1419
  %v1520 = vpack.c.b16 %v1420, %v1420
  %v1521 = vpack.c.b16 %v1421, %v1421
  %v1522 = vpack.c.b16 %v1422, %v1422
  %v1523 = vpack.c.b16 %v1423, %v1423
  %v1524 = vpack.c.b16 %v1424, %v1424
  %v1525 = vpack.c.b16 %v1425, %v1425
  %v1526 = vpack.c.b16 %v1426, %v1426
  %v1527 = vpack.c.b16 %v1427, %v1427
  %v1528 = vpack.c.b16 %v1428, %v1428
  %v1529 = vpack.c.b16 %v1429, %v1429
  %v1530 = vpack.c.b16 %v1430, %v1430
  %v1531 = vpack.c.b16 %v1431, %v1431
  %v1532 = vpack.c.b16 %v1432, %v1432
  %v1533 = vpack.c.b16 %v1433, %v1433
  %v1534 = vpack.c.b16 %v1434, %v1434
  %v1535 = vpack.c.b16 %v1435, %v1435
  %v1536 = vpack.c.b16 %v1436, %v1436
  %v1537 = vpack.c.b16 %v1437, %v1437
  %v1538 = vpack.c.b16 %v1438, %v1438
  %v1539 = vpack.c.b16 %v1439, %v1439
  %v1540 = vpack.c.b16 %v1440, %v1440
  %v1541 = vpack.c.b16 %v1441, %v1441
  %v1542 = vpack.c.b16 %v1442, %v1442
  %v1543 = vpack.c.b16 %v1443, %v1443
  %v1544 = vpack.c.b16 %v1444, %v1444
  %v1545 = vpack.c.b16 %v1445, %v1445
  %v1546 = vpack.c.b16 %v1446, %v1446
  %v1547 = vpack.c.b16 %v1447, %v1447
  %v1548 = vpack.c.b16 %v1448, %v1448
  %v1549 = vpack.c.b16 %v1449, %v1449
  %v1550 = vpack.c.b16 %v1450, %v1450
  %v1551 = vpack.c.b16 %v1451, %v1451
  %v1552 = vpack.c.b16 %v1452, %v1452
  %v1553 = vpack.c.b16 %v1453, %v1453
  %v1554 = vpack.c.b16 %v1454, %v1454
  %v1555 = vpack.c.b16 %v1455, %v1455
  %v1556 = vpack.c.b16 %v1456, %v1456
  %v1557 = vpack.c.b16 %v1457, %v1457
  %v1558 = vpack.c.b16 %v1458, %v1458
  %v1559 = vpack.c.b16 %v1459, %v1459
  %v1560 = vpack.c.b16 %v1460, %v1460
  %v1561 = vpack.c.b16 %v1461, %v1461
  %v1562 = vpack.c.b16 %v1462, %v1462
  %v1563 = vpack.c.b16 %v1463, %v1463
  %v1564 = vpack.c.b16 %v1464, %v1464
  %v1565 = vpack.c.b16 %v1465, %v1465
  %v1566 = vpack.c.b16 %v1466, %v1466
  %v1567 = vpack.c.b16 %v1467, %v1467
  %v1568 = vpack.c.b16 %v1468, %v1468
  %v1569 = vpack.c.b16 %v1469, %v1469
  %v1570 = vpack.c.b16 %v1470, %v1470
  %v1571 = vpack.c.b16 %v1471, %v1471
  %v1572 = vpack.c.b16 %v1472, %v1472
  %v1573 = vpack.c.b16 %v1473, %v1473
  %v1574 = vpack.c.b16 %v1474, %v1474
  %v1575 = vpack.c.b16 %v1475, %v1475
  %v1576 = vpack.c.b16 %v1476, %v1476
  %v1577 = vpack.c.b16 %v1477, %v1477
  %v1578 = vpack.c.b16 %v1478, %v1478
  %v1579 = vpack.c.b16 %v1479, %v1479
  %v1580 = vpack.c.b16 %v1480, %v1480
  %v1581 = vpack.c.b16 %v1481, %v1481
  %v1582 = vpack.c.b16 %v1482, %v1482
  %1683 = vst [vmem:[%s3] sm:$0xf] %v1483
  %1684 = vst [vmem:[%s3 + $0x4] sm:$0xf] %v1484
  %1685 = vst [vmem:[%s3 + $0x8] sm:$0xf] %v1485
  %1686 = vst [vmem:[%s3 + $0xc] sm:$0xf] %v1486
  %1687 = vst [vmem:[%s3 + $0x10] sm:$0xf] %v1487
  %1688 = vst [vmem:[%s3 + $0x14] sm:$0xf] %v1488
  %1689 = vst [vmem:[%s3 + $0x18] sm:$0xf] %v1489
  %1690 = vst [vmem:[%s3 + $0x1c] sm:$0xf] %v1490
  %1691 = vst [vmem:[%s3 + $0x20] sm:$0xf] %v1491
  %1692 = vst [vmem:[%s3 + $0x24] sm:$0xf] %v1492
  %1693 = vst [vmem:[%s3 + $0x28] sm:$0xf] %v1493
  %1694 = vst [vmem:[%s3 + $0x2c] sm:$0xf] %v1494
  %1695 = vst [vmem:[%s3 + $0x30] sm:$0xf] %v1495
  %1696 = vst [vmem:[%s3 + $0x34] sm:$0xf] %v1496
  %1697 = vst [vmem:[%s3 + $0x38] sm:$0xf] %v1497
  %1698 = vst [vmem:[%s3 + $0x3c] sm:$0xf] %v1498
  %1699 = vst [vmem:[%s3 + $0x40] sm:$0xf] %v1499
  %1700 = vst [vmem:[%s3 + $0x44] sm:$0xf] %v1500
  %1701 = vst [vmem:[%s3 + $0x48] sm:$0xf] %v1501
  %1702 = vst [vmem:[%s3 + $0x4c] sm:$0xf] %v1502
  %1703 = vst [vmem:[%s3 + $0x50] sm:$0xf] %v1503
  %1704 = vst [vmem:[%s3 + $0x54] sm:$0xf] %v1504
  %1705 = vst [vmem:[%s3 + $0x58] sm:$0xf] %v1505
  %1706 = vst [vmem:[%s3 + $0x5c] sm:$0xf] %v1506
  %1707 = vst [vmem:[%s3 + $0x60] sm:$0xf] %v1507
  %1708 = vst [vmem:[%s3 + $0x64] sm:$0xf] %v1508
  %1709 = vst [vmem:[%s3 + $0x68] sm:$0xf] %v1509
  %1710 = vst [vmem:[%s3 + $0x6c] sm:$0xf] %v1510
  %1711 = vst [vmem:[%s3 + $0x70] sm:$0xf] %v1511
  %1712 = vst [vmem:[%s3 + $0x74] sm:$0xf] %v1512
  %1713 = vst [vmem:[%s3 + $0x78] sm:$0xf] %v1513
  %1714 = vst [vmem:[%s3 + $0x7c] sm:$0xf] %v1514
  %1715 = vst [vmem:[%s3 + $0x80] sm:$0xf] %v1515
  %1716 = vst [vmem:[%s3 + $0x84] sm:$0xf] %v1516
  %1717 = vst [vmem:[%s3 + $0x88] sm:$0xf] %v1517
  %1718 = vst [vmem:[%s3 + $0x8c] sm:$0xf] %v1518
  %1719 = vst [vmem:[%s3 + $0x90] sm:$0xf] %v1519
  %1720 = vst [vmem:[%s3 + $0x94] sm:$0xf] %v1520
  %1721 = vst [vmem:[%s3 + $0x98] sm:$0xf] %v1521
  %1722 = vst [vmem:[%s3 + $0x9c] sm:$0xf] %v1522
  %1723 = vst [vmem:[%s3 + $0xa0] sm:$0xf] %v1523
  %1724 = vst [vmem:[%s3 + $0xa4] sm:$0xf] %v1524
  %1725 = vst [vmem:[%s3 + $0xa8] sm:$0xf] %v1525
  %1726 = vst [vmem:[%s3 + $0xac] sm:$0xf] %v1526
  %1727 = vst [vmem:[%s3 + $0xb0] sm:$0xf] %v1527
  %1728 = vst [vmem:[%s3 + $0xb4] sm:$0xf] %v1528
  %1729 = vst [vmem:[%s3 + $0xb8] sm:$0xf] %v1529
  %1730 = vst [vmem:[%s3 + $0xbc] sm:$0xf] %v1530
  %1731 = vst [vmem:[%s3 + $0xc0] sm:$0xf] %v1531
  %1732 = vst [vmem:[%s3 + $0xc4] sm:$0xf] %v1532
  %1733 = vst [vmem:[%s3 + $0xc8] sm:$0xf] %v1533
  %1734 = vst [vmem:[%s3 + $0xcc] sm:$0xf] %v1534
  %1735 = vst [vmem:[%s3 + $0xd0] sm:$0xf] %v1535
  %1736 = vst [vmem:[%s3 + $0xd4] sm:$0xf] %v1536
  %1737 = vst [vmem:[%s3 + $0xd8] sm:$0xf] %v1537
  %1738 = vst [vmem:[%s3 + $0xdc] sm:$0xf] %v1538
  %1739 = vst [vmem:[%s3 + $0xe0] sm:$0xf] %v1539
  %1740 = vst [vmem:[%s3 + $0xe4] sm:$0xf] %v1540
  %1741 = vst [vmem:[%s3 + $0xe8] sm:$0xf] %v1541
  %1742 = vst [vmem:[%s3 + $0xec] sm:$0xf] %v1542
  %1743 = vst [vmem:[%s3 + $0xf0] sm:$0xf] %v1543
  %1744 = vst [vmem:[%s3 + $0xf4] sm:$0xf] %v1544
  %1745 = vst [vmem:[%s3 + $0xf8] sm:$0xf] %v1545
  %1746 = vst [vmem:[%s3 + $0xfc] sm:$0xf] %v1546
  %1747 = vst [vmem:[%s3 + $0x100] sm:$0xf] %v1547
  %1748 = vst [vmem:[%s3 + $0x104] sm:$0xf] %v1548
  %1749 = vst [vmem:[%s3 + $0x108] sm:$0xf] %v1549
  %1750 = vst [vmem:[%s3 + $0x10c] sm:$0xf] %v1550
  %1751 = vst [vmem:[%s3 + $0x110] sm:$0xf] %v1551
  %1752 = vst [vmem:[%s3 + $0x114] sm:$0xf] %v1552
  %1753 = vst [vmem:[%s3 + $0x118] sm:$0xf] %v1553
  %1754 = vst [vmem:[%s3 + $0x11c] sm:$0xf] %v1554
  %1755 = vst [vmem:[%s3 + $0x120] sm:$0xf] %v1555
  %1756 = vst [vmem:[%s3 + $0x124] sm:$0xf] %v1556
  %1757 = vst [vmem:[%s3 + $0x128] sm:$0xf] %v1557
  %1758 = vst [vmem:[%s3 + $0x12c] sm:$0xf] %v1558
  %1759 = vst [vmem:[%s3 + $0x130] sm:$0xf] %v1559
  %1760 = vst [vmem:[%s3 + $0x134] sm:$0xf] %v1560
  %1761 = vst [vmem:[%s3 + $0x138] sm:$0xf] %v1561
  %1762 = vst [vmem:[%s3 + $0x13c] sm:$0xf] %v1562
  %1763 = vst [vmem:[%s3 + $0x140] sm:$0xf] %v1563
  %1764 = vst [vmem:[%s3 + $0x144] sm:$0xf] %v1564
  %1765 = vst [vmem:[%s3 + $0x148] sm:$0xf] %v1565
  %1766 = vst [vmem:[%s3 + $0x14c] sm:$0xf] %v1566
  %1767 = vst [vmem:[%s3 + $0x150] sm:$0xf] %v1567
  %1768 = vst [vmem:[%s3 + $0x154] sm:$0xf] %v1568
  %1769 = vst [vmem:[%s3 + $0x158] sm:$0xf] %v1569
  %1770 = vst [vmem:[%s3 + $0x15c] sm:$0xf] %v1570
  %1771 = vst [vmem:[%s3 + $0x160] sm:$0xf] %v1571
  %1772 = vst [vmem:[%s3 + $0x164] sm:$0xf] %v1572
  %1773 = vst [vmem:[%s3 + $0x168] sm:$0xf] %v1573
  %1774 = vst [vmem:[%s3 + $0x16c] sm:$0xf] %v1574
  %1775 = vst [vmem:[%s3 + $0x170] sm:$0xf] %v1575
  %1776 = vst [vmem:[%s3 + $0x174] sm:$0xf] %v1576
  %1777 = vst [vmem:[%s3 + $0x178] sm:$0xf] %v1577
  %1778 = vst [vmem:[%s3 + $0x17c] sm:$0xf] %v1578
  %1779 = vst [vmem:[%s3 + $0x180] sm:$0xf] %v1579
  %1780 = vst [vmem:[%s3 + $0x184] sm:$0xf] %v1580
  %1781 = vst [vmem:[%s3 + $0x188] sm:$0xf] %v1581
  %1782 = vst [vmem:[%s3 + $0x18c] sm:$0xf] %v1582
  // Predicated region
  $region14: #{nature_cnn_forward.4} parent=0 // pred_check
    _
  $region15: #{nature_cnn_forward.4} parent=0 // pred_check_branch
    %1784 = sbr.rel (0) target = $region17
  $region16: #{nature_cnn_forward.4} parent=0 // pred_region
    _
  $region17: #{nature_cnn_forward.4} parent=0 // pred_fallthru
    _
  // Predicated region
  $region18: #{nature_cnn_forward.4} parent=0 // pred_check
    _
  $region19: #{nature_cnn_forward.4} parent=0 // pred_check_branch
    %1786 = sbr.rel (0) target = $region21
  $region20: #{nature_cnn_forward.4} parent=0 // pred_region
    _
  $region21: #{nature_cnn_forward.4} parent=0 // pred_fallthru
    _

// kernel: nature_cnn_forward.5
$region0: #{nature_cnn_forward.5}
  #allocation0 [shape = 'u32[]', space=smem, size = 0x4, offset = 0x4, fixed_abs, tag = 'smem constant byte address 0x4 - core index']
  #allocation1 [shape = 'u32[144,128]{1,0:T(1,128)}', space=vmem, size = 0x12000, scoped, tag = 'internal scratch']
  %s0 = inlined_call_operand.vmem [shape: bf16[168,512], index: 0, kind: input, shape index: {}]
  %s1 = inlined_call_operand.vmem [shape: bf16[512,128], index: 1, kind: input, shape index: {}]
  %s2 = inlined_call_operand.vmem [shape: f32[1,128], index: 2, kind: input, shape index: {}]
  %s3 = inlined_call_operand.vmem [shape: bf16[168,128], index: 3, kind: output, shape index: {}]
  %s4 = sld [smem:[#allocation0]]
  $region22: #{nature_cnn_forward.5} parent=0
    _
  %s6 = ssub.s32 1, %s4
  %s7 = scalar_select 0, %s6, %s4
  // Predicated region
  $region2: #{nature_cnn_forward.5} parent=0 // pred_check
    _
  $region3: #{nature_cnn_forward.5} parent=0 // pred_check_branch
    %9 = sbr.rel (0) target = $region5
  $region4: #{nature_cnn_forward.5} parent=0 // pred_region
    _
  $region5: #{nature_cnn_forward.5} parent=0 // pred_fallthru
    _
  // Predicated region
  $region6: #{nature_cnn_forward.5} parent=0 // pred_check
    _
  $region7: #{nature_cnn_forward.5} parent=0 // pred_check_branch
    %11 = sbr.rel (0) target = $region9
  $region8: #{nature_cnn_forward.5} parent=0 // pred_region
    _
  $region9: #{nature_cnn_forward.5} parent=0 // pred_fallthru
    _
  // Predicated region
  $region10: #{nature_cnn_forward.5} parent=0 // pred_check
    _
  $region11: #{nature_cnn_forward.5} parent=0 // pred_check_branch
    %13 = sbr.rel (0) target = $region13
  $region12: #{nature_cnn_forward.5} parent=0 // pred_region
    _
  $region13: #{nature_cnn_forward.5} parent=0 // pred_fallthru
    _
  %v15 = vld [vmem:[%s0] sm:$0xff]
  %v16 = vld [vmem:[%s0 + $0x8] sm:$0xff]
  %v17 = vld [vmem:[%s0 + $0x10] sm:$0xff]
  %v18 = vld [vmem:[%s0 + $0x18] sm:$0xff]
  %v19 = vld [vmem:[%s0 + $0x20] sm:$0xff]
  %v20 = vld [vmem:[%s0 + $0x28] sm:$0xff]
  %v21 = vld [vmem:[%s0 + $0x30] sm:$0xff]
  %v22 = vld [vmem:[%s0 + $0x38] sm:$0xff]
  %v23 = vld [vmem:[%s0 + $0x40] sm:$0xff]
  %v24 = vld [vmem:[%s0 + $0x48] sm:$0xff]
  %v25 = vld [vmem:[%s0 + $0x50] sm:$0xff]
  %v26 = vld [vmem:[%s0 + $0x58] sm:$0xff]
  %v27 = vld [vmem:[%s0 + $0x60] sm:$0xff]
  %v28 = vld [vmem:[%s0 + $0x68] sm:$0xff]
  %v29 = vld [vmem:[%s0 + $0x70] sm:$0xff]
  %v30 = vld [vmem:[%s0 + $0x78] sm:$0xff]
  %v31 = vld [vmem:[%s0 + $0x80] sm:$0xff]
  %v32 = vld [vmem:[%s0 + $0x88] sm:$0xff]
  %v33 = vld [vmem:[%s0 + $0x90] sm:$0xff]
  %v34 = vld [vmem:[%s0 + $0x98] sm:$0xff]
  %v35 = vld [vmem:[%s0 + $0xa0] sm:$0xff]
  %v36 = vld [vmem:[%s0 + $0xa8] sm:$0xff]
  %v37 = vld [vmem:[%s0 + $0xb0] sm:$0xff]
  %v38 = vld [vmem:[%s0 + $0xb8] sm:$0xff]
  %v39 = vld [vmem:[%s0 + $0xc0] sm:$0xff]
  %v40 = vld [vmem:[%s0 + $0xc8] sm:$0xff]
  %v41 = vld [vmem:[%s0 + $0xd0] sm:$0xff]
  %v42 = vld [vmem:[%s0 + $0xd8] sm:$0xff]
  %v43 = vld [vmem:[%s0 + $0xe0] sm:$0xff]
  %v44 = vld [vmem:[%s0 + $0xe8] sm:$0xff]
  %v45 = vld [vmem:[%s0 + $0xf0] sm:$0xff]
  %v46 = vld [vmem:[%s0 + $0xf8] sm:$0xff]
  %v47 = vld [vmem:[%s0 + $0x100] sm:$0xff]
  %v48 = vld [vmem:[%s0 + $0x108] sm:$0xff]
  %v49 = vld [vmem:[%s0 + $0x110] sm:$0xff]
  %v50 = vld [vmem:[%s0 + $0x118] sm:$0xff]
  %v51 = vld [vmem:[%s0 + $0x120] sm:$0xff]
  %v52 = vld [vmem:[%s0 + $0x128] sm:$0xff]
  %v53 = vld [vmem:[%s0 + $0x130] sm:$0xff]
  %v54 = vld [vmem:[%s0 + $0x138] sm:$0xff]
  %v55 = vld [vmem:[%s0 + $0x140] sm:$0xff]
  %v56 = vld [vmem:[%s0 + $0x148] sm:$0xff]
  %v57 = vld [vmem:[%s1] sm:$0xf]
  %v58 = vld [vmem:[%s1 + $0x4] sm:$0xf]
  %v59 = vld [vmem:[%s1 + $0x8] sm:$0xf]
  %v60 = vld [vmem:[%s1 + $0xc] sm:$0xf]
  %v61 = vld [vmem:[%s1 + $0x10] sm:$0xf]
  %v62 = vld [vmem:[%s1 + $0x14] sm:$0xf]
  %v63 = vld [vmem:[%s1 + $0x18] sm:$0xf]
  %v64 = vld [vmem:[%s1 + $0x1c] sm:$0xf]
  %v65 = vld [vmem:[%s1 + $0x20] sm:$0xf]
  %v66 = vld [vmem:[%s1 + $0x24] sm:$0xf]
  %v67 = vld [vmem:[%s1 + $0x28] sm:$0xf]
  %v68 = vld [vmem:[%s1 + $0x2c] sm:$0xf]
  %v69 = vld [vmem:[%s1 + $0x30] sm:$0xf]
  %v70 = vld [vmem:[%s1 + $0x34] sm:$0xf]
  %v71 = vld [vmem:[%s1 + $0x38] sm:$0xf]
  %v72 = vld [vmem:[%s1 + $0x3c] sm:$0xf]
  %v73 = vld [vmem:[%s1 + $0x40] sm:$0xf]
  %v74 = vld [vmem:[%s1 + $0x44] sm:$0xf]
  %v75 = vld [vmem:[%s1 + $0x48] sm:$0xf]
  %v76 = vld [vmem:[%s1 + $0x4c] sm:$0xf]
  %v77 = vld [vmem:[%s1 + $0x50] sm:$0xf]
  %v78 = vld [vmem:[%s1 + $0x54] sm:$0xf]
  %v79 = vld [vmem:[%s1 + $0x58] sm:$0xf]
  %v80 = vld [vmem:[%s1 + $0x5c] sm:$0xf]
  %v81 = vld [vmem:[%s1 + $0x60] sm:$0xf]
  %v82 = vld [vmem:[%s1 + $0x64] sm:$0xf]
  %v83 = vld [vmem:[%s1 + $0x68] sm:$0xf]
  %v84 = vld [vmem:[%s1 + $0x6c] sm:$0xf]
  %v85 = vld [vmem:[%s1 + $0x70] sm:$0xf]
  %v86 = vld [vmem:[%s1 + $0x74] sm:$0xf]
  %v87 = vld [vmem:[%s1 + $0x78] sm:$0xf]
  %v88 = vld [vmem:[%s1 + $0x7c] sm:$0xf]
  %v89 = vld [vmem:[%s1 + $0x80] sm:$0xf]
  %v90 = vld [vmem:[%s1 + $0x84] sm:$0xf]
  %v91 = vld [vmem:[%s1 + $0x88] sm:$0xf]
  %v92 = vld [vmem:[%s1 + $0x8c] sm:$0xf]
  %v93 = vld [vmem:[%s1 + $0x90] sm:$0xf]
  %v94 = vld [vmem:[%s1 + $0x94] sm:$0xf]
  %v95 = vld [vmem:[%s1 + $0x98] sm:$0xf]
  %v96 = vld [vmem:[%s1 + $0x9c] sm:$0xf]
  %v97 = vld [vmem:[%s1 + $0xa0] sm:$0xf]
  %v98 = vld [vmem:[%s1 + $0xa4] sm:$0xf]
  %v99 = vld [vmem:[%s1 + $0xa8] sm:$0xf]
  %v100 = vld [vmem:[%s1 + $0xac] sm:$0xf]
  %v101 = vld [vmem:[%s1 + $0xb0] sm:$0xf]
  %v102 = vld [vmem:[%s1 + $0xb4] sm:$0xf]
  %v103 = vld [vmem:[%s1 + $0xb8] sm:$0xf]
  %v104 = vld [vmem:[%s1 + $0xbc] sm:$0xf]
  %v105 = vld [vmem:[%s1 + $0xc0] sm:$0xf]
  %v106 = vld [vmem:[%s1 + $0xc4] sm:$0xf]
  %v107 = vld [vmem:[%s1 + $0xc8] sm:$0xf]
  %v108 = vld [vmem:[%s1 + $0xcc] sm:$0xf]
  %v109 = vld [vmem:[%s1 + $0xd0] sm:$0xf]
  %v110 = vld [vmem:[%s1 + $0xd4] sm:$0xf]
  %v111 = vld [vmem:[%s1 + $0xd8] sm:$0xf]
  %v112 = vld [vmem:[%s1 + $0xdc] sm:$0xf]
  %v113 = vld [vmem:[%s1 + $0xe0] sm:$0xf]
  %v114 = vld [vmem:[%s1 + $0xe4] sm:$0xf]
  %v115 = vld [vmem:[%s1 + $0xe8] sm:$0xf]
  %v116 = vld [vmem:[%s1 + $0xec] sm:$0xf]
  %v117 = vld [vmem:[%s1 + $0xf0] sm:$0xf]
  %v118 = vld [vmem:[%s1 + $0xf4] sm:$0xf]
  %v119 = vld [vmem:[%s1 + $0xf8] sm:$0xf]
  %v120 = vld [vmem:[%s1 + $0xfc] sm:$0xf]
  %v121 = vld [vmem:[%s2] sm:$0x1]
  %v123 = vlaneseq
  %v124 = vshrl.u32 %v123, 7
  %v125 = vsub.s32 0, %v124
  %v126 = vrot.slane %v121, %v125
  %v170 = vunpack.c.l.b16 %v15
  %v171 = vunpack.c.h.b16 %v15
  %v172 = vunpack.c.l.b16 %v16
  %v173 = vunpack.c.h.b16 %v16
  %v174 = vunpack.c.l.b16 %v17
  %v175 = vunpack.c.h.b16 %v17
  %v176 = vunpack.c.l.b16 %v18
  %v177 = vunpack.c.h.b16 %v18
  %v178 = vunpack.c.l.b16 %v19
  %v179 = vunpack.c.h.b16 %v19
  %v180 = vunpack.c.l.b16 %v20
  %v181 = vunpack.c.h.b16 %v20
  %v182 = vunpack.c.l.b16 %v21
  %v183 = vunpack.c.h.b16 %v21
  %v184 = vunpack.c.l.b16 %v22
  %v185 = vunpack.c.h.b16 %v22
  %v186 = vunpack.c.l.b16 %v23
  %v187 = vunpack.c.h.b16 %v23
  %v188 = vunpack.c.l.b16 %v24
  %v189 = vunpack.c.h.b16 %v24
  %v190 = vunpack.c.l.b16 %v25
  %v191 = vunpack.c.h.b16 %v25
  %v192 = vunpack.c.l.b16 %v26
  %v193 = vunpack.c.h.b16 %v26
  %v194 = vunpack.c.l.b16 %v27
  %v195 = vunpack.c.h.b16 %v27
  %v196 = vunpack.c.l.b16 %v28
  %v197 = vunpack.c.h.b16 %v28
  %v198 = vunpack.c.l.b16 %v29
  %v199 = vunpack.c.h.b16 %v29
  %v200 = vunpack.c.l.b16 %v30
  %v201 = vunpack.c.h.b16 %v30
  %v202 = vunpack.c.l.b16 %v31
  %v203 = vunpack.c.h.b16 %v31
  %v204 = vunpack.c.l.b16 %v32
  %v205 = vunpack.c.h.b16 %v32
  %v206 = vunpack.c.l.b16 %v33
  %v207 = vunpack.c.h.b16 %v33
  %v208 = vunpack.c.l.b16 %v34
  %v209 = vunpack.c.h.b16 %v34
  %v210 = vunpack.c.l.b16 %v35
  %v211 = vunpack.c.h.b16 %v35
  %v212 = vunpack.c.l.b16 %v36
  %v213 = vunpack.c.h.b16 %v36
  %v214 = vunpack.c.l.b16 %v37
  %v215 = vunpack.c.h.b16 %v37
  %v216 = vunpack.c.l.b16 %v38
  %v217 = vunpack.c.h.b16 %v38
  %v218 = vunpack.c.l.b16 %v39
  %v219 = vunpack.c.h.b16 %v39
  %v220 = vunpack.c.l.b16 %v40
  %v221 = vunpack.c.h.b16 %v40
  %v222 = vunpack.c.l.b16 %v41
  %v223 = vunpack.c.h.b16 %v41
  %v224 = vunpack.c.l.b16 %v42
  %v225 = vunpack.c.h.b16 %v42
  %v226 = vunpack.c.l.b16 %v43
  %v227 = vunpack.c.h.b16 %v43
  %v228 = vunpack.c.l.b16 %v44
  %v229 = vunpack.c.h.b16 %v44
  %v230 = vunpack.c.l.b16 %v45
  %v231 = vunpack.c.h.b16 %v45
  %v232 = vunpack.c.l.b16 %v46
  %v233 = vunpack.c.h.b16 %v46
  %v234 = vunpack.c.l.b16 %v47
  %v235 = vunpack.c.h.b16 %v47
  %v236 = vunpack.c.l.b16 %v48
  %v237 = vunpack.c.h.b16 %v48
  %v238 = vunpack.c.l.b16 %v49
  %v239 = vunpack.c.h.b16 %v49
  %v240 = vunpack.c.l.b16 %v50
  %v241 = vunpack.c.h.b16 %v50
  %v242 = vunpack.c.l.b16 %v51
  %v243 = vunpack.c.h.b16 %v51
  %v244 = vunpack.c.l.b16 %v52
  %v245 = vunpack.c.h.b16 %v52
  %v246 = vunpack.c.l.b16 %v53
  %v247 = vunpack.c.h.b16 %v53
  %v248 = vunpack.c.l.b16 %v54
  %v249 = vunpack.c.h.b16 %v54
  %v250 = vunpack.c.l.b16 %v55
  %v251 = vunpack.c.h.b16 %v55
  %v252 = vunpack.c.l.b16 %v56
  %v253 = vunpack.c.h.b16 %v56
  %v254 = vpack.c.b16 %v174, %v170
  %v255 = vpack.c.b16 %v175, %v171
  %v256 = vpack.c.b16 %v176, %v172
  %v257 = vpack.c.b16 %v177, %v173
  %v258 = vpack.c.b16 %v182, %v178
  %v259 = vpack.c.b16 %v183, %v179
  %v260 = vpack.c.b16 %v184, %v180
  %v261 = vpack.c.b16 %v185, %v181
  %v262 = vpack.c.b16 %v190, %v186
  %v263 = vpack.c.b16 %v191, %v187
  %v264 = vpack.c.b16 %v192, %v188
  %v265 = vpack.c.b16 %v193, %v189
  %v266 = vpack.c.b16 %v198, %v194
  %v267 = vpack.c.b16 %v199, %v195
  %v268 = vpack.c.b16 %v200, %v196
  %v269 = vpack.c.b16 %v201, %v197
  %v270 = vpack.c.b16 %v206, %v202
  %v271 = vpack.c.b16 %v207, %v203
  %v272 = vpack.c.b16 %v208, %v204
  %v273 = vpack.c.b16 %v209, %v205
  %v274 = vpack.c.b16 %v214, %v210
  %v275 = vpack.c.b16 %v215, %v211
  %v276 = vpack.c.b16 %v216, %v212
  %v277 = vpack.c.b16 %v217, %v213
  %v278 = vpack.c.b16 %v222, %v218
  %v279 = vpack.c.b16 %v223, %v219
  %v280 = vpack.c.b16 %v224, %v220
  %v281 = vpack.c.b16 %v225, %v221
  %v282 = vpack.c.b16 %v230, %v226
  %v283 = vpack.c.b16 %v231, %v227
  %v284 = vpack.c.b16 %v232, %v228
  %v285 = vpack.c.b16 %v233, %v229
  %v286 = vpack.c.b16 %v238, %v234
  %v287 = vpack.c.b16 %v239, %v235
  %v288 = vpack.c.b16 %v240, %v236
  %v289 = vpack.c.b16 %v241, %v237
  %v290 = vpack.c.b16 %v246, %v242
  %v291 = vpack.c.b16 %v247, %v243
  %v292 = vpack.c.b16 %v248, %v244
  %v293 = vpack.c.b16 %v249, %v245
  %v294 = vpack.c.b16 %v250, %v250
  %v295 = vpack.c.b16 %v251, %v251
  %v296 = vpack.c.b16 %v252, %v252
  %v297 = vpack.c.b16 %v253, %v253
  %v406 = vunpack.c.l.b16 %v57
  %v407 = vunpack.c.l.b16 %v58
  %v408 = vunpack.c.l.b16 %v59
  %v409 = vunpack.c.l.b16 %v60
  %v410 = vunpack.c.l.b16 %v61
  %v411 = vunpack.c.l.b16 %v62
  %v412 = vunpack.c.l.b16 %v63
  %v413 = vunpack.c.l.b16 %v64
  %v414 = vunpack.c.l.b16 %v65
  %v415 = vunpack.c.l.b16 %v66
  %v416 = vunpack.c.l.b16 %v67
  %v417 = vunpack.c.l.b16 %v68
  %v418 = vunpack.c.l.b16 %v69
  %v419 = vunpack.c.l.b16 %v70
  %v420 = vunpack.c.l.b16 %v71
  %v421 = vunpack.c.l.b16 %v72
  %v422 = vunpack.c.l.b16 %v73
  %v423 = vunpack.c.l.b16 %v74
  %v424 = vunpack.c.l.b16 %v75
  %v425 = vunpack.c.l.b16 %v76
  %v426 = vunpack.c.l.b16 %v77
  %v427 = vunpack.c.l.b16 %v78
  %v428 = vunpack.c.l.b16 %v79
  %v429 = vunpack.c.l.b16 %v80
  %v430 = vunpack.c.l.b16 %v81
  %v431 = vunpack.c.l.b16 %v82
  %v432 = vunpack.c.l.b16 %v83
  %v433 = vunpack.c.l.b16 %v84
  %v434 = vunpack.c.l.b16 %v85
  %v435 = vunpack.c.l.b16 %v86
  %v436 = vunpack.c.l.b16 %v87
  %v437 = vunpack.c.l.b16 %v88
  %v438 = vunpack.c.l.b16 %v89
  %v439 = vunpack.c.l.b16 %v90
  %v440 = vunpack.c.l.b16 %v91
  %v441 = vunpack.c.l.b16 %v92
  %v442 = vunpack.c.l.b16 %v93
  %v443 = vunpack.c.l.b16 %v94
  %v444 = vunpack.c.l.b16 %v95
  %v445 = vunpack.c.l.b16 %v96
  %v446 = vunpack.c.l.b16 %v97
  %v447 = vunpack.c.l.b16 %v98
  %v448 = vunpack.c.l.b16 %v99
  %v449 = vunpack.c.l.b16 %v100
  %v450 = vunpack.c.l.b16 %v101
  %v451 = vunpack.c.l.b16 %v102
  %v452 = vunpack.c.l.b16 %v103
  %v453 = vunpack.c.l.b16 %v104
  %v454 = vunpack.c.l.b16 %v105
  %v455 = vunpack.c.l.b16 %v106
  %v456 = vunpack.c.l.b16 %v107
  %v457 = vunpack.c.l.b16 %v108
  %v458 = vunpack.c.l.b16 %v109
  %v459 = vunpack.c.l.b16 %v110
  %v460 = vunpack.c.l.b16 %v111
  %v461 = vunpack.c.l.b16 %v112
  %v462 = vunpack.c.l.b16 %v113
  %v463 = vunpack.c.l.b16 %v114
  %v464 = vunpack.c.l.b16 %v115
  %v465 = vunpack.c.l.b16 %v116
  %v466 = vunpack.c.l.b16 %v117
  %v467 = vunpack.c.l.b16 %v118
  %v468 = vunpack.c.l.b16 %v119
  %v469 = vunpack.c.l.b16 %v120
  %v470 = vpack.c.b16 %v407, %v406
  %v471 = vpack.c.b16 %v409, %v408
  %v472 = vpack.c.b16 %v411, %v410
  %v473 = vpack.c.b16 %v413, %v412
  %v474 = vpack.c.b16 %v415, %v414
  %v475 = vpack.c.b16 %v417, %v416
  %v476 = vpack.c.b16 %v419, %v418
  %v477 = vpack.c.b16 %v421, %v420
  %v478 = vpack.c.b16 %v423, %v422
  %v479 = vpack.c.b16 %v425, %v424
  %v480 = vpack.c.b16 %v427, %v426
  %v481 = vpack.c.b16 %v429, %v428
  %v482 = vpack.c.b16 %v431, %v430
  %v483 = vpack.c.b16 %v433, %v432
  %v484 = vpack.c.b16 %v435, %v434
  %v485 = vpack.c.b16 %v437, %v436
  %v486 = vpack.c.b16 %v439, %v438
  %v487 = vpack.c.b16 %v441, %v440
  %v488 = vpack.c.b16 %v443, %v442
  %v489 = vpack.c.b16 %v445, %v444
  %v490 = vpack.c.b16 %v447, %v446
  %v491 = vpack.c.b16 %v449, %v448
  %v492 = vpack.c.b16 %v451, %v450
  %v493 = vpack.c.b16 %v453, %v452
  %v494 = vpack.c.b16 %v455, %v454
  %v495 = vpack.c.b16 %v457, %v456
  %v496 = vpack.c.b16 %v459, %v458
  %v497 = vpack.c.b16 %v461, %v460
  %v498 = vpack.c.b16 %v463, %v462
  %v499 = vpack.c.b16 %v465, %v464
  %v500 = vpack.c.b16 %v467, %v466
  %v501 = vpack.c.b16 %v469, %v468
  %534 = vmatprep.subr.bf16.mxu0 0
  %535 = vmatpush1.bf16.msra.mxu0 %v470
  %536 = vmatprep.subr.bf16.mxu0 0
  %537 = vmatpush1.bf16.msra.mxu0 %v471
  %538 = vmatprep.subr.bf16.mxu0 0
  %539 = vmatpush1.bf16.msra.mxu0 %v472
  %540 = vmatprep.subr.bf16.mxu0 0
  %541 = vmatpush1.bf16.msra.mxu0 %v473
  %542 = vmatprep.subr.bf16.mxu0 0
  %543 = vmatpush1.bf16.msra.mxu0 %v474
  %544 = vmatprep.subr.bf16.mxu0 0
  %545 = vmatpush1.bf16.msra.mxu0 %v475
  %546 = vmatprep.subr.bf16.mxu0 0
  %547 = vmatpush1.bf16.msra.mxu0 %v476
  %548 = vmatprep.subr.bf16.mxu0 0
  %549 = vmatpush1.bf16.msra.mxu0 %v477
  %550 = vmatprep.subr.bf16.mxu0 0
  %551 = vmatpush1.bf16.msra.mxu0 %v478
  %552 = vmatprep.subr.bf16.mxu0 0
  %553 = vmatpush1.bf16.msra.mxu0 %v479
  %554 = vmatprep.subr.bf16.mxu0 0
  %555 = vmatpush1.bf16.msra.mxu0 %v480
  %556 = vmatprep.subr.bf16.mxu0 0
  %557 = vmatpush1.bf16.msra.mxu0 %v481
  %558 = vmatprep.subr.bf16.mxu0 0
  %559 = vmatpush1.bf16.msra.mxu0 %v482
  %560 = vmatprep.subr.bf16.mxu0 0
  %561 = vmatpush1.bf16.msra.mxu0 %v483
  %562 = vmatprep.subr.bf16.mxu0 0
  %563 = vmatpush1.bf16.msra.mxu0 %v484
  %564 = vmatprep.subr.bf16.mxu0 0
  %565 = vmatpush1.bf16.msra.mxu0 %v485
  %566 = vmatprep.mubr.bf16.mxu0 %v255
  %567 = vmatmul.mubr.bf16.gmra.mrb[0].mxu0 %v254
  %v568 = vpop.f32.mrb[0].mxu0
  %v569 = vadd.f32 %v126, %v568
  %v570 = vpop.f32.mrb[0].mxu0
  %v571 = vpop.f32.mrb[0].mxu0
  %v572 = vadd.f32 %v126, %v571
  %v573 = vpop.f32.mrb[0].mxu0
  %574 = vmatprep.mubr.bf16.mxu0 %v259
  %575 = vmatmul.mubr.bf16.gmra.mrb[0].mxu0 %v258
  %v576 = vpop.f32.mrb[0].mxu0
  %v577 = vadd.f32 %v126, %v576
  %v578 = vpop.f32.mrb[0].mxu0
  %v579 = vpop.f32.mrb[0].mxu0
  %v580 = vadd.f32 %v126, %v579
  %v581 = vpop.f32.mrb[0].mxu0
  %582 = vmatprep.mubr.bf16.mxu0 %v263
  %583 = vmatmul.mubr.bf16.gmra.mrb[0].mxu0 %v262
  %v584 = vpop.f32.mrb[0].mxu0
  %v585 = vadd.f32 %v126, %v584
  %v586 = vpop.f32.mrb[0].mxu0
  %v587 = vpop.f32.mrb[0].mxu0
  %v588 = vadd.f32 %v126, %v587
  %v589 = vpop.f32.mrb[0].mxu0
  %590 = vmatprep.mubr.bf16.mxu0 %v267
  %591 = vmatmul.mubr.bf16.gmra.mrb[0].mxu0 %v266
  %v592 = vpop.f32.mrb[0].mxu0
  %v593 = vadd.f32 %v126, %v592
  %v594 = vpop.f32.mrb[0].mxu0
  %v595 = vpop.f32.mrb[0].mxu0
  %v596 = vadd.f32 %v126, %v595
  %v597 = vpop.f32.mrb[0].mxu0
  %598 = vmatprep.mubr.bf16.mxu0 %v271
  %599 = vmatmul.mubr.bf16.gmra.mrb[0].mxu0 %v270
  %v600 = vpop.f32.mrb[0].mxu0
  %v601 = vadd.f32 %v126, %v600
  %v602 = vpop.f32.mrb[0].mxu0
  %v603 = vpop.f32.mrb[0].mxu0
  %v604 = vadd.f32 %v126, %v603
  %v605 = vpop.f32.mrb[0].mxu0
  %606 = vmatprep.mubr.bf16.mxu0 %v275
  %607 = vmatmul.mubr.bf16.gmra.mrb[0].mxu0 %v274
  %v608 = vpop.f32.mrb[0].mxu0
  %v609 = vadd.f32 %v126, %v608
  %v610 = vpop.f32.mrb[0].mxu0
  %v611 = vpop.f32.mrb[0].mxu0
  %v612 = vadd.f32 %v126, %v611
  %v613 = vpop.f32.mrb[0].mxu0
  %614 = vmatprep.mubr.bf16.mxu0 %v279
  %615 = vmatmul.mubr.bf16.gmra.mrb[0].mxu0 %v278
  %v616 = vpop.f32.mrb[0].mxu0
  %v617 = vadd.f32 %v126, %v616
  %v618 = vpop.f32.mrb[0].mxu0
  %v619 = vpop.f32.mrb[0].mxu0
  %v620 = vadd.f32 %v126, %v619
  %v621 = vpop.f32.mrb[0].mxu0
  %622 = vmatprep.mubr.bf16.mxu0 %v283
  %623 = vmatmul.mubr.bf16.gmra.mrb[0].mxu0 %v282
  %v624 = vpop.f32.mrb[0].mxu0
  %v625 = vadd.f32 %v126, %v624
  %v626 = vpop.f32.mrb[0].mxu0
  %v627 = vpop.f32.mrb[0].mxu0
  %v628 = vadd.f32 %v126, %v627
  %v629 = vpop.f32.mrb[0].mxu0
  %630 = vmatprep.mubr.bf16.mxu0 %v287
  %631 = vmatmul.mubr.bf16.gmra.mrb[0].mxu0 %v286
  %v632 = vpop.f32.mrb[0].mxu0
  %v633 = vadd.f32 %v126, %v632
  %v634 = vpop.f32.mrb[0].mxu0
  %v635 = vpop.f32.mrb[0].mxu0
  %v636 = vadd.f32 %v126, %v635
  %v637 = vpop.f32.mrb[0].mxu0
  %638 = vmatprep.mubr.bf16.mxu0 %v291
  %639 = vmatmul.mubr.bf16.gmra.mrb[0].mxu0 %v290
  %v640 = vpop.f32.mrb[0].mxu0
  %v641 = vadd.f32 %v126, %v640
  %v642 = vpop.f32.mrb[0].mxu0
  %v643 = vpop.f32.mrb[0].mxu0
  %v644 = vadd.f32 %v126, %v643
  %v645 = vpop.f32.mrb[0].mxu0
  %646 = vmatprep.mubr.bf16.mxu0 %v295
  %647 = vmatmul.mubr.bf16.gmra.mrb[0].mxu0 %v294
  %v648 = vpop.f32.mrb[0].mxu0
  %v649 = vadd.f32 %v126, %v648
  %v650 = vpop.f32.mrb[0].mxu0
  %v651 = vpop.f32.mrb[0].mxu0
  %v652 = vpop.f32.mrb[0].mxu0
  %653 = vdwg.mxu0
  %654 = vmatprep.subr.bf16.mxu0 0
  %655 = vmatpush1.bf16.msra.mxu0 %v486
  %656 = vmatprep.subr.bf16.mxu0 0
  %657 = vmatpush1.bf16.msra.mxu0 %v487
  %658 = vmatprep.subr.bf16.mxu0 0
  %659 = vmatpush1.bf16.msra.mxu0 %v488
  %660 = vmatprep.subr.bf16.mxu0 0
  %661 = vmatpush1.bf16.msra.mxu0 %v489
  %662 = vmatprep.subr.bf16.mxu0 0
  %663 = vmatpush1.bf16.msra.mxu0 %v490
  %664 = vmatprep.subr.bf16.mxu0 0
  %665 = vmatpush1.bf16.msra.mxu0 %v491
  %666 = vmatprep.subr.bf16.mxu0 0
  %667 = vmatpush1.bf16.msra.mxu0 %v492
  %668 = vmatprep.subr.bf16.mxu0 0
  %669 = vmatpush1.bf16.msra.mxu0 %v493
  %670 = vmatprep.subr.bf16.mxu0 0
  %671 = vmatpush1.bf16.msra.mxu0 %v494
  %672 = vmatprep.subr.bf16.mxu0 0
  %673 = vmatpush1.bf16.msra.mxu0 %v495
  %674 = vmatprep.subr.bf16.mxu0 0
  %675 = vmatpush1.bf16.msra.mxu0 %v496
  %676 = vmatprep.subr.bf16.mxu0 0
  %677 = vmatpush1.bf16.msra.mxu0 %v497
  %678 = vmatprep.subr.bf16.mxu0 0
  %679 = vmatpush1.bf16.msra.mxu0 %v498
  %680 = vmatprep.subr.bf16.mxu0 0
  %681 = vmatpush1.bf16.msra.mxu0 %v499
  %682 = vmatprep.subr.bf16.mxu0 0
  %683 = vmatpush1.bf16.msra.mxu0 %v500
  %684 = vmatprep.subr.bf16.mxu0 0
  %685 = vmatpush1.bf16.msra.mxu0 %v501
  %686 = vmatprep.mubr.bf16.mxu0 %v257
  %687 = vmatmul.mubr.bf16.gmra.mrb[0].mxu0 %v256
  %v688 = vpop.f32.mrb[0].mxu0
  %v689 = vadd.f32 %v569, %v688
  %v690 = vpop.f32.mrb[0].mxu0
  %v691 = vpop.f32.mrb[0].mxu0
  %v692 = vadd.f32 %v572, %v691
  %v693 = vpop.f32.mrb[0].mxu0
  %694 = vmatprep.mubr.bf16.mxu0 %v261
  %695 = vmatmul.mubr.bf16.gmra.mrb[0].mxu0 %v260
  %v696 = vpop.f32.mrb[0].mxu0
  %v697 = vadd.f32 %v577, %v696
  %v698 = vpop.f32.mrb[0].mxu0
  %v699 = vpop.f32.mrb[0].mxu0
  %v700 = vadd.f32 %v580, %v699
  %v701 = vpop.f32.mrb[0].mxu0
  %702 = vmatprep.mubr.bf16.mxu0 %v265
  %703 = vmatmul.mubr.bf16.gmra.mrb[0].mxu0 %v264
  %v704 = vpop.f32.mrb[0].mxu0
  %v705 = vadd.f32 %v585, %v704
  %v706 = vpop.f32.mrb[0].mxu0
  %v707 = vpop.f32.mrb[0].mxu0
  %v708 = vadd.f32 %v588, %v707
  %v709 = vpop.f32.mrb[0].mxu0
  %710 = vmatprep.mubr.bf16.mxu0 %v269
  %711 = vmatmul.mubr.bf16.gmra.mrb[0].mxu0 %v268
  %v712 = vpop.f32.mrb[0].mxu0
  %v713 = vadd.f32 %v593, %v712
  %v714 = vpop.f32.mrb[0].mxu0
  %v715 = vpop.f32.mrb[0].mxu0
  %v716 = vadd.f32 %v596, %v715
  %v717 = vpop.f32.mrb[0].mxu0
  %718 = vmatprep.mubr.bf16.mxu0 %v273
  %719 = vmatmul.mubr.bf16.gmra.mrb[0].mxu0 %v272
  %v720 = vpop.f32.mrb[0].mxu0
  %v721 = vadd.f32 %v601, %v720
  %v722 = vpop.f32.mrb[0].mxu0
  %v723 = vpop.f32.mrb[0].mxu0
  %v724 = vadd.f32 %v604, %v723
  %v725 = vpop.f32.mrb[0].mxu0
  %726 = vmatprep.mubr.bf16.mxu0 %v277
  %727 = vmatmul.mubr.bf16.gmra.mrb[0].mxu0 %v276
  %v728 = vpop.f32.mrb[0].mxu0
  %v729 = vadd.f32 %v609, %v728
  %v730 = vpop.f32.mrb[0].mxu0
  %v731 = vpop.f32.mrb[0].mxu0
  %v732 = vadd.f32 %v612, %v731
  %v733 = vpop.f32.mrb[0].mxu0
  %734 = vmatprep.mubr.bf16.mxu0 %v281
  %735 = vmatmul.mubr.bf16.gmra.mrb[0].mxu0 %v280
  %v736 = vpop.f32.mrb[0].mxu0
  %v737 = vadd.f32 %v617, %v736
  %v738 = vpop.f32.mrb[0].mxu0
  %v739 = vpop.f32.mrb[0].mxu0
  %v740 = vadd.f32 %v620, %v739
  %v741 = vpop.f32.mrb[0].mxu0
  %742 = vmatprep.mubr.bf16.mxu0 %v285
  %743 = vmatmul.mubr.bf16.gmra.mrb[0].mxu0 %v284
  %v744 = vpop.f32.mrb[0].mxu0
  %v745 = vadd.f32 %v625, %v744
  %v746 = vpop.f32.mrb[0].mxu0
  %v747 = vpop.f32.mrb[0].mxu0
  %v748 = vadd.f32 %v628, %v747
  %v749 = vpop.f32.mrb[0].mxu0
  %750 = vmatprep.mubr.bf16.mxu0 %v289
  %751 = vmatmul.mubr.bf16.gmra.mrb[0].mxu0 %v288
  %v752 = vpop.f32.mrb[0].mxu0
  %v753 = vadd.f32 %v633, %v752
  %v754 = vpop.f32.mrb[0].mxu0
  %v755 = vpop.f32.mrb[0].mxu0
  %v756 = vadd.f32 %v636, %v755
  %v757 = vpop.f32.mrb[0].mxu0
  %758 = vmatprep.mubr.bf16.mxu0 %v293
  %759 = vmatmul.mubr.bf16.gmra.mrb[0].mxu0 %v292
  %v760 = vpop.f32.mrb[0].mxu0
  %v761 = vadd.f32 %v641, %v760
  %v762 = vpop.f32.mrb[0].mxu0
  %v763 = vpop.f32.mrb[0].mxu0
  %v764 = vadd.f32 %v644, %v763
  %v765 = vpop.f32.mrb[0].mxu0
  %766 = vmatprep.mubr.bf16.mxu0 %v297
  %767 = vmatmul.mubr.bf16.gmra.mrb[0].mxu0 %v296
  %v768 = vpop.f32.mrb[0].mxu0
  %v769 = vadd.f32 %v649, %v768
  %v770 = vpop.f32.mrb[0].mxu0
  %v771 = vpop.f32.mrb[0].mxu0
  %v772 = vpop.f32.mrb[0].mxu0
  %773 = vdwg.mxu0
  %v774 = vmax.f32 %v689, 0.0
  %v775 = vmax.f32 %v692, 0.0
  %v776 = vmax.f32 %v697, 0.0
  %v777 = vmax.f32 %v700, 0.0
  %v778 = vmax.f32 %v705, 0.0
  %v779 = vmax.f32 %v708, 0.0
  %v780 = vmax.f32 %v713, 0.0
  %v781 = vmax.f32 %v716, 0.0
  %v782 = vmax.f32 %v721, 0.0
  %v783 = vmax.f32 %v724, 0.0
  %v784 = vmax.f32 %v729, 0.0
  %v785 = vmax.f32 %v732, 0.0
  %v786 = vmax.f32 %v737, 0.0
  %v787 = vmax.f32 %v740, 0.0
  %v788 = vmax.f32 %v745, 0.0
  %v789 = vmax.f32 %v748, 0.0
  %v790 = vmax.f32 %v753, 0.0
  %v791 = vmax.f32 %v756, 0.0
  %v792 = vmax.f32 %v761, 0.0
  %v793 = vmax.f32 %v764, 0.0
  %v794 = vmax.f32 %v769, 0.0
  %v795 = vpack.c.bf16 %v775, %v774
  %v796 = vpack.c.bf16 %v777, %v776
  %v797 = vpack.c.bf16 %v779, %v778
  %v798 = vpack.c.bf16 %v781, %v780
  %v799 = vpack.c.bf16 %v783, %v782
  %v800 = vpack.c.bf16 %v785, %v784
  %v801 = vpack.c.bf16 %v787, %v786
  %v802 = vpack.c.bf16 %v789, %v788
  %v803 = vpack.c.bf16 %v791, %v790
  %v804 = vpack.c.bf16 %v793, %v792
  %v805 = vpack.c.bf16 %v794, %v794
  %v817 = vunpack.c.l.b16 %v795
  %v818 = vunpack.c.h.b16 %v795
  %v819 = vunpack.c.l.b16 %v796
  %v820 = vunpack.c.h.b16 %v796
  %v821 = vunpack.c.l.b16 %v797
  %v822 = vunpack.c.h.b16 %v797
  %v823 = vunpack.c.l.b16 %v798
  %v824 = vunpack.c.h.b16 %v798
  %v825 = vunpack.c.l.b16 %v799
  %v826 = vunpack.c.h.b16 %v799
  %v827 = vunpack.c.l.b16 %v800
  %v828 = vunpack.c.h.b16 %v800
  %v829 = vunpack.c.l.b16 %v801
  %v830 = vunpack.c.h.b16 %v801
  %v831 = vunpack.c.l.b16 %v802
  %v832 = vunpack.c.h.b16 %v802
  %v833 = vunpack.c.l.b16 %v803
  %v834 = vunpack.c.h.b16 %v803
  %v835 = vunpack.c.l.b16 %v804
  %v836 = vunpack.c.h.b16 %v804
  %v837 = vunpack.c.l.b16 %v805
  %v838 = vpack.c.b16 %v817, %v817
  %v839 = vpack.c.b16 %v818, %v818
  %v840 = vpack.c.b16 %v819, %v819
  %v841 = vpack.c.b16 %v820, %v820
  %v842 = vpack.c.b16 %v821, %v821
  %v843 = vpack.c.b16 %v822, %v822
  %v844 = vpack.c.b16 %v823, %v823
  %v845 = vpack.c.b16 %v824, %v824
  %v846 = vpack.c.b16 %v825, %v825
  %v847 = vpack.c.b16 %v826, %v826
  %v848 = vpack.c.b16 %v827, %v827
  %v849 = vpack.c.b16 %v828, %v828
  %v850 = vpack.c.b16 %v829, %v829
  %v851 = vpack.c.b16 %v830, %v830
  %v852 = vpack.c.b16 %v831, %v831
  %v853 = vpack.c.b16 %v832, %v832
  %v854 = vpack.c.b16 %v833, %v833
  %v855 = vpack.c.b16 %v834, %v834
  %v856 = vpack.c.b16 %v835, %v835
  %v857 = vpack.c.b16 %v836, %v836
  %v858 = vpack.c.b16 %v837, %v837
  %880 = vst [vmem:[%s3] sm:$0xf] %v838
  %881 = vst [vmem:[%s3 + $0x4] sm:$0xf] %v839
  %882 = vst [vmem:[%s3 + $0x8] sm:$0xf] %v840
  %883 = vst [vmem:[%s3 + $0xc] sm:$0xf] %v841
  %884 = vst [vmem:[%s3 + $0x10] sm:$0xf] %v842
  %885 = vst [vmem:[%s3 + $0x14] sm:$0xf] %v843
  %886 = vst [vmem:[%s3 + $0x18] sm:$0xf] %v844
  %887 = vst [vmem:[%s3 + $0x1c] sm:$0xf] %v845
  %888 = vst [vmem:[%s3 + $0x20] sm:$0xf] %v846
  %889 = vst [vmem:[%s3 + $0x24] sm:$0xf] %v847
  %890 = vst [vmem:[%s3 + $0x28] sm:$0xf] %v848
  %891 = vst [vmem:[%s3 + $0x2c] sm:$0xf] %v849
  %892 = vst [vmem:[%s3 + $0x30] sm:$0xf] %v850
  %893 = vst [vmem:[%s3 + $0x34] sm:$0xf] %v851
  %894 = vst [vmem:[%s3 + $0x38] sm:$0xf] %v852
  %895 = vst [vmem:[%s3 + $0x3c] sm:$0xf] %v853
  %896 = vst [vmem:[%s3 + $0x40] sm:$0xf] %v854
  %897 = vst [vmem:[%s3 + $0x44] sm:$0xf] %v855
  %898 = vst [vmem:[%s3 + $0x48] sm:$0xf] %v856
  %899 = vst [vmem:[%s3 + $0x4c] sm:$0xf] %v857
  %900 = vst [vmem:[%s3 + $0x50] sm:$0xf] %v858
  // Predicated region
  $region14: #{nature_cnn_forward.5} parent=0 // pred_check
    _
  $region15: #{nature_cnn_forward.5} parent=0 // pred_check_branch
    %902 = sbr.rel (0) target = $region17
  $region16: #{nature_cnn_forward.5} parent=0 // pred_region
    _
  $region17: #{nature_cnn_forward.5} parent=0 // pred_fallthru
    _
  // Predicated region
  $region18: #{nature_cnn_forward.5} parent=0 // pred_check
    _
  $region19: #{nature_cnn_forward.5} parent=0 // pred_check_branch
    %904 = sbr.rel (0) target = $region21
  $region20: #{nature_cnn_forward.5} parent=0 // pred_region
    _
  $region21: #{nature_cnn_forward.5} parent=0 // pred_fallthru
    _

// kernel: nature_cnn_forward.6
$region0: #{nature_cnn_forward.6}
  #allocation0 [shape = 'u32[]', space=smem, size = 0x4, offset = 0x4, fixed_abs, tag = 'smem constant byte address 0x4 - core index']
  #allocation1 [shape = 'u32[144,128]{1,0:T(1,128)}', space=vmem, size = 0x12000, scoped, tag = 'internal scratch']
  %s0 = inlined_call_operand.vmem [shape: bf16[104,640], index: 0, kind: input, shape index: {}]
  %s1 = inlined_call_operand.vmem [shape: bf16[640,128], index: 1, kind: input, shape index: {}]
  %s2 = inlined_call_operand.vmem [shape: f32[1,128], index: 2, kind: input, shape index: {}]
  %s3 = inlined_call_operand.vmem [shape: bf16[104,128], index: 3, kind: output, shape index: {}]
  %s4 = sld [smem:[#allocation0]]
  $region22: #{nature_cnn_forward.6} parent=0
    _
  %s6 = ssub.s32 1, %s4
  %s7 = scalar_select 0, %s6, %s4
  // Predicated region
  $region2: #{nature_cnn_forward.6} parent=0 // pred_check
    _
  $region3: #{nature_cnn_forward.6} parent=0 // pred_check_branch
    %9 = sbr.rel (0) target = $region5
  $region4: #{nature_cnn_forward.6} parent=0 // pred_region
    _
  $region5: #{nature_cnn_forward.6} parent=0 // pred_fallthru
    _
  // Predicated region
  $region6: #{nature_cnn_forward.6} parent=0 // pred_check
    _
  $region7: #{nature_cnn_forward.6} parent=0 // pred_check_branch
    %11 = sbr.rel (0) target = $region9
  $region8: #{nature_cnn_forward.6} parent=0 // pred_region
    _
  $region9: #{nature_cnn_forward.6} parent=0 // pred_fallthru
    _
  // Predicated region
  $region10: #{nature_cnn_forward.6} parent=0 // pred_check
    _
  $region11: #{nature_cnn_forward.6} parent=0 // pred_check_branch
    %13 = sbr.rel (0) target = $region13
  $region12: #{nature_cnn_forward.6} parent=0 // pred_region
    _
  $region13: #{nature_cnn_forward.6} parent=0 // pred_fallthru
    _
  %v15 = vld [vmem:[%s0] sm:$0xff]
  %v16 = vld [vmem:[%s0 + $0x8] sm:$0xff]
  %v17 = vld [vmem:[%s0 + $0x10] sm:$0xf]
  %v18 = vld [vmem:[%s0 + $0x14] sm:$0xff]
  %v19 = vld [vmem:[%s0 + $0x1c] sm:$0xff]
  %v20 = vld [vmem:[%s0 + $0x24] sm:$0xf]
  %v21 = vld [vmem:[%s0 + $0x28] sm:$0xff]
  %v22 = vld [vmem:[%s0 + $0x30] sm:$0xff]
  %v23 = vld [vmem:[%s0 + $0x38] sm:$0xf]
  %v24 = vld [vmem:[%s0 + $0x3c] sm:$0xff]
  %v25 = vld [vmem:[%s0 + $0x44] sm:$0xff]
  %v26 = vld [vmem:[%s0 + $0x4c] sm:$0xf]
  %v27 = vld [vmem:[%s0 + $0x50] sm:$0xff]
  %v28 = vld [vmem:[%s0 + $0x58] sm:$0xff]
  %v29 = vld [vmem:[%s0 + $0x60] sm:$0xf]
  %v30 = vld [vmem:[%s0 + $0x64] sm:$0xff]
  %v31 = vld [vmem:[%s0 + $0x6c] sm:$0xff]
  %v32 = vld [vmem:[%s0 + $0x74] sm:$0xf]
  %v33 = vld [vmem:[%s0 + $0x78] sm:$0xff]
  %v34 = vld [vmem:[%s0 + $0x80] sm:$0xff]
  %v35 = vld [vmem:[%s0 + $0x88] sm:$0xf]
  %v36 = vld [vmem:[%s0 + $0x8c] sm:$0xff]
  %v37 = vld [vmem:[%s0 + $0x94] sm:$0xff]
  %v38 = vld [vmem:[%s0 + $0x9c] sm:$0xf]
  %v39 = vld [vmem:[%s0 + $0xa0] sm:$0xff]
  %v40 = vld [vmem:[%s0 + $0xa8] sm:$0xff]
  %v41 = vld [vmem:[%s0 + $0xb0] sm:$0xf]
  %v42 = vld [vmem:[%s0 + $0xb4] sm:$0xff]
  %v43 = vld [vmem:[%s0 + $0xbc] sm:$0xff]
  %v44 = vld [vmem:[%s0 + $0xc4] sm:$0xf]
  %v45 = vld [vmem:[%s0 + $0xc8] sm:$0xff]
  %v46 = vld [vmem:[%s0 + $0xd0] sm:$0xff]
  %v47 = vld [vmem:[%s0 + $0xd8] sm:$0xf]
  %v48 = vld [vmem:[%s0 + $0xdc] sm:$0xff]
  %v49 = vld [vmem:[%s0 + $0xe4] sm:$0xff]
  %v50 = vld [vmem:[%s0 + $0xec] sm:$0xf]
  %v51 = vld [vmem:[%s0 + $0xf0] sm:$0xff]
  %v52 = vld [vmem:[%s0 + $0xf8] sm:$0xff]
  %v53 = vld [vmem:[%s0 + $0x100] sm:$0xf]
  %v54 = vld [vmem:[%s1] sm:$0xf]
  %v55 = vld [vmem:[%s1 + $0x4] sm:$0xf]
  %v56 = vld [vmem:[%s1 + $0x8] sm:$0xf]
  %v57 = vld [vmem:[%s1 + $0xc] sm:$0xf]
  %v58 = vld [vmem:[%s1 + $0x10] sm:$0xf]
  %v59 = vld [vmem:[%s1 + $0x14] sm:$0xf]
  %v60 = vld [vmem:[%s1 + $0x18] sm:$0xf]
  %v61 = vld [vmem:[%s1 + $0x1c] sm:$0xf]
  %v62 = vld [vmem:[%s1 + $0x20] sm:$0xf]
  %v63 = vld [vmem:[%s1 + $0x24] sm:$0xf]
  %v64 = vld [vmem:[%s1 + $0x28] sm:$0xf]
  %v65 = vld [vmem:[%s1 + $0x2c] sm:$0xf]
  %v66 = vld [vmem:[%s1 + $0x30] sm:$0xf]
  %v67 = vld [vmem:[%s1 + $0x34] sm:$0xf]
  %v68 = vld [vmem:[%s1 + $0x38] sm:$0xf]
  %v69 = vld [vmem:[%s1 + $0x3c] sm:$0xf]
  %v70 = vld [vmem:[%s1 + $0x40] sm:$0xf]
  %v71 = vld [vmem:[%s1 + $0x44] sm:$0xf]
  %v72 = vld [vmem:[%s1 + $0x48] sm:$0xf]
  %v73 = vld [vmem:[%s1 + $0x4c] sm:$0xf]
  %v74 = vld [vmem:[%s1 + $0x50] sm:$0xf]
  %v75 = vld [vmem:[%s1 + $0x54] sm:$0xf]
  %v76 = vld [vmem:[%s1 + $0x58] sm:$0xf]
  %v77 = vld [vmem:[%s1 + $0x5c] sm:$0xf]
  %v78 = vld [vmem:[%s1 + $0x60] sm:$0xf]
  %v79 = vld [vmem:[%s1 + $0x64] sm:$0xf]
  %v80 = vld [vmem:[%s1 + $0x68] sm:$0xf]
  %v81 = vld [vmem:[%s1 + $0x6c] sm:$0xf]
  %v82 = vld [vmem:[%s1 + $0x70] sm:$0xf]
  %v83 = vld [vmem:[%s1 + $0x74] sm:$0xf]
  %v84 = vld [vmem:[%s1 + $0x78] sm:$0xf]
  %v85 = vld [vmem:[%s1 + $0x7c] sm:$0xf]
  %v86 = vld [vmem:[%s1 + $0x80] sm:$0xf]
  %v87 = vld [vmem:[%s1 + $0x84] sm:$0xf]
  %v88 = vld [vmem:[%s1 + $0x88] sm:$0xf]
  %v89 = vld [vmem:[%s1 + $0x8c] sm:$0xf]
  %v90 = vld [vmem:[%s1 + $0x90] sm:$0xf]
  %v91 = vld [vmem:[%s1 + $0x94] sm:$0xf]
  %v92 = vld [vmem:[%s1 + $0x98] sm:$0xf]
  %v93 = vld [vmem:[%s1 + $0x9c] sm:$0xf]
  %v94 = vld [vmem:[%s1 + $0xa0] sm:$0xf]
  %v95 = vld [vmem:[%s1 + $0xa4] sm:$0xf]
  %v96 = vld [vmem:[%s1 + $0xa8] sm:$0xf]
  %v97 = vld [vmem:[%s1 + $0xac] sm:$0xf]
  %v98 = vld [vmem:[%s1 + $0xb0] sm:$0xf]
  %v99 = vld [vmem:[%s1 + $0xb4] sm:$0xf]
  %v100 = vld [vmem:[%s1 + $0xb8] sm:$0xf]
  %v101 = vld [vmem:[%s1 + $0xbc] sm:$0xf]
  %v102 = vld [vmem:[%s1 + $0xc0] sm:$0xf]
  %v103 = vld [vmem:[%s1 + $0xc4] sm:$0xf]
  %v104 = vld [vmem:[%s1 + $0xc8] sm:$0xf]
  %v105 = vld [vmem:[%s1 + $0xcc] sm:$0xf]
  %v106 = vld [vmem:[%s1 + $0xd0] sm:$0xf]
  %v107 = vld [vmem:[%s1 + $0xd4] sm:$0xf]
  %v108 = vld [vmem:[%s1 + $0xd8] sm:$0xf]
  %v109 = vld [vmem:[%s1 + $0xdc] sm:$0xf]
  %v110 = vld [vmem:[%s1 + $0xe0] sm:$0xf]
  %v111 = vld [vmem:[%s1 + $0xe4] sm:$0xf]
  %v112 = vld [vmem:[%s1 + $0xe8] sm:$0xf]
  %v113 = vld [vmem:[%s1 + $0xec] sm:$0xf]
  %v114 = vld [vmem:[%s1 + $0xf0] sm:$0xf]
  %v115 = vld [vmem:[%s1 + $0xf4] sm:$0xf]
  %v116 = vld [vmem:[%s1 + $0xf8] sm:$0xf]
  %v117 = vld [vmem:[%s1 + $0xfc] sm:$0xf]
  %v118 = vld [vmem:[%s1 + $0x100] sm:$0xf]
  %v119 = vld [vmem:[%s1 + $0x104] sm:$0xf]
  %v120 = vld [vmem:[%s1 + $0x108] sm:$0xf]
  %v121 = vld [vmem:[%s1 + $0x10c] sm:$0xf]
  %v122 = vld [vmem:[%s1 + $0x110] sm:$0xf]
  %v123 = vld [vmem:[%s1 + $0x114] sm:$0xf]
  %v124 = vld [vmem:[%s1 + $0x118] sm:$0xf]
  %v125 = vld [vmem:[%s1 + $0x11c] sm:$0xf]
  %v126 = vld [vmem:[%s1 + $0x120] sm:$0xf]
  %v127 = vld [vmem:[%s1 + $0x124] sm:$0xf]
  %v128 = vld [vmem:[%s1 + $0x128] sm:$0xf]
  %v129 = vld [vmem:[%s1 + $0x12c] sm:$0xf]
  %v130 = vld [vmem:[%s1 + $0x130] sm:$0xf]
  %v131 = vld [vmem:[%s1 + $0x134] sm:$0xf]
  %v132 = vld [vmem:[%s1 + $0x138] sm:$0xf]
  %v133 = vld [vmem:[%s1 + $0x13c] sm:$0xf]
  %v134 = vld [vmem:[%s2] sm:$0x1]
  %v136 = vlaneseq
  %v137 = vshrl.u32 %v136, 7
  %v138 = vsub.s32 0, %v137
  %v139 = vrot.slane %v134, %v138
  %v180 = vunpack.c.l.b16 %v15
  %v181 = vunpack.c.h.b16 %v15
  %v182 = vunpack.c.l.b16 %v16
  %v183 = vunpack.c.h.b16 %v16
  %v184 = vunpack.c.l.b16 %v17
  %v185 = vunpack.c.l.b16 %v18
  %v186 = vunpack.c.h.b16 %v18
  %v187 = vunpack.c.l.b16 %v19
  %v188 = vunpack.c.h.b16 %v19
  %v189 = vunpack.c.l.b16 %v20
  %v190 = vunpack.c.l.b16 %v21
  %v191 = vunpack.c.h.b16 %v21
  %v192 = vunpack.c.l.b16 %v22
  %v193 = vunpack.c.h.b16 %v22
  %v194 = vunpack.c.l.b16 %v23
  %v195 = vunpack.c.l.b16 %v24
  %v196 = vunpack.c.h.b16 %v24
  %v197 = vunpack.c.l.b16 %v25
  %v198 = vunpack.c.h.b16 %v25
  %v199 = vunpack.c.l.b16 %v26
  %v200 = vunpack.c.l.b16 %v27
  %v201 = vunpack.c.h.b16 %v27
  %v202 = vunpack.c.l.b16 %v28
  %v203 = vunpack.c.h.b16 %v28
  %v204 = vunpack.c.l.b16 %v29
  %v205 = vunpack.c.l.b16 %v30
  %v206 = vunpack.c.h.b16 %v30
  %v207 = vunpack.c.l.b16 %v31
  %v208 = vunpack.c.h.b16 %v31
  %v209 = vunpack.c.l.b16 %v32
  %v210 = vunpack.c.l.b16 %v33
  %v211 = vunpack.c.h.b16 %v33
  %v212 = vunpack.c.l.b16 %v34
  %v213 = vunpack.c.h.b16 %v34
  %v214 = vunpack.c.l.b16 %v35
  %v215 = vunpack.c.l.b16 %v36
  %v216 = vunpack.c.h.b16 %v36
  %v217 = vunpack.c.l.b16 %v37
  %v218 = vunpack.c.h.b16 %v37
  %v219 = vunpack.c.l.b16 %v38
  %v220 = vunpack.c.l.b16 %v39
  %v221 = vunpack.c.h.b16 %v39
  %v222 = vunpack.c.l.b16 %v40
  %v223 = vunpack.c.h.b16 %v40
  %v224 = vunpack.c.l.b16 %v41
  %v225 = vunpack.c.l.b16 %v42
  %v226 = vunpack.c.h.b16 %v42
  %v227 = vunpack.c.l.b16 %v43
  %v228 = vunpack.c.h.b16 %v43
  %v229 = vunpack.c.l.b16 %v44
  %v230 = vunpack.c.l.b16 %v45
  %v231 = vunpack.c.h.b16 %v45
  %v232 = vunpack.c.l.b16 %v46
  %v233 = vunpack.c.h.b16 %v46
  %v234 = vunpack.c.l.b16 %v47
  %v235 = vunpack.c.l.b16 %v48
  %v236 = vunpack.c.h.b16 %v48
  %v237 = vunpack.c.l.b16 %v49
  %v238 = vunpack.c.h.b16 %v49
  %v239 = vunpack.c.l.b16 %v50
  %v240 = vunpack.c.l.b16 %v51
  %v241 = vunpack.c.h.b16 %v51
  %v242 = vunpack.c.l.b16 %v52
  %v243 = vunpack.c.h.b16 %v52
  %v244 = vunpack.c.l.b16 %v53
  %v245 = vpack.c.b16 %v185, %v180
  %v246 = vpack.c.b16 %v186, %v181
  %v247 = vpack.c.b16 %v187, %v182
  %v248 = vpack.c.b16 %v188, %v183
  %v249 = vpack.c.b16 %v189, %v184
  %v250 = vpack.c.b16 %v195, %v190
  %v251 = vpack.c.b16 %v196, %v191
  %v252 = vpack.c.b16 %v197, %v192
  %v253 = vpack.c.b16 %v198, %v193
  %v254 = vpack.c.b16 %v199, %v194
  %v255 = vpack.c.b16 %v205, %v200
  %v256 = vpack.c.b16 %v206, %v201
  %v257 = vpack.c.b16 %v207, %v202
  %v258 = vpack.c.b16 %v208, %v203
  %v259 = vpack.c.b16 %v209, %v204
  %v260 = vpack.c.b16 %v215, %v210
  %v261 = vpack.c.b16 %v216, %v211
  %v262 = vpack.c.b16 %v217, %v212
  %v263 = vpack.c.b16 %v218, %v213
  %v264 = vpack.c.b16 %v219, %v214
  %v265 = vpack.c.b16 %v225, %v220
  %v266 = vpack.c.b16 %v226, %v221
  %v267 = vpack.c.b16 %v227, %v222
  %v268 = vpack.c.b16 %v228, %v223
  %v269 = vpack.c.b16 %v229, %v224
  %v270 = vpack.c.b16 %v235, %v230
  %v271 = vpack.c.b16 %v236, %v231
  %v272 = vpack.c.b16 %v237, %v232
  %v273 = vpack.c.b16 %v238, %v233
  %v274 = vpack.c.b16 %v239, %v234
  %v275 = vpack.c.b16 %v240, %v240
  %v276 = vpack.c.b16 %v241, %v241
  %v277 = vpack.c.b16 %v242, %v242
  %v278 = vpack.c.b16 %v243, %v243
  %v279 = vpack.c.b16 %v244, %v244
  %v395 = vunpack.c.l.b16 %v54
  %v396 = vunpack.c.l.b16 %v55
  %v397 = vunpack.c.l.b16 %v56
  %v398 = vunpack.c.l.b16 %v57
  %v399 = vunpack.c.l.b16 %v58
  %v400 = vunpack.c.l.b16 %v59
  %v401 = vunpack.c.l.b16 %v60
  %v402 = vunpack.c.l.b16 %v61
  %v403 = vunpack.c.l.b16 %v62
  %v404 = vunpack.c.l.b16 %v63
  %v405 = vunpack.c.l.b16 %v64
  %v406 = vunpack.c.l.b16 %v65
  %v407 = vunpack.c.l.b16 %v66
  %v408 = vunpack.c.l.b16 %v67
  %v409 = vunpack.c.l.b16 %v68
  %v410 = vunpack.c.l.b16 %v69
  %v411 = vunpack.c.l.b16 %v70
  %v412 = vunpack.c.l.b16 %v71
  %v413 = vunpack.c.l.b16 %v72
  %v414 = vunpack.c.l.b16 %v73
  %v415 = vunpack.c.l.b16 %v74
  %v416 = vunpack.c.l.b16 %v75
  %v417 = vunpack.c.l.b16 %v76
  %v418 = vunpack.c.l.b16 %v77
  %v419 = vunpack.c.l.b16 %v78
  %v420 = vunpack.c.l.b16 %v79
  %v421 = vunpack.c.l.b16 %v80
  %v422 = vunpack.c.l.b16 %v81
  %v423 = vunpack.c.l.b16 %v82
  %v424 = vunpack.c.l.b16 %v83
  %v425 = vunpack.c.l.b16 %v84
  %v426 = vunpack.c.l.b16 %v85
  %v427 = vunpack.c.l.b16 %v86
  %v428 = vunpack.c.l.b16 %v87
  %v429 = vunpack.c.l.b16 %v88
  %v430 = vunpack.c.l.b16 %v89
  %v431 = vunpack.c.l.b16 %v90
  %v432 = vunpack.c.l.b16 %v91
  %v433 = vunpack.c.l.b16 %v92
  %v434 = vunpack.c.l.b16 %v93
  %v435 = vunpack.c.l.b16 %v94
  %v436 = vunpack.c.l.b16 %v95
  %v437 = vunpack.c.l.b16 %v96
  %v438 = vunpack.c.l.b16 %v97
  %v439 = vunpack.c.l.b16 %v98
  %v440 = vunpack.c.l.b16 %v99
  %v441 = vunpack.c.l.b16 %v100
  %v442 = vunpack.c.l.b16 %v101
  %v443 = vunpack.c.l.b16 %v102
  %v444 = vunpack.c.l.b16 %v103
  %v445 = vunpack.c.l.b16 %v104
  %v446 = vunpack.c.l.b16 %v105
  %v447 = vunpack.c.l.b16 %v106
  %v448 = vunpack.c.l.b16 %v107
  %v449 = vunpack.c.l.b16 %v108
  %v450 = vunpack.c.l.b16 %v109
  %v451 = vunpack.c.l.b16 %v110
  %v452 = vunpack.c.l.b16 %v111
  %v453 = vunpack.c.l.b16 %v112
  %v454 = vunpack.c.l.b16 %v113
  %v455 = vunpack.c.l.b16 %v114
  %v456 = vunpack.c.l.b16 %v115
  %v457 = vunpack.c.l.b16 %v116
  %v458 = vunpack.c.l.b16 %v117
  %v459 = vunpack.c.l.b16 %v118
  %v460 = vunpack.c.l.b16 %v119
  %v461 = vunpack.c.l.b16 %v120
  %v462 = vunpack.c.l.b16 %v121
  %v463 = vunpack.c.l.b16 %v122
  %v464 = vunpack.c.l.b16 %v123
  %v465 = vunpack.c.l.b16 %v124
  %v466 = vunpack.c.l.b16 %v125
  %v467 = vunpack.c.l.b16 %v126
  %v468 = vunpack.c.l.b16 %v127
  %v469 = vunpack.c.l.b16 %v128
  %v470 = vunpack.c.l.b16 %v129
  %v471 = vunpack.c.l.b16 %v130
  %v472 = vunpack.c.l.b16 %v131
  %v473 = vunpack.c.l.b16 %v132
  %v474 = vunpack.c.l.b16 %v133
  %v475 = vpack.c.b16 %v396, %v395
  %v476 = vpack.c.b16 %v398, %v397
  %v477 = vpack.c.b16 %v400, %v399
  %v478 = vpack.c.b16 %v402, %v401
  %v479 = vpack.c.b16 %v404, %v403
  %v480 = vpack.c.b16 %v406, %v405
  %v481 = vpack.c.b16 %v408, %v407
  %v482 = vpack.c.b16 %v410, %v409
  %v483 = vpack.c.b16 %v412, %v411
  %v484 = vpack.c.b16 %v414, %v413
  %v485 = vpack.c.b16 %v416, %v415
  %v486 = vpack.c.b16 %v418, %v417
  %v487 = vpack.c.b16 %v420, %v419
  %v488 = vpack.c.b16 %v422, %v421
  %v489 = vpack.c.b16 %v424, %v423
  %v490 = vpack.c.b16 %v426, %v425
  %v491 = vpack.c.b16 %v428, %v427
  %v492 = vpack.c.b16 %v430, %v429
  %v493 = vpack.c.b16 %v432, %v431
  %v494 = vpack.c.b16 %v434, %v433
  %v495 = vpack.c.b16 %v436, %v435
  %v496 = vpack.c.b16 %v438, %v437
  %v497 = vpack.c.b16 %v440, %v439
  %v498 = vpack.c.b16 %v442, %v441
  %v499 = vpack.c.b16 %v444, %v443
  %v500 = vpack.c.b16 %v446, %v445
  %v501 = vpack.c.b16 %v448, %v447
  %v502 = vpack.c.b16 %v450, %v449
  %v503 = vpack.c.b16 %v452, %v451
  %v504 = vpack.c.b16 %v454, %v453
  %v505 = vpack.c.b16 %v456, %v455
  %v506 = vpack.c.b16 %v458, %v457
  %v507 = vpack.c.b16 %v460, %v459
  %v508 = vpack.c.b16 %v462, %v461
  %v509 = vpack.c.b16 %v464, %v463
  %v510 = vpack.c.b16 %v466, %v465
  %v511 = vpack.c.b16 %v468, %v467
  %v512 = vpack.c.b16 %v470, %v469
  %v513 = vpack.c.b16 %v472, %v471
  %v514 = vpack.c.b16 %v474, %v473
  %555 = vmatprep.subr.bf16.mxu0 0
  %556 = vmatpush1.bf16.msra.mxu0 %v475
  %557 = vmatprep.subr.bf16.mxu0 0
  %558 = vmatpush1.bf16.msra.mxu0 %v476
  %559 = vmatprep.subr.bf16.mxu0 0
  %560 = vmatpush1.bf16.msra.mxu0 %v477
  %561 = vmatprep.subr.bf16.mxu0 0
  %562 = vmatpush1.bf16.msra.mxu0 %v478
  %563 = vmatprep.subr.bf16.mxu0 0
  %564 = vmatpush1.bf16.msra.mxu0 %v479
  %565 = vmatprep.subr.bf16.mxu0 0
  %566 = vmatpush1.bf16.msra.mxu0 %v480
  %567 = vmatprep.subr.bf16.mxu0 0
  %568 = vmatpush1.bf16.msra.mxu0 %v481
  %569 = vmatprep.subr.bf16.mxu0 0
  %570 = vmatpush1.bf16.msra.mxu0 %v482
  %571 = vmatprep.subr.bf16.mxu0 0
  %572 = vmatpush1.bf16.msra.mxu0 %v483
  %573 = vmatprep.subr.bf16.mxu0 0
  %574 = vmatpush1.bf16.msra.mxu0 %v484
  %575 = vmatprep.subr.bf16.mxu0 0
  %576 = vmatpush1.bf16.msra.mxu0 %v485
  %577 = vmatprep.subr.bf16.mxu0 0
  %578 = vmatpush1.bf16.msra.mxu0 %v486
  %579 = vmatprep.subr.bf16.mxu0 0
  %580 = vmatpush1.bf16.msra.mxu0 %v487
  %581 = vmatprep.subr.bf16.mxu0 0
  %582 = vmatpush1.bf16.msra.mxu0 %v488
  %583 = vmatprep.subr.bf16.mxu0 0
  %584 = vmatpush1.bf16.msra.mxu0 %v489
  %585 = vmatprep.subr.bf16.mxu0 0
  %586 = vmatpush1.bf16.msra.mxu0 %v490
  %587 = vmatprep.mubr.bf16.mxu0 %v246
  %588 = vmatmul.mubr.bf16.gmra.mrb[0].mxu0 %v245
  %v589 = vpop.f32.mrb[0].mxu0
  %v590 = vadd.f32 %v139, %v589
  %v591 = vpop.f32.mrb[0].mxu0
  %v592 = vpop.f32.mrb[0].mxu0
  %v593 = vadd.f32 %v139, %v592
  %v594 = vpop.f32.mrb[0].mxu0
  %595 = vmatprep.mubr.bf16.mxu0 %v251
  %596 = vmatmul.mubr.bf16.gmra.mrb[0].mxu0 %v250
  %v597 = vpop.f32.mrb[0].mxu0
  %v598 = vadd.f32 %v139, %v597
  %v599 = vpop.f32.mrb[0].mxu0
  %v600 = vpop.f32.mrb[0].mxu0
  %v601 = vadd.f32 %v139, %v600
  %v602 = vpop.f32.mrb[0].mxu0
  %603 = vmatprep.mubr.bf16.mxu0 %v256
  %604 = vmatmul.mubr.bf16.gmra.mrb[0].mxu0 %v255
  %v605 = vpop.f32.mrb[0].mxu0
  %v606 = vadd.f32 %v139, %v605
  %v607 = vpop.f32.mrb[0].mxu0
  %v608 = vpop.f32.mrb[0].mxu0
  %v609 = vadd.f32 %v139, %v608
  %v610 = vpop.f32.mrb[0].mxu0
  %611 = vmatprep.mubr.bf16.mxu0 %v261
  %612 = vmatmul.mubr.bf16.gmra.mrb[0].mxu0 %v260
  %v613 = vpop.f32.mrb[0].mxu0
  %v614 = vadd.f32 %v139, %v613
  %v615 = vpop.f32.mrb[0].mxu0
  %v616 = vpop.f32.mrb[0].mxu0
  %v617 = vadd.f32 %v139, %v616
  %v618 = vpop.f32.mrb[0].mxu0
  %619 = vmatprep.mubr.bf16.mxu0 %v266
  %620 = vmatmul.mubr.bf16.gmra.mrb[0].mxu0 %v265
  %v621 = vpop.f32.mrb[0].mxu0
  %v622 = vadd.f32 %v139, %v621
  %v623 = vpop.f32.mrb[0].mxu0
  %v624 = vpop.f32.mrb[0].mxu0
  %v625 = vadd.f32 %v139, %v624
  %v626 = vpop.f32.mrb[0].mxu0
  %627 = vmatprep.mubr.bf16.mxu0 %v271
  %628 = vmatmul.mubr.bf16.gmra.mrb[0].mxu0 %v270
  %v629 = vpop.f32.mrb[0].mxu0
  %v630 = vadd.f32 %v139, %v629
  %v631 = vpop.f32.mrb[0].mxu0
  %v632 = vpop.f32.mrb[0].mxu0
  %v633 = vadd.f32 %v139, %v632
  %v634 = vpop.f32.mrb[0].mxu0
  %635 = vmatprep.mubr.bf16.mxu0 %v276
  %636 = vmatmul.mubr.bf16.gmra.mrb[0].mxu0 %v275
  %v637 = vpop.f32.mrb[0].mxu0
  %v638 = vadd.f32 %v139, %v637
  %v639 = vpop.f32.mrb[0].mxu0
  %v640 = vpop.f32.mrb[0].mxu0
  %v641 = vpop.f32.mrb[0].mxu0
  %642 = vdwg.mxu0
  %643 = vmatprep.subr.bf16.mxu0 0
  %644 = vmatpush1.bf16.msra.mxu0 %v491
  %645 = vmatprep.subr.bf16.mxu0 0
  %646 = vmatpush1.bf16.msra.mxu0 %v492
  %647 = vmatprep.subr.bf16.mxu0 0
  %648 = vmatpush1.bf16.msra.mxu0 %v493
  %649 = vmatprep.subr.bf16.mxu0 0
  %650 = vmatpush1.bf16.msra.mxu0 %v494
  %651 = vmatprep.subr.bf16.mxu0 0
  %652 = vmatpush1.bf16.msra.mxu0 %v495
  %653 = vmatprep.subr.bf16.mxu0 0
  %654 = vmatpush1.bf16.msra.mxu0 %v496
  %655 = vmatprep.subr.bf16.mxu0 0
  %656 = vmatpush1.bf16.msra.mxu0 %v497
  %657 = vmatprep.subr.bf16.mxu0 0
  %658 = vmatpush1.bf16.msra.mxu0 %v498
  %659 = vmatprep.subr.bf16.mxu0 0
  %660 = vmatpush1.bf16.msra.mxu0 %v499
  %661 = vmatprep.subr.bf16.mxu0 0
  %662 = vmatpush1.bf16.msra.mxu0 %v500
  %663 = vmatprep.subr.bf16.mxu0 0
  %664 = vmatpush1.bf16.msra.mxu0 %v501
  %665 = vmatprep.subr.bf16.mxu0 0
  %666 = vmatpush1.bf16.msra.mxu0 %v502
  %667 = vmatprep.subr.bf16.mxu0 0
  %668 = vmatpush1.bf16.msra.mxu0 %v503
  %669 = vmatprep.subr.bf16.mxu0 0
  %670 = vmatpush1.bf16.msra.mxu0 %v504
  %671 = vmatprep.subr.bf16.mxu0 0
  %672 = vmatpush1.bf16.msra.mxu0 %v505
  %673 = vmatprep.subr.bf16.mxu0 0
  %674 = vmatpush1.bf16.msra.mxu0 %v506
  %675 = vmatprep.mubr.bf16.mxu0 %v248
  %676 = vmatmul.mubr.bf16.gmra.mrb[0].mxu0 %v247
  %v677 = vpop.f32.mrb[0].mxu0
  %v678 = vadd.f32 %v590, %v677
  %v679 = vpop.f32.mrb[0].mxu0
  %v680 = vpop.f32.mrb[0].mxu0
  %v681 = vadd.f32 %v593, %v680
  %v682 = vpop.f32.mrb[0].mxu0
  %683 = vmatprep.mubr.bf16.mxu0 %v253
  %684 = vmatmul.mubr.bf16.gmra.mrb[0].mxu0 %v252
  %v685 = vpop.f32.mrb[0].mxu0
  %v686 = vadd.f32 %v598, %v685
  %v687 = vpop.f32.mrb[0].mxu0
  %v688 = vpop.f32.mrb[0].mxu0
  %v689 = vadd.f32 %v601, %v688
  %v690 = vpop.f32.mrb[0].mxu0
  %691 = vmatprep.mubr.bf16.mxu0 %v258
  %692 = vmatmul.mubr.bf16.gmra.mrb[0].mxu0 %v257
  %v693 = vpop.f32.mrb[0].mxu0
  %v694 = vadd.f32 %v606, %v693
  %v695 = vpop.f32.mrb[0].mxu0
  %v696 = vpop.f32.mrb[0].mxu0
  %v697 = vadd.f32 %v609, %v696
  %v698 = vpop.f32.mrb[0].mxu0
  %699 = vmatprep.mubr.bf16.mxu0 %v263
  %700 = vmatmul.mubr.bf16.gmra.mrb[0].mxu0 %v262
  %v701 = vpop.f32.mrb[0].mxu0
  %v702 = vadd.f32 %v614, %v701
  %v703 = vpop.f32.mrb[0].mxu0
  %v704 = vpop.f32.mrb[0].mxu0
  %v705 = vadd.f32 %v617, %v704
  %v706 = vpop.f32.mrb[0].mxu0
  %707 = vmatprep.mubr.bf16.mxu0 %v268
  %708 = vmatmul.mubr.bf16.gmra.mrb[0].mxu0 %v267
  %v709 = vpop.f32.mrb[0].mxu0
  %v710 = vadd.f32 %v622, %v709
  %v711 = vpop.f32.mrb[0].mxu0
  %v712 = vpop.f32.mrb[0].mxu0
  %v713 = vadd.f32 %v625, %v712
  %v714 = vpop.f32.mrb[0].mxu0
  %715 = vmatprep.mubr.bf16.mxu0 %v273
  %716 = vmatmul.mubr.bf16.gmra.mrb[0].mxu0 %v272
  %v717 = vpop.f32.mrb[0].mxu0
  %v718 = vadd.f32 %v630, %v717
  %v719 = vpop.f32.mrb[0].mxu0
  %v720 = vpop.f32.mrb[0].mxu0
  %v721 = vadd.f32 %v633, %v720
  %v722 = vpop.f32.mrb[0].mxu0
  %723 = vmatprep.mubr.bf16.mxu0 %v278
  %724 = vmatmul.mubr.bf16.gmra.mrb[0].mxu0 %v277
  %v725 = vpop.f32.mrb[0].mxu0
  %v726 = vadd.f32 %v638, %v725
  %v727 = vpop.f32.mrb[0].mxu0
  %v728 = vpop.f32.mrb[0].mxu0
  %v729 = vpop.f32.mrb[0].mxu0
  %730 = vdwg.mxu0
  %731 = vmatprep.subr.bf16.mxu0 0
  %732 = vmatpush1.bf16.msra.mxu0 %v507
  %733 = vmatprep.subr.bf16.mxu0 0
  %734 = vmatpush1.bf16.msra.mxu0 %v508
  %735 = vmatprep.subr.bf16.mxu0 0
  %736 = vmatpush1.bf16.msra.mxu0 %v509
  %737 = vmatprep.subr.bf16.mxu0 0
  %738 = vmatpush1.bf16.msra.mxu0 %v510
  %739 = vmatprep.subr.bf16.mxu0 0
  %740 = vmatpush1.bf16.msra.mxu0 %v511
  %741 = vmatprep.subr.bf16.mxu0 0
  %742 = vmatpush1.bf16.msra.mxu0 %v512
  %743 = vmatprep.subr.bf16.mxu0 0
  %744 = vmatpush1.bf16.msra.mxu0 %v513
  %745 = vmatprep.subr.bf16.mxu0 0
  %746 = vmatpush1.bf16.msra.mxu0 %v514
  %747 = vmatprep.subr.bf16.mxu0 0
  %748 = vmatpush1.bf16.msra.mxu0 0
  %749 = vmatprep.subr.bf16.mxu0 0
  %750 = vmatpush1.bf16.msra.mxu0 0
  %751 = vmatprep.subr.bf16.mxu0 0
  %752 = vmatpush1.bf16.msra.mxu0 0
  %753 = vmatprep.subr.bf16.mxu0 0
  %754 = vmatpush1.bf16.msra.mxu0 0
  %755 = vmatprep.subr.bf16.mxu0 0
  %756 = vmatpush1.bf16.msra.mxu0 0
  %757 = vmatprep.subr.bf16.mxu0 0
  %758 = vmatpush1.bf16.msra.mxu0 0
  %759 = vmatprep.subr.bf16.mxu0 0
  %760 = vmatpush1.bf16.msra.mxu0 0
  %761 = vmatprep.subr.bf16.mxu0 0
  %762 = vmatpush1.bf16.msra.mxu0 0
  %763 = vmatprep.mubr.bf16.mxu0 0
  %764 = vmatmul.mubr.bf16.gmra.mrb[0].mxu0 %v249
  %v765 = vpop.f32.mrb[0].mxu0
  %v766 = vadd.f32 %v678, %v765
  %v767 = vpop.f32.mrb[0].mxu0
  %v768 = vpop.f32.mrb[0].mxu0
  %v769 = vadd.f32 %v681, %v768
  %v770 = vpop.f32.mrb[0].mxu0
  %771 = vmatprep.mubr.bf16.mxu0 0
  %772 = vmatmul.mubr.bf16.gmra.mrb[0].mxu0 %v254
  %v773 = vpop.f32.mrb[0].mxu0
  %v774 = vadd.f32 %v686, %v773
  %v775 = vpop.f32.mrb[0].mxu0
  %v776 = vpop.f32.mrb[0].mxu0
  %v777 = vadd.f32 %v689, %v776
  %v778 = vpop.f32.mrb[0].mxu0
  %779 = vmatprep.mubr.bf16.mxu0 0
  %780 = vmatmul.mubr.bf16.gmra.mrb[0].mxu0 %v259
  %v781 = vpop.f32.mrb[0].mxu0
  %v782 = vadd.f32 %v694, %v781
  %v783 = vpop.f32.mrb[0].mxu0
  %v784 = vpop.f32.mrb[0].mxu0
  %v785 = vadd.f32 %v697, %v784
  %v786 = vpop.f32.mrb[0].mxu0
  %787 = vmatprep.mubr.bf16.mxu0 0
  %788 = vmatmul.mubr.bf16.gmra.mrb[0].mxu0 %v264
  %v789 = vpop.f32.mrb[0].mxu0
  %v790 = vadd.f32 %v702, %v789
  %v791 = vpop.f32.mrb[0].mxu0
  %v792 = vpop.f32.mrb[0].mxu0
  %v793 = vadd.f32 %v705, %v792
  %v794 = vpop.f32.mrb[0].mxu0
  %795 = vmatprep.mubr.bf16.mxu0 0
  %796 = vmatmul.mubr.bf16.gmra.mrb[0].mxu0 %v269
  %v797 = vpop.f32.mrb[0].mxu0
  %v798 = vadd.f32 %v710, %v797
  %v799 = vpop.f32.mrb[0].mxu0
  %v800 = vpop.f32.mrb[0].mxu0
  %v801 = vadd.f32 %v713, %v800
  %v802 = vpop.f32.mrb[0].mxu0
  %803 = vmatprep.mubr.bf16.mxu0 0
  %804 = vmatmul.mubr.bf16.gmra.mrb[0].mxu0 %v274
  %v805 = vpop.f32.mrb[0].mxu0
  %v806 = vadd.f32 %v718, %v805
  %v807 = vpop.f32.mrb[0].mxu0
  %v808 = vpop.f32.mrb[0].mxu0
  %v809 = vadd.f32 %v721, %v808
  %v810 = vpop.f32.mrb[0].mxu0
  %811 = vmatprep.mubr.bf16.mxu0 0
  %812 = vmatmul.mubr.bf16.gmra.mrb[0].mxu0 %v279
  %v813 = vpop.f32.mrb[0].mxu0
  %v814 = vadd.f32 %v726, %v813
  %v815 = vpop.f32.mrb[0].mxu0
  %v816 = vpop.f32.mrb[0].mxu0
  %v817 = vpop.f32.mrb[0].mxu0
  %818 = vdwg.mxu0
  %v819 = vmax.f32 %v766, 0.0
  %v820 = vmax.f32 %v769, 0.0
  %v821 = vmax.f32 %v774, 0.0
  %v822 = vmax.f32 %v777, 0.0
  %v823 = vmax.f32 %v782, 0.0
  %v824 = vmax.f32 %v785, 0.0
  %v825 = vmax.f32 %v790, 0.0
  %v826 = vmax.f32 %v793, 0.0
  %v827 = vmax.f32 %v798, 0.0
  %v828 = vmax.f32 %v801, 0.0
  %v829 = vmax.f32 %v806, 0.0
  %v830 = vmax.f32 %v809, 0.0
  %v831 = vmax.f32 %v814, 0.0
  %v832 = vpack.c.bf16 %v820, %v819
  %v833 = vpack.c.bf16 %v822, %v821
  %v834 = vpack.c.bf16 %v824, %v823
  %v835 = vpack.c.bf16 %v826, %v825
  %v836 = vpack.c.bf16 %v828, %v827
  %v837 = vpack.c.bf16 %v830, %v829
  %v838 = vpack.c.bf16 %v831, %v831
  %v846 = vunpack.c.l.b16 %v832
  %v847 = vunpack.c.h.b16 %v832
  %v848 = vunpack.c.l.b16 %v833
  %v849 = vunpack.c.h.b16 %v833
  %v850 = vunpack.c.l.b16 %v834
  %v851 = vunpack.c.h.b16 %v834
  %v852 = vunpack.c.l.b16 %v835
  %v853 = vunpack.c.h.b16 %v835
  %v854 = vunpack.c.l.b16 %v836
  %v855 = vunpack.c.h.b16 %v836
  %v856 = vunpack.c.l.b16 %v837
  %v857 = vunpack.c.h.b16 %v837
  %v858 = vunpack.c.l.b16 %v838
  %v859 = vpack.c.b16 %v846, %v846
  %v860 = vpack.c.b16 %v847, %v847
  %v861 = vpack.c.b16 %v848, %v848
  %v862 = vpack.c.b16 %v849, %v849
  %v863 = vpack.c.b16 %v850, %v850
  %v864 = vpack.c.b16 %v851, %v851
  %v865 = vpack.c.b16 %v852, %v852
  %v866 = vpack.c.b16 %v853, %v853
  %v867 = vpack.c.b16 %v854, %v854
  %v868 = vpack.c.b16 %v855, %v855
  %v869 = vpack.c.b16 %v856, %v856
  %v870 = vpack.c.b16 %v857, %v857
  %v871 = vpack.c.b16 %v858, %v858
  %885 = vst [vmem:[%s3] sm:$0xf] %v859
  %886 = vst [vmem:[%s3 + $0x4] sm:$0xf] %v860
  %887 = vst [vmem:[%s3 + $0x8] sm:$0xf] %v861
  %888 = vst [vmem:[%s3 + $0xc] sm:$0xf] %v862
  %889 = vst [vmem:[%s3 + $0x10] sm:$0xf] %v863
  %890 = vst [vmem:[%s3 + $0x14] sm:$0xf] %v864
  %891 = vst [vmem:[%s3 + $0x18] sm:$0xf] %v865
  %892 = vst [vmem:[%s3 + $0x1c] sm:$0xf] %v866
  %893 = vst [vmem:[%s3 + $0x20] sm:$0xf] %v867
  %894 = vst [vmem:[%s3 + $0x24] sm:$0xf] %v868
  %895 = vst [vmem:[%s3 + $0x28] sm:$0xf] %v869
  %896 = vst [vmem:[%s3 + $0x2c] sm:$0xf] %v870
  %897 = vst [vmem:[%s3 + $0x30] sm:$0xf] %v871
  // Predicated region
  $region14: #{nature_cnn_forward.6} parent=0 // pred_check
    _
  $region15: #{nature_cnn_forward.6} parent=0 // pred_check_branch
    %899 = sbr.rel (0) target = $region17
  $region16: #{nature_cnn_forward.6} parent=0 // pred_region
    _
  $region17: #{nature_cnn_forward.6} parent=0 // pred_fallthru
    _
  // Predicated region
  $region18: #{nature_cnn_forward.6} parent=0 // pred_check
    _
  $region19: #{nature_cnn_forward.6} parent=0 // pred_check_branch
    %901 = sbr.rel (0) target = $region21
  $region20: #{nature_cnn_forward.6} parent=0 // pred_region
    _
  $region21: #{nature_cnn_forward.6} parent=0 // pred_fallthru
    _

// kernel: nature_cnn_forward.7
$region0: #{nature_cnn_forward.7}
  #allocation0 [shape = 'u32[]', space=smem, size = 0x4, offset = 0x4, fixed_abs, tag = 'smem constant byte address 0x4 - core index']
  #allocation1 [shape = 'u32[144,128]{1,0:T(1,128)}', space=vmem, size = 0x12000, scoped, tag = 'internal scratch']
  #allocation2 [shape = 'f32[8,512]{1,0:T(8,128)}', space=vmem, size = 0x4000, scoped, tag = 'scratch operand']
  %s0 = inlined_call_operand.vmem [shape: bf16[8,3200], index: 0, kind: input, shape index: {}]
  %s1 = inlined_call_operand.vmem [shape: bf16[3200,512], index: 1, kind: input, shape index: {}]
  %s2 = inlined_call_operand.vmem [shape: f32[1,512], index: 2, kind: input, shape index: {}]
  %s3 = inlined_call_operand.vmem [shape: f32[8,512], index: 3, kind: output, shape index: {}]
  %s4 = sld [smem:[#allocation0]]
  $region53: #{nature_cnn_forward.7} parent=0
    _
  %s6 = ssub.s32 1, %s4
  %s7 = scalar_select 0, %s6, %s4
  loop: start=0, step=1, limit=7
  $region2: #{nature_cnn_forward.7} parent=0 // loop_pre_header
    _
  $region3: #{nature_cnn_forward.7} parent=0 // loop_header
    %s9 = sphi 0, %s13
    %p10 = scmp.ge.s32.totalorder %s9, 7
    %s16 = sphi 0, %s28
    %s17 = sphi 0, %s24
    %s18 = sphi 0, %s16
    %s19 = sphi 0, %s17
    %s20 = sphi 0, %s18
    %s21 = sphi 0, %s19
    %s33 = sphi 0, %s35
    %s36 = sphi 0, %s33
    %s37 = sphi 0, %s36
    %s53 = sphi 0, %s37
    %s59 = sphi 0, %s61
    %s62 = sphi 0, %s59
    %s63 = sphi 0, %s62
    %s79 = sphi 0, %s63
    %s83 = sphi 0, %s83
    %s85 = sphi 0, %s83
    %s86 = sphi 0, %s85
    %s100 = sphi 0, %s86
    %s106 = sphi 0, %s108
    %s109 = sphi 0, %s106
    %s110 = sphi 0, %s109
    %s126 = sphi 0, %s110
  $region4: #{nature_cnn_forward.7} parent=0 // loop_header_branch
    %12 = sbr.rel (%p10) target = $region8
  $region5: #{nature_cnn_forward.7} parent=0 // loop_body
    %s14 = ssub.s32 %s9, 1
    %s15 = ssub.s32 %s9, 2
    %s22 = sadd.s32 1, %s17
    %p23 = scmp.ge.s32.totalorder %s22, 5
    %s24 = scalar_select %p23, 0, %s22
    %s25 = sadd.s32 1, %s16
    %s26 = scalar_select %p23, %s25, %s16
    %p27 = scmp.ge.s32.totalorder %s26, 1
    %s28 = scalar_select %p27, 0, %s26
    %s29 = ssub.s32 %s16, %s28
    %s30 = ssub.s32 %s17, %s24
    %s31 = sor.u32 %s29, %s30
    %p32 = scmp.eq.s32.totalorder %s31, 0
    %s34 = sadd.s32 %s33, 1
    %s35 = scalar_select %p32, %s33, %s34
    %p38 = pneg %p32
    %p39 = scmp.eq.s32.totalorder %s9, 4
    %p40 = por %p38, %p39
    %p41 = scmp.ne.s32.totalorder %s33, %s36
    %p42 = scmp.eq.s32.totalorder %s9, 0
    %p43 = por %p41, %p42
    %p44 = scmp.ne.s32.totalorder %s33, %s36
    %p45 = scmp.eq.s32.totalorder %s14, 4
    %p46 = por %p44, %p45
    %p47 = scmp.ne.s32.totalorder %s36, %s37
    %p48 = scmp.eq.s32.totalorder %s14, 0
    %p49 = por %p47, %p48
    %p50 = scmp.ne.s32.totalorder %s36, %s37
    %p51 = scmp.eq.s32.totalorder %s15, 4
    %p52 = por %p50, %p51
    %p54 = scmp.ne.s32.totalorder %s37, %s53
    %p55 = scmp.eq.s32.totalorder %s15, 0
    %p56 = por %p54, %p55
    %s57 = ssub.s32 %s17, %s24
    %p58 = scmp.eq.s32.totalorder %s57, 0
    %s60 = sadd.s32 %s59, 1
    %s61 = scalar_select %p58, %s59, %s60
    %p64 = pneg %p58
    %p65 = scmp.eq.s32.totalorder %s9, 4
    %p66 = por %p64, %p65
    %p67 = scmp.ne.s32.totalorder %s59, %s62
    %p68 = scmp.eq.s32.totalorder %s9, 0
    %p69 = por %p67, %p68
    %p70 = scmp.ne.s32.totalorder %s59, %s62
    %p71 = scmp.eq.s32.totalorder %s14, 4
    %p72 = por %p70, %p71
    %p73 = scmp.ne.s32.totalorder %s62, %s63
    %p74 = scmp.eq.s32.totalorder %s14, 0
    %p75 = por %p73, %p74
    %p76 = scmp.ne.s32.totalorder %s62, %s63
    %p77 = scmp.eq.s32.totalorder %s15, 4
    %p78 = por %p76, %p77
    %p80 = scmp.ne.s32.totalorder %s63, %s79
    %p81 = scmp.eq.s32.totalorder %s15, 0
    %p82 = por %p80, %p81
    %s84 = sadd.s32 %s83, 1
    %p87 = scmp.eq.s32.totalorder %s9, 4
    %p88 = scmp.ne.s32.totalorder %s83, %s85
    %p89 = scmp.eq.s32.totalorder %s9, 0
    %p90 = por %p88, %p89
    %p91 = scmp.ne.s32.totalorder %s83, %s85
    %p92 = scmp.eq.s32.totalorder %s14, 4
    %p93 = por %p91, %p92
    %p94 = scmp.ne.s32.totalorder %s85, %s86
    %p95 = scmp.eq.s32.totalorder %s14, 0
    %p96 = por %p94, %p95
    %p97 = scmp.ne.s32.totalorder %s85, %s86
    %p98 = scmp.eq.s32.totalorder %s15, 4
    %p99 = por %p97, %p98
    %p101 = scmp.ne.s32.totalorder %s86, %s100
    %p102 = scmp.eq.s32.totalorder %s15, 0
    %p103 = por %p101, %p102
    %s104 = ssub.s32 %s16, %s28
    %p105 = scmp.eq.s32.totalorder %s104, 0
    %s107 = sadd.s32 %s106, 1
    %s108 = scalar_select %p105, %s106, %s107
    %p111 = pneg %p105
    %p112 = scmp.eq.s32.totalorder %s9, 4
    %p113 = por %p111, %p112
    %p114 = scmp.ne.s32.totalorder %s106, %s109
    %p115 = scmp.eq.s32.totalorder %s9, 0
    %p116 = por %p114, %p115
    %p117 = scmp.ne.s32.totalorder %s106, %s109
    %p118 = scmp.eq.s32.totalorder %s14, 4
    %p119 = por %p117, %p118
    %p120 = scmp.ne.s32.totalorder %s109, %s110
    %p121 = scmp.eq.s32.totalorder %s14, 0
    %p122 = por %p120, %p121
    %p123 = scmp.ne.s32.totalorder %s109, %s110
    %p124 = scmp.eq.s32.totalorder %s15, 4
    %p125 = por %p123, %p124
    %p127 = scmp.ne.s32.totalorder %s110, %s126
    %p128 = scmp.eq.s32.totalorder %s15, 0
    %p129 = por %p127, %p128
    %p130 = scmp.le.s32.totalorder 1, %s9
    %p131 = scmp.lt.s32.totalorder %s9, 6
    %p132 = pnand %p130, %p131
    %p133 = pneg %p132
    // Predicated region
    $region9: #{nature_cnn_forward.7} parent=5 // pred_check
      _
    $region10: #{nature_cnn_forward.7} parent=5 // pred_check_branch
      %135 = sbr.rel (%p132) target = $region12
    $region11: #{nature_cnn_forward.7} parent=5 // pred_region
      %s136 = ssub.s32 %s9, 1
      // Predicated region
      $region13: #{nature_cnn_forward.7} parent=11 // pred_check
        %p137 = pneg %p96
      $region14: #{nature_cnn_forward.7} parent=11 // pred_check_branch
        %139 = sbr.rel (%p137) target = $region16
      $region15: #{nature_cnn_forward.7} parent=11 // pred_region
        _
      $region16: #{nature_cnn_forward.7} parent=11 // pred_fallthru
        _
    $region12: #{nature_cnn_forward.7} parent=5 // pred_fallthru
      _
    %p140 = scmp.lt.s32.totalorder %s9, 5
    // Predicated region
    $region17: #{nature_cnn_forward.7} parent=5 // pred_check
      %p141 = pneg %p140
    $region18: #{nature_cnn_forward.7} parent=5 // pred_check_branch
      %143 = sbr.rel (%p141) target = $region20
    $region19: #{nature_cnn_forward.7} parent=5 // pred_region
      // Predicated region
      $region21: #{nature_cnn_forward.7} parent=19 // pred_check
        %p144 = pneg %p43
      $region22: #{nature_cnn_forward.7} parent=19 // pred_check_branch
        %146 = sbr.rel (%p144) target = $region24
      $region23: #{nature_cnn_forward.7} parent=19 // pred_region
        %s147 = smul.u32 5, %s17
        %p148 = scmp.lt.s32.totalorder %s16, 0
        %s149 = scalar_select %p148, %s16, 0
        %p150 = scmp.lt.s32.totalorder %s147, 24
        %s151 = scalar_select %p150, %s147, 24
        %s152 = smul.addr %s149, 25
        %s153 = sadd.s32 %s151, %s152
        %s154 = smul.addr %s153, 4
        %s155 = scalar_lea.vmem %s0, %s154
        %s156 = smul.u32 5, %s17
      $region24: #{nature_cnn_forward.7} parent=19 // pred_fallthru
        _
      // Predicated region
      $region25: #{nature_cnn_forward.7} parent=19 // pred_check
        %p157 = pneg %p69
      $region26: #{nature_cnn_forward.7} parent=19 // pred_check_branch
        %159 = sbr.rel (%p157) target = $region28
      $region27: #{nature_cnn_forward.7} parent=19 // pred_region
        %s160 = smul.u32 80, %s17
        %p161 = scmp.lt.s32.totalorder %s160, 399
        %s162 = scalar_select %p161, %s160, 399
        %s163 = smul.addr %s162, 4
        %s164 = smul.addr %s163, 4
        %s165 = scalar_lea.vmem %s1, %s164
        %s166 = smul.u32 80, %s17
      $region28: #{nature_cnn_forward.7} parent=19 // pred_fallthru
        _
    $region20: #{nature_cnn_forward.7} parent=5 // pred_fallthru
      _
    %p167 = scmp.le.s32.totalorder 1, %s9
    %p168 = scmp.lt.s32.totalorder %s9, 6
    %p169 = pnand %p167, %p168
    %p170 = pneg %p169
    // Predicated region
    $region29: #{nature_cnn_forward.7} parent=5 // pred_check
      _
    $region30: #{nature_cnn_forward.7} parent=5 // pred_check_branch
      %172 = sbr.rel (%p169) target = $region32
    $region31: #{nature_cnn_forward.7} parent=5 // pred_region
      %s173 = ssub.s32 %s9, 1
      %s174 = smul.u32 5, %s19
      %p175 = scmp.lt.s32.totalorder %s18, 0
      %s176 = scalar_select %p175, %s18, 0
      %p177 = scmp.lt.s32.totalorder %s174, 24
      %s178 = scalar_select %p177, %s174, 24
      %s179 = smul.addr %s176, 25
      %s180 = sadd.s32 %s178, %s179
      %s181 = smul.addr %s180, 4
      %s182 = scalar_lea.vmem %s0, %s181
      %p183 = pneg %p49
      %p184 = pneg %p46
      %s185 = smul.u32 80, %s19
      %p186 = scmp.lt.s32.totalorder %s185, 399
      %s187 = scalar_select %p186, %s185, 399
      %s188 = smul.addr %s187, 4
      %s189 = smul.addr %s188, 4
      %s190 = scalar_lea.vmem %s1, %s189
      %p191 = pneg %p75
      %p192 = pneg %p72
      %p193 = pneg %p96
      %p194 = pneg %p93
      %p195 = pneg %p122
      %p196 = pneg %p119
      %p197 = scmp.lt.s32.totalorder %s18, 0
      %s198 = scalar_select %p197, %s18, 0
      %s199 = smul.addr %s198, 4
      %s200 = smul.addr %s199, 8
      %s201 = scalar_lea.vmem %s3, %s200
      %s202 = smul.u32 5, %s19
      %p203 = scmp.lt.s32.totalorder %s18, 0
      %s204 = scalar_select %p203, %s18, 0
      %p205 = scmp.lt.s32.totalorder %s202, 24
      %s206 = scalar_select %p205, %s202, 24
      %s207 = smul.addr %s204, 25
      %s208 = sadd.s32 %s206, %s207
      %s209 = smul.addr %s208, 4
      %s210 = scalar_lea.vmem %s0, %s209
      %s211 = smul.u32 5, %s19
      %s212 = smul.u32 80, %s19
      %p213 = scmp.lt.s32.totalorder %s212, 399
      %s214 = scalar_select %p213, %s212, 399
      %s215 = smul.addr %s214, 4
      %s216 = smul.addr %s215, 4
      %s217 = scalar_lea.vmem %s1, %s216
      %s218 = smul.u32 80, %s19
      %p219 = scmp.lt.s32.totalorder %s18, 0
      %s220 = scalar_select %p219, %s18, 0
      %s221 = smul.addr %s220, 4
      %s222 = smul.addr %s221, 8
      %s223 = scalar_lea.vmem %s3, %s222
      %p225 = scmp.eq.s32.totalorder %s19, 0
      // Predicated region
      $region33: #{nature_cnn_forward.7} parent=31 // pred_check
        %p226 = pneg %p225
      $region34: #{nature_cnn_forward.7} parent=31 // pred_check_branch
        %228 = sbr.rel (%p226) target = $region36
      $region35: #{nature_cnn_forward.7} parent=31 // pred_region
        %229 = vst [vmem:[#allocation2] sm:$0xff] 0.0
        %230 = vst [vmem:[#allocation2 + $0x8] sm:$0xff] 0.0
        %231 = vst [vmem:[#allocation2 + $0x10] sm:$0xff] 0.0
        %232 = vst [vmem:[#allocation2 + $0x18] sm:$0xff] 0.0
      $region36: #{nature_cnn_forward.7} parent=31 // pred_fallthru
        _
      %v233 = vld [vmem:[#allocation2] sm:$0xff]
      %v234 = vld [vmem:[#allocation2 + $0x8] sm:$0xff]
      %v235 = vld [vmem:[#allocation2 + $0x10] sm:$0xff]
      %v236 = vld [vmem:[#allocation2 + $0x18] sm:$0xff]
      %v237 = vld [vmem:[%s210] sm:$0xff]
      %v238 = vld [vmem:[%s210 + $0x8] sm:$0xff]
      %v239 = vld [vmem:[%s210 + $0x10] sm:$0xf]
      %v240 = vld [vmem:[%s217] sm:$0xff]
      %v241 = vld [vmem:[%s217 + $0x8] sm:$0xff]
      %v242 = vld [vmem:[%s217 + $0x10] sm:$0xff]
      %v243 = vld [vmem:[%s217 + $0x18] sm:$0xff]
      %v244 = vld [vmem:[%s217 + $0x20] sm:$0xff]
      %v245 = vld [vmem:[%s217 + $0x28] sm:$0xff]
      %v246 = vld [vmem:[%s217 + $0x30] sm:$0xff]
      %v247 = vld [vmem:[%s217 + $0x38] sm:$0xff]
      %v248 = vld [vmem:[%s217 + $0x40] sm:$0xff]
      %v249 = vld [vmem:[%s217 + $0x48] sm:$0xff]
      %v250 = vld [vmem:[%s217 + $0x50] sm:$0xff]
      %v251 = vld [vmem:[%s217 + $0x58] sm:$0xff]
      %v252 = vld [vmem:[%s217 + $0x60] sm:$0xff]
      %v253 = vld [vmem:[%s217 + $0x68] sm:$0xff]
      %v254 = vld [vmem:[%s217 + $0x70] sm:$0xff]
      %v255 = vld [vmem:[%s217 + $0x78] sm:$0xff]
      %v256 = vld [vmem:[%s217 + $0x80] sm:$0xff]
      %v257 = vld [vmem:[%s217 + $0x88] sm:$0xff]
      %v258 = vld [vmem:[%s217 + $0x90] sm:$0xff]
      %v259 = vld [vmem:[%s217 + $0x98] sm:$0xff]
      %v260 = vld [vmem:[%s217 + $0xa0] sm:$0xff]
      %v261 = vld [vmem:[%s217 + $0xa8] sm:$0xff]
      %v262 = vld [vmem:[%s217 + $0xb0] sm:$0xff]
      %v263 = vld [vmem:[%s217 + $0xb8] sm:$0xff]
      %v264 = vld [vmem:[%s217 + $0xc0] sm:$0xff]
      %v265 = vld [vmem:[%s217 + $0xc8] sm:$0xff]
      %v266 = vld [vmem:[%s217 + $0xd0] sm:$0xff]
      %v267 = vld [vmem:[%s217 + $0xd8] sm:$0xff]
      %v268 = vld [vmem:[%s217 + $0xe0] sm:$0xff]
      %v269 = vld [vmem:[%s217 + $0xe8] sm:$0xff]
      %v270 = vld [vmem:[%s217 + $0xf0] sm:$0xff]
      %v271 = vld [vmem:[%s217 + $0xf8] sm:$0xff]
      %v272 = vld [vmem:[%s217 + $0x100] sm:$0xff]
      %v273 = vld [vmem:[%s217 + $0x108] sm:$0xff]
      %v274 = vld [vmem:[%s217 + $0x110] sm:$0xff]
      %v275 = vld [vmem:[%s217 + $0x118] sm:$0xff]
      %v276 = vld [vmem:[%s217 + $0x120] sm:$0xff]
      %v277 = vld [vmem:[%s217 + $0x128] sm:$0xff]
      %v278 = vld [vmem:[%s217 + $0x130] sm:$0xff]
      %v279 = vld [vmem:[%s217 + $0x138] sm:$0xff]
      %v280 = vld [vmem:[%s217 + $0x140] sm:$0xff]
      %v281 = vld [vmem:[%s217 + $0x148] sm:$0xff]
      %v282 = vld [vmem:[%s217 + $0x150] sm:$0xff]
      %v283 = vld [vmem:[%s217 + $0x158] sm:$0xff]
      %v284 = vld [vmem:[%s217 + $0x160] sm:$0xff]
      %v285 = vld [vmem:[%s217 + $0x168] sm:$0xff]
      %v286 = vld [vmem:[%s217 + $0x170] sm:$0xff]
      %v287 = vld [vmem:[%s217 + $0x178] sm:$0xff]
      %v288 = vld [vmem:[%s217 + $0x180] sm:$0xff]
      %v289 = vld [vmem:[%s217 + $0x188] sm:$0xff]
      %v290 = vld [vmem:[%s217 + $0x190] sm:$0xff]
      %v291 = vld [vmem:[%s217 + $0x198] sm:$0xff]
      %v292 = vld [vmem:[%s217 + $0x1a0] sm:$0xff]
      %v293 = vld [vmem:[%s217 + $0x1a8] sm:$0xff]
      %v294 = vld [vmem:[%s217 + $0x1b0] sm:$0xff]
      %v295 = vld [vmem:[%s217 + $0x1b8] sm:$0xff]
      %v296 = vld [vmem:[%s217 + $0x1c0] sm:$0xff]
      %v297 = vld [vmem:[%s217 + $0x1c8] sm:$0xff]
      %v298 = vld [vmem:[%s217 + $0x1d0] sm:$0xff]
      %v299 = vld [vmem:[%s217 + $0x1d8] sm:$0xff]
      %v300 = vld [vmem:[%s217 + $0x1e0] sm:$0xff]
      %v301 = vld [vmem:[%s217 + $0x1e8] sm:$0xff]
      %v302 = vld [vmem:[%s217 + $0x1f0] sm:$0xff]
      %v303 = vld [vmem:[%s217 + $0x1f8] sm:$0xff]
      %v304 = vld [vmem:[%s217 + $0x200] sm:$0xff]
      %v305 = vld [vmem:[%s217 + $0x208] sm:$0xff]
      %v306 = vld [vmem:[%s217 + $0x210] sm:$0xff]
      %v307 = vld [vmem:[%s217 + $0x218] sm:$0xff]
      %v308 = vld [vmem:[%s217 + $0x220] sm:$0xff]
      %v309 = vld [vmem:[%s217 + $0x228] sm:$0xff]
      %v310 = vld [vmem:[%s217 + $0x230] sm:$0xff]
      %v311 = vld [vmem:[%s217 + $0x238] sm:$0xff]
      %v312 = vld [vmem:[%s217 + $0x240] sm:$0xff]
      %v313 = vld [vmem:[%s217 + $0x248] sm:$0xff]
      %v314 = vld [vmem:[%s217 + $0x250] sm:$0xff]
      %v315 = vld [vmem:[%s217 + $0x258] sm:$0xff]
      %v316 = vld [vmem:[%s217 + $0x260] sm:$0xff]
      %v317 = vld [vmem:[%s217 + $0x268] sm:$0xff]
      %v318 = vld [vmem:[%s217 + $0x270] sm:$0xff]
      %v319 = vld [vmem:[%s217 + $0x278] sm:$0xff]
      %v320 = vld [vmem:[%s217 + $0x280] sm:$0xff]
      %v321 = vld [vmem:[%s217 + $0x288] sm:$0xff]
      %v322 = vld [vmem:[%s217 + $0x290] sm:$0xff]
      %v323 = vld [vmem:[%s217 + $0x298] sm:$0xff]
      %v324 = vld [vmem:[%s217 + $0x2a0] sm:$0xff]
      %v325 = vld [vmem:[%s217 + $0x2a8] sm:$0xff]
      %v326 = vld [vmem:[%s217 + $0x2b0] sm:$0xff]
      %v327 = vld [vmem:[%s217 + $0x2b8] sm:$0xff]
      %v328 = vld [vmem:[%s217 + $0x2c0] sm:$0xff]
      %v329 = vld [vmem:[%s217 + $0x2c8] sm:$0xff]
      %v330 = vld [vmem:[%s217 + $0x2d0] sm:$0xff]
      %v331 = vld [vmem:[%s217 + $0x2d8] sm:$0xff]
      %v332 = vld [vmem:[%s217 + $0x2e0] sm:$0xff]
      %v333 = vld [vmem:[%s217 + $0x2e8] sm:$0xff]
      %v334 = vld [vmem:[%s217 + $0x2f0] sm:$0xff]
      %v335 = vld [vmem:[%s217 + $0x2f8] sm:$0xff]
      %v336 = vld [vmem:[%s217 + $0x300] sm:$0xff]
      %v337 = vld [vmem:[%s217 + $0x308] sm:$0xff]
      %v338 = vld [vmem:[%s217 + $0x310] sm:$0xff]
      %v339 = vld [vmem:[%s217 + $0x318] sm:$0xff]
      %v340 = vld [vmem:[%s217 + $0x320] sm:$0xff]
      %v341 = vld [vmem:[%s217 + $0x328] sm:$0xff]
      %v342 = vld [vmem:[%s217 + $0x330] sm:$0xff]
      %v343 = vld [vmem:[%s217 + $0x338] sm:$0xff]
      %v344 = vld [vmem:[%s217 + $0x340] sm:$0xff]
      %v345 = vld [vmem:[%s217 + $0x348] sm:$0xff]
      %v346 = vld [vmem:[%s217 + $0x350] sm:$0xff]
      %v347 = vld [vmem:[%s217 + $0x358] sm:$0xff]
      %v348 = vld [vmem:[%s217 + $0x360] sm:$0xff]
      %v349 = vld [vmem:[%s217 + $0x368] sm:$0xff]
      %v350 = vld [vmem:[%s217 + $0x370] sm:$0xff]
      %v351 = vld [vmem:[%s217 + $0x378] sm:$0xff]
      %v352 = vld [vmem:[%s217 + $0x380] sm:$0xff]
      %v353 = vld [vmem:[%s217 + $0x388] sm:$0xff]
      %v354 = vld [vmem:[%s217 + $0x390] sm:$0xff]
      %v355 = vld [vmem:[%s217 + $0x398] sm:$0xff]
      %v356 = vld [vmem:[%s217 + $0x3a0] sm:$0xff]
      %v357 = vld [vmem:[%s217 + $0x3a8] sm:$0xff]
      %v358 = vld [vmem:[%s217 + $0x3b0] sm:$0xff]
      %v359 = vld [vmem:[%s217 + $0x3b8] sm:$0xff]
      %v360 = vld [vmem:[%s217 + $0x3c0] sm:$0xff]
      %v361 = vld [vmem:[%s217 + $0x3c8] sm:$0xff]
      %v362 = vld [vmem:[%s217 + $0x3d0] sm:$0xff]
      %v363 = vld [vmem:[%s217 + $0x3d8] sm:$0xff]
      %v364 = vld [vmem:[%s217 + $0x3e0] sm:$0xff]
      %v365 = vld [vmem:[%s217 + $0x3e8] sm:$0xff]
      %v366 = vld [vmem:[%s217 + $0x3f0] sm:$0xff]
      %v367 = vld [vmem:[%s217 + $0x3f8] sm:$0xff]
      %v368 = vld [vmem:[%s217 + $0x400] sm:$0xff]
      %v369 = vld [vmem:[%s217 + $0x408] sm:$0xff]
      %v370 = vld [vmem:[%s217 + $0x410] sm:$0xff]
      %v371 = vld [vmem:[%s217 + $0x418] sm:$0xff]
      %v372 = vld [vmem:[%s217 + $0x420] sm:$0xff]
      %v373 = vld [vmem:[%s217 + $0x428] sm:$0xff]
      %v374 = vld [vmem:[%s217 + $0x430] sm:$0xff]
      %v375 = vld [vmem:[%s217 + $0x438] sm:$0xff]
      %v376 = vld [vmem:[%s217 + $0x440] sm:$0xff]
      %v377 = vld [vmem:[%s217 + $0x448] sm:$0xff]
      %v378 = vld [vmem:[%s217 + $0x450] sm:$0xff]
      %v379 = vld [vmem:[%s217 + $0x458] sm:$0xff]
      %v380 = vld [vmem:[%s217 + $0x460] sm:$0xff]
      %v381 = vld [vmem:[%s217 + $0x468] sm:$0xff]
      %v382 = vld [vmem:[%s217 + $0x470] sm:$0xff]
      %v383 = vld [vmem:[%s217 + $0x478] sm:$0xff]
      %v384 = vld [vmem:[%s217 + $0x480] sm:$0xff]
      %v385 = vld [vmem:[%s217 + $0x488] sm:$0xff]
      %v386 = vld [vmem:[%s217 + $0x490] sm:$0xff]
      %v387 = vld [vmem:[%s217 + $0x498] sm:$0xff]
      %v388 = vld [vmem:[%s217 + $0x4a0] sm:$0xff]
      %v389 = vld [vmem:[%s217 + $0x4a8] sm:$0xff]
      %v390 = vld [vmem:[%s217 + $0x4b0] sm:$0xff]
      %v391 = vld [vmem:[%s217 + $0x4b8] sm:$0xff]
      %v392 = vld [vmem:[%s217 + $0x4c0] sm:$0xff]
      %v393 = vld [vmem:[%s217 + $0x4c8] sm:$0xff]
      %v394 = vld [vmem:[%s217 + $0x4d0] sm:$0xff]
      %v395 = vld [vmem:[%s217 + $0x4d8] sm:$0xff]
      %v396 = vld [vmem:[%s217 + $0x4e0] sm:$0xff]
      %v397 = vld [vmem:[%s217 + $0x4e8] sm:$0xff]
      %v398 = vld [vmem:[%s217 + $0x4f0] sm:$0xff]
      %v399 = vld [vmem:[%s217 + $0x4f8] sm:$0xff]
      %v403 = vunpack.c.l.b16 %v237
      %v404 = vunpack.c.h.b16 %v237
      %v405 = vunpack.c.l.b16 %v238
      %v406 = vunpack.c.h.b16 %v238
      %v407 = vunpack.c.l.b16 %v239
      %v408 = vpack.c.b16 %v403, %v403
      %v409 = vpack.c.b16 %v404, %v404
      %v410 = vpack.c.b16 %v405, %v405
      %v411 = vpack.c.b16 %v406, %v406
      %v412 = vpack.c.b16 %v407, %v407
      %v578 = vunpack.c.l.b16 %v240
      %v579 = vunpack.c.h.b16 %v240
      %v580 = vunpack.c.l.b16 %v241
      %v581 = vunpack.c.h.b16 %v241
      %v582 = vunpack.c.l.b16 %v242
      %v583 = vunpack.c.h.b16 %v242
      %v584 = vunpack.c.l.b16 %v243
      %v585 = vunpack.c.h.b16 %v243
      %v586 = vunpack.c.l.b16 %v244
      %v587 = vunpack.c.h.b16 %v244
      %v588 = vunpack.c.l.b16 %v245
      %v589 = vunpack.c.h.b16 %v245
      %v590 = vunpack.c.l.b16 %v246
      %v591 = vunpack.c.h.b16 %v246
      %v592 = vunpack.c.l.b16 %v247
      %v593 = vunpack.c.h.b16 %v247
      %v594 = vunpack.c.l.b16 %v248
      %v595 = vunpack.c.h.b16 %v248
      %v596 = vunpack.c.l.b16 %v249
      %v597 = vunpack.c.h.b16 %v249
      %v598 = vunpack.c.l.b16 %v250
      %v599 = vunpack.c.h.b16 %v250
      %v600 = vunpack.c.l.b16 %v251
      %v601 = vunpack.c.h.b16 %v251
      %v602 = vunpack.c.l.b16 %v252
      %v603 = vunpack.c.h.b16 %v252
      %v604 = vunpack.c.l.b16 %v253
      %v605 = vunpack.c.h.b16 %v253
      %v606 = vunpack.c.l.b16 %v254
      %v607 = vunpack.c.h.b16 %v254
      %v608 = vunpack.c.l.b16 %v255
      %v609 = vunpack.c.h.b16 %v255
      %v610 = vunpack.c.l.b16 %v256
      %v611 = vunpack.c.h.b16 %v256
      %v612 = vunpack.c.l.b16 %v257
      %v613 = vunpack.c.h.b16 %v257
      %v614 = vunpack.c.l.b16 %v258
      %v615 = vunpack.c.h.b16 %v258
      %v616 = vunpack.c.l.b16 %v259
      %v617 = vunpack.c.h.b16 %v259
      %v618 = vunpack.c.l.b16 %v260
      %v619 = vunpack.c.h.b16 %v260
      %v620 = vunpack.c.l.b16 %v261
      %v621 = vunpack.c.h.b16 %v261
      %v622 = vunpack.c.l.b16 %v262
      %v623 = vunpack.c.h.b16 %v262
      %v624 = vunpack.c.l.b16 %v263
      %v625 = vunpack.c.h.b16 %v263
      %v626 = vunpack.c.l.b16 %v264
      %v627 = vunpack.c.h.b16 %v264
      %v628 = vunpack.c.l.b16 %v265
      %v629 = vunpack.c.h.b16 %v265
      %v630 = vunpack.c.l.b16 %v266
      %v631 = vunpack.c.h.b16 %v266
      %v632 = vunpack.c.l.b16 %v267
      %v633 = vunpack.c.h.b16 %v267
      %v634 = vunpack.c.l.b16 %v268
      %v635 = vunpack.c.h.b16 %v268
      %v636 = vunpack.c.l.b16 %v269
      %v637 = vunpack.c.h.b16 %v269
      %v638 = vunpack.c.l.b16 %v270
      %v639 = vunpack.c.h.b16 %v270
      %v640 = vunpack.c.l.b16 %v271
      %v641 = vunpack.c.h.b16 %v271
      %v642 = vunpack.c.l.b16 %v272
      %v643 = vunpack.c.h.b16 %v272
      %v644 = vunpack.c.l.b16 %v273
      %v645 = vunpack.c.h.b16 %v273
      %v646 = vunpack.c.l.b16 %v274
      %v647 = vunpack.c.h.b16 %v274
      %v648 = vunpack.c.l.b16 %v275
      %v649 = vunpack.c.h.b16 %v275
      %v650 = vunpack.c.l.b16 %v276
      %v651 = vunpack.c.h.b16 %v276
      %v652 = vunpack.c.l.b16 %v277
      %v653 = vunpack.c.h.b16 %v277
      %v654 = vunpack.c.l.b16 %v278
      %v655 = vunpack.c.h.b16 %v278
      %v656 = vunpack.c.l.b16 %v279
      %v657 = vunpack.c.h.b16 %v279
      %v658 = vunpack.c.l.b16 %v280
      %v659 = vunpack.c.h.b16 %v280
      %v660 = vunpack.c.l.b16 %v281
      %v661 = vunpack.c.h.b16 %v281
      %v662 = vunpack.c.l.b16 %v282
      %v663 = vunpack.c.h.b16 %v282
      %v664 = vunpack.c.l.b16 %v283
      %v665 = vunpack.c.h.b16 %v283
      %v666 = vunpack.c.l.b16 %v284
      %v667 = vunpack.c.h.b16 %v284
      %v668 = vunpack.c.l.b16 %v285
      %v669 = vunpack.c.h.b16 %v285
      %v670 = vunpack.c.l.b16 %v286
      %v671 = vunpack.c.h.b16 %v286
      %v672 = vunpack.c.l.b16 %v287
      %v673 = vunpack.c.h.b16 %v287
      %v674 = vunpack.c.l.b16 %v288
      %v675 = vunpack.c.h.b16 %v288
      %v676 = vunpack.c.l.b16 %v289
      %v677 = vunpack.c.h.b16 %v289
      %v678 = vunpack.c.l.b16 %v290
      %v679 = vunpack.c.h.b16 %v290
      %v680 = vunpack.c.l.b16 %v291
      %v681 = vunpack.c.h.b16 %v291
      %v682 = vunpack.c.l.b16 %v292
      %v683 = vunpack.c.h.b16 %v292
      %v684 = vunpack.c.l.b16 %v293
      %v685 = vunpack.c.h.b16 %v293
      %v686 = vunpack.c.l.b16 %v294
      %v687 = vunpack.c.h.b16 %v294
      %v688 = vunpack.c.l.b16 %v295
      %v689 = vunpack.c.h.b16 %v295
      %v690 = vunpack.c.l.b16 %v296
      %v691 = vunpack.c.h.b16 %v296
      %v692 = vunpack.c.l.b16 %v297
      %v693 = vunpack.c.h.b16 %v297
      %v694 = vunpack.c.l.b16 %v298
      %v695 = vunpack.c.h.b16 %v298
      %v696 = vunpack.c.l.b16 %v299
      %v697 = vunpack.c.h.b16 %v299
      %v698 = vunpack.c.l.b16 %v300
      %v699 = vunpack.c.h.b16 %v300
      %v700 = vunpack.c.l.b16 %v301
      %v701 = vunpack.c.h.b16 %v301
      %v702 = vunpack.c.l.b16 %v302
      %v703 = vunpack.c.h.b16 %v302
      %v704 = vunpack.c.l.b16 %v303
      %v705 = vunpack.c.h.b16 %v303
      %v706 = vunpack.c.l.b16 %v304
      %v707 = vunpack.c.h.b16 %v304
      %v708 = vunpack.c.l.b16 %v305
      %v709 = vunpack.c.h.b16 %v305
      %v710 = vunpack.c.l.b16 %v306
      %v711 = vunpack.c.h.b16 %v306
      %v712 = vunpack.c.l.b16 %v307
      %v713 = vunpack.c.h.b16 %v307
      %v714 = vunpack.c.l.b16 %v308
      %v715 = vunpack.c.h.b16 %v308
      %v716 = vunpack.c.l.b16 %v309
      %v717 = vunpack.c.h.b16 %v309
      %v718 = vunpack.c.l.b16 %v310
      %v719 = vunpack.c.h.b16 %v310
      %v720 = vunpack.c.l.b16 %v311
      %v721 = vunpack.c.h.b16 %v311
      %v722 = vunpack.c.l.b16 %v312
      %v723 = vunpack.c.h.b16 %v312
      %v724 = vunpack.c.l.b16 %v313
      %v725 = vunpack.c.h.b16 %v313
      %v726 = vunpack.c.l.b16 %v314
      %v727 = vunpack.c.h.b16 %v314
      %v728 = vunpack.c.l.b16 %v315
      %v729 = vunpack.c.h.b16 %v315
      %v730 = vunpack.c.l.b16 %v316
      %v731 = vunpack.c.h.b16 %v316
      %v732 = vunpack.c.l.b16 %v317
      %v733 = vunpack.c.h.b16 %v317
      %v734 = vunpack.c.l.b16 %v318
      %v735 = vunpack.c.h.b16 %v318
      %v736 = vunpack.c.l.b16 %v319
      %v737 = vunpack.c.h.b16 %v319
      %v738 = vunpack.c.l.b16 %v320
      %v739 = vunpack.c.h.b16 %v320
      %v740 = vunpack.c.l.b16 %v321
      %v741 = vunpack.c.h.b16 %v321
      %v742 = vunpack.c.l.b16 %v322
      %v743 = vunpack.c.h.b16 %v322
      %v744 = vunpack.c.l.b16 %v323
      %v745 = vunpack.c.h.b16 %v323
      %v746 = vunpack.c.l.b16 %v324
      %v747 = vunpack.c.h.b16 %v324
      %v748 = vunpack.c.l.b16 %v325
      %v749 = vunpack.c.h.b16 %v325
      %v750 = vunpack.c.l.b16 %v326
      %v751 = vunpack.c.h.b16 %v326
      %v752 = vunpack.c.l.b16 %v327
      %v753 = vunpack.c.h.b16 %v327
      %v754 = vunpack.c.l.b16 %v328
      %v755 = vunpack.c.h.b16 %v328
      %v756 = vunpack.c.l.b16 %v329
      %v757 = vunpack.c.h.b16 %v329
      %v758 = vunpack.c.l.b16 %v330
      %v759 = vunpack.c.h.b16 %v330
      %v760 = vunpack.c.l.b16 %v331
      %v761 = vunpack.c.h.b16 %v331
      %v762 = vunpack.c.l.b16 %v332
      %v763 = vunpack.c.h.b16 %v332
      %v764 = vunpack.c.l.b16 %v333
      %v765 = vunpack.c.h.b16 %v333
      %v766 = vunpack.c.l.b16 %v334
      %v767 = vunpack.c.h.b16 %v334
      %v768 = vunpack.c.l.b16 %v335
      %v769 = vunpack.c.h.b16 %v335
      %v770 = vunpack.c.l.b16 %v336
      %v771 = vunpack.c.h.b16 %v336
      %v772 = vunpack.c.l.b16 %v337
      %v773 = vunpack.c.h.b16 %v337
      %v774 = vunpack.c.l.b16 %v338
      %v775 = vunpack.c.h.b16 %v338
      %v776 = vunpack.c.l.b16 %v339
      %v777 = vunpack.c.h.b16 %v339
      %v778 = vunpack.c.l.b16 %v340
      %v779 = vunpack.c.h.b16 %v340
      %v780 = vunpack.c.l.b16 %v341
      %v781 = vunpack.c.h.b16 %v341
      %v782 = vunpack.c.l.b16 %v342
      %v783 = vunpack.c.h.b16 %v342
      %v784 = vunpack.c.l.b16 %v343
      %v785 = vunpack.c.h.b16 %v343
      %v786 = vunpack.c.l.b16 %v344
      %v787 = vunpack.c.h.b16 %v344
      %v788 = vunpack.c.l.b16 %v345
      %v789 = vunpack.c.h.b16 %v345
      %v790 = vunpack.c.l.b16 %v346
      %v791 = vunpack.c.h.b16 %v346
      %v792 = vunpack.c.l.b16 %v347
      %v793 = vunpack.c.h.b16 %v347
      %v794 = vunpack.c.l.b16 %v348
      %v795 = vunpack.c.h.b16 %v348
      %v796 = vunpack.c.l.b16 %v349
      %v797 = vunpack.c.h.b16 %v349
      %v798 = vunpack.c.l.b16 %v350
      %v799 = vunpack.c.h.b16 %v350
      %v800 = vunpack.c.l.b16 %v351
      %v801 = vunpack.c.h.b16 %v351
      %v802 = vunpack.c.l.b16 %v352
      %v803 = vunpack.c.h.b16 %v352
      %v804 = vunpack.c.l.b16 %v353
      %v805 = vunpack.c.h.b16 %v353
      %v806 = vunpack.c.l.b16 %v354
      %v807 = vunpack.c.h.b16 %v354
      %v808 = vunpack.c.l.b16 %v355
      %v809 = vunpack.c.h.b16 %v355
      %v810 = vunpack.c.l.b16 %v356
      %v811 = vunpack.c.h.b16 %v356
      %v812 = vunpack.c.l.b16 %v357
      %v813 = vunpack.c.h.b16 %v357
      %v814 = vunpack.c.l.b16 %v358
      %v815 = vunpack.c.h.b16 %v358
      %v816 = vunpack.c.l.b16 %v359
      %v817 = vunpack.c.h.b16 %v359
      %v818 = vunpack.c.l.b16 %v360
      %v819 = vunpack.c.h.b16 %v360
      %v820 = vunpack.c.l.b16 %v361
      %v821 = vunpack.c.h.b16 %v361
      %v822 = vunpack.c.l.b16 %v362
      %v823 = vunpack.c.h.b16 %v362
      %v824 = vunpack.c.l.b16 %v363
      %v825 = vunpack.c.h.b16 %v363
      %v826 = vunpack.c.l.b16 %v364
      %v827 = vunpack.c.h.b16 %v364
      %v828 = vunpack.c.l.b16 %v365
      %v829 = vunpack.c.h.b16 %v365
      %v830 = vunpack.c.l.b16 %v366
      %v831 = vunpack.c.h.b16 %v366
      %v832 = vunpack.c.l.b16 %v367
      %v833 = vunpack.c.h.b16 %v367
      %v834 = vunpack.c.l.b16 %v368
      %v835 = vunpack.c.h.b16 %v368
      %v836 = vunpack.c.l.b16 %v369
      %v837 = vunpack.c.h.b16 %v369
      %v838 = vunpack.c.l.b16 %v370
      %v839 = vunpack.c.h.b16 %v370
      %v840 = vunpack.c.l.b16 %v371
      %v841 = vunpack.c.h.b16 %v371
      %v842 = vunpack.c.l.b16 %v372
      %v843 = vunpack.c.h.b16 %v372
      %v844 = vunpack.c.l.b16 %v373
      %v845 = vunpack.c.h.b16 %v373
      %v846 = vunpack.c.l.b16 %v374
      %v847 = vunpack.c.h.b16 %v374
      %v848 = vunpack.c.l.b16 %v375
      %v849 = vunpack.c.h.b16 %v375
      %v850 = vunpack.c.l.b16 %v376
      %v851 = vunpack.c.h.b16 %v376
      %v852 = vunpack.c.l.b16 %v377
      %v853 = vunpack.c.h.b16 %v377
      %v854 = vunpack.c.l.b16 %v378
      %v855 = vunpack.c.h.b16 %v378
      %v856 = vunpack.c.l.b16 %v379
      %v857 = vunpack.c.h.b16 %v379
      %v858 = vunpack.c.l.b16 %v380
      %v859 = vunpack.c.h.b16 %v380
      %v860 = vunpack.c.l.b16 %v381
      %v861 = vunpack.c.h.b16 %v381
      %v862 = vunpack.c.l.b16 %v382
      %v863 = vunpack.c.h.b16 %v382
      %v864 = vunpack.c.l.b16 %v383
      %v865 = vunpack.c.h.b16 %v383
      %v866 = vunpack.c.l.b16 %v384
      %v867 = vunpack.c.h.b16 %v384
      %v868 = vunpack.c.l.b16 %v385
      %v869 = vunpack.c.h.b16 %v385
      %v870 = vunpack.c.l.b16 %v386
      %v871 = vunpack.c.h.b16 %v386
      %v872 = vunpack.c.l.b16 %v387
      %v873 = vunpack.c.h.b16 %v387
      %v874 = vunpack.c.l.b16 %v388
      %v875 = vunpack.c.h.b16 %v388
      %v876 = vunpack.c.l.b16 %v389
      %v877 = vunpack.c.h.b16 %v389
      %v878 = vunpack.c.l.b16 %v390
      %v879 = vunpack.c.h.b16 %v390
      %v880 = vunpack.c.l.b16 %v391
      %v881 = vunpack.c.h.b16 %v391
      %v882 = vunpack.c.l.b16 %v392
      %v883 = vunpack.c.h.b16 %v392
      %v884 = vunpack.c.l.b16 %v393
      %v885 = vunpack.c.h.b16 %v393
      %v886 = vunpack.c.l.b16 %v394
      %v887 = vunpack.c.h.b16 %v394
      %v888 = vunpack.c.l.b16 %v395
      %v889 = vunpack.c.h.b16 %v395
      %v890 = vunpack.c.l.b16 %v396
      %v891 = vunpack.c.h.b16 %v396
      %v892 = vunpack.c.l.b16 %v397
      %v893 = vunpack.c.h.b16 %v397
      %v894 = vunpack.c.l.b16 %v398
      %v895 = vunpack.c.h.b16 %v398
      %v896 = vunpack.c.l.b16 %v399
      %v897 = vunpack.c.h.b16 %v399
      %v898 = vpack.c.b16 %v582, %v578
      %v899 = vpack.c.b16 %v583, %v579
      %v900 = vpack.c.b16 %v584, %v580
      %v901 = vpack.c.b16 %v585, %v581
      %v902 = vpack.c.b16 %v590, %v586
      %v903 = vpack.c.b16 %v591, %v587
      %v904 = vpack.c.b16 %v592, %v588
      %v905 = vpack.c.b16 %v593, %v589
      %v906 = vpack.c.b16 %v598, %v594
      %v907 = vpack.c.b16 %v599, %v595
      %v908 = vpack.c.b16 %v600, %v596
      %v909 = vpack.c.b16 %v601, %v597
      %v910 = vpack.c.b16 %v606, %v602
      %v911 = vpack.c.b16 %v607, %v603
      %v912 = vpack.c.b16 %v608, %v604
      %v913 = vpack.c.b16 %v609, %v605
      %v914 = vpack.c.b16 %v614, %v610
      %v915 = vpack.c.b16 %v615, %v611
      %v916 = vpack.c.b16 %v616, %v612
      %v917 = vpack.c.b16 %v617, %v613
      %v918 = vpack.c.b16 %v622, %v618
      %v919 = vpack.c.b16 %v623, %v619
      %v920 = vpack.c.b16 %v624, %v620
      %v921 = vpack.c.b16 %v625, %v621
      %v922 = vpack.c.b16 %v630, %v626
      %v923 = vpack.c.b16 %v631, %v627
      %v924 = vpack.c.b16 %v632, %v628
      %v925 = vpack.c.b16 %v633, %v629
      %v926 = vpack.c.b16 %v638, %v634
      %v927 = vpack.c.b16 %v639, %v635
      %v928 = vpack.c.b16 %v640, %v636
      %v929 = vpack.c.b16 %v641, %v637
      %v930 = vpack.c.b16 %v646, %v642
      %v931 = vpack.c.b16 %v647, %v643
      %v932 = vpack.c.b16 %v648, %v644
      %v933 = vpack.c.b16 %v649, %v645
      %v934 = vpack.c.b16 %v654, %v650
      %v935 = vpack.c.b16 %v655, %v651
      %v936 = vpack.c.b16 %v656, %v652
      %v937 = vpack.c.b16 %v657, %v653
      %v938 = vpack.c.b16 %v662, %v658
      %v939 = vpack.c.b16 %v663, %v659
      %v940 = vpack.c.b16 %v664, %v660
      %v941 = vpack.c.b16 %v665, %v661
      %v942 = vpack.c.b16 %v670, %v666
      %v943 = vpack.c.b16 %v671, %v667
      %v944 = vpack.c.b16 %v672, %v668
      %v945 = vpack.c.b16 %v673, %v669
      %v946 = vpack.c.b16 %v678, %v674
      %v947 = vpack.c.b16 %v679, %v675
      %v948 = vpack.c.b16 %v680, %v676
      %v949 = vpack.c.b16 %v681, %v677
      %v950 = vpack.c.b16 %v686, %v682
      %v951 = vpack.c.b16 %v687, %v683
      %v952 = vpack.c.b16 %v688, %v684
      %v953 = vpack.c.b16 %v689, %v685
      %v954 = vpack.c.b16 %v694, %v690
      %v955 = vpack.c.b16 %v695, %v691
      %v956 = vpack.c.b16 %v696, %v692
      %v957 = vpack.c.b16 %v697, %v693
      %v958 = vpack.c.b16 %v702, %v698
      %v959 = vpack.c.b16 %v703, %v699
      %v960 = vpack.c.b16 %v704, %v700
      %v961 = vpack.c.b16 %v705, %v701
      %v962 = vpack.c.b16 %v710, %v706
      %v963 = vpack.c.b16 %v711, %v707
      %v964 = vpack.c.b16 %v712, %v708
      %v965 = vpack.c.b16 %v713, %v709
      %v966 = vpack.c.b16 %v718, %v714
      %v967 = vpack.c.b16 %v719, %v715
      %v968 = vpack.c.b16 %v720, %v716
      %v969 = vpack.c.b16 %v721, %v717
      %v970 = vpack.c.b16 %v726, %v722
      %v971 = vpack.c.b16 %v727, %v723
      %v972 = vpack.c.b16 %v728, %v724
      %v973 = vpack.c.b16 %v729, %v725
      %v974 = vpack.c.b16 %v734, %v730
      %v975 = vpack.c.b16 %v735, %v731
      %v976 = vpack.c.b16 %v736, %v732
      %v977 = vpack.c.b16 %v737, %v733
      %v978 = vpack.c.b16 %v742, %v738
      %v979 = vpack.c.b16 %v743, %v739
      %v980 = vpack.c.b16 %v744, %v740
      %v981 = vpack.c.b16 %v745, %v741
      %v982 = vpack.c.b16 %v750, %v746
      %v983 = vpack.c.b16 %v751, %v747
      %v984 = vpack.c.b16 %v752, %v748
      %v985 = vpack.c.b16 %v753, %v749
      %v986 = vpack.c.b16 %v758, %v754
      %v987 = vpack.c.b16 %v759, %v755
      %v988 = vpack.c.b16 %v760, %v756
      %v989 = vpack.c.b16 %v761, %v757
      %v990 = vpack.c.b16 %v766, %v762
      %v991 = vpack.c.b16 %v767, %v763
      %v992 = vpack.c.b16 %v768, %v764
      %v993 = vpack.c.b16 %v769, %v765
      %v994 = vpack.c.b16 %v774, %v770
      %v995 = vpack.c.b16 %v775, %v771
      %v996 = vpack.c.b16 %v776, %v772
      %v997 = vpack.c.b16 %v777, %v773
      %v998 = vpack.c.b16 %v782, %v778
      %v999 = vpack.c.b16 %v783, %v779
      %v1000 = vpack.c.b16 %v784, %v780
      %v1001 = vpack.c.b16 %v785, %v781
      %v1002 = vpack.c.b16 %v790, %v786
      %v1003 = vpack.c.b16 %v791, %v787
      %v1004 = vpack.c.b16 %v792, %v788
      %v1005 = vpack.c.b16 %v793, %v789
      %v1006 = vpack.c.b16 %v798, %v794
      %v1007 = vpack.c.b16 %v799, %v795
      %v1008 = vpack.c.b16 %v800, %v796
      %v1009 = vpack.c.b16 %v801, %v797
      %v1010 = vpack.c.b16 %v806, %v802
      %v1011 = vpack.c.b16 %v807, %v803
      %v1012 = vpack.c.b16 %v808, %v804
      %v1013 = vpack.c.b16 %v809, %v805
      %v1014 = vpack.c.b16 %v814, %v810
      %v1015 = vpack.c.b16 %v815, %v811
      %v1016 = vpack.c.b16 %v816, %v812
      %v1017 = vpack.c.b16 %v817, %v813
      %v1018 = vpack.c.b16 %v822, %v818
      %v1019 = vpack.c.b16 %v823, %v819
      %v1020 = vpack.c.b16 %v824, %v820
      %v1021 = vpack.c.b16 %v825, %v821
      %v1022 = vpack.c.b16 %v830, %v826
      %v1023 = vpack.c.b16 %v831, %v827
      %v1024 = vpack.c.b16 %v832, %v828
      %v1025 = vpack.c.b16 %v833, %v829
      %v1026 = vpack.c.b16 %v838, %v834
      %v1027 = vpack.c.b16 %v839, %v835
      %v1028 = vpack.c.b16 %v840, %v836
      %v1029 = vpack.c.b16 %v841, %v837
      %v1030 = vpack.c.b16 %v846, %v842
      %v1031 = vpack.c.b16 %v847, %v843
      %v1032 = vpack.c.b16 %v848, %v844
      %v1033 = vpack.c.b16 %v849, %v845
      %v1034 = vpack.c.b16 %v854, %v850
      %v1035 = vpack.c.b16 %v855, %v851
      %v1036 = vpack.c.b16 %v856, %v852
      %v1037 = vpack.c.b16 %v857, %v853
      %v1038 = vpack.c.b16 %v862, %v858
      %v1039 = vpack.c.b16 %v863, %v859
      %v1040 = vpack.c.b16 %v864, %v860
      %v1041 = vpack.c.b16 %v865, %v861
      %v1042 = vpack.c.b16 %v870, %v866
      %v1043 = vpack.c.b16 %v871, %v867
      %v1044 = vpack.c.b16 %v872, %v868
      %v1045 = vpack.c.b16 %v873, %v869
      %v1046 = vpack.c.b16 %v878, %v874
      %v1047 = vpack.c.b16 %v879, %v875
      %v1048 = vpack.c.b16 %v880, %v876
      %v1049 = vpack.c.b16 %v881, %v877
      %v1050 = vpack.c.b16 %v886, %v882
      %v1051 = vpack.c.b16 %v887, %v883
      %v1052 = vpack.c.b16 %v888, %v884
      %v1053 = vpack.c.b16 %v889, %v885
      %v1054 = vpack.c.b16 %v894, %v890
      %v1055 = vpack.c.b16 %v895, %v891
      %v1056 = vpack.c.b16 %v896, %v892
      %v1057 = vpack.c.b16 %v897, %v893
      %1218 = vmatprep.subr.bf16.mxu0 %v899
      %1219 = vmatpush1.bf16.msra.mxu0 %v898
      %1220 = vmatprep.subr.bf16.mxu0 %v903
      %1221 = vmatpush1.bf16.msra.mxu0 %v902
      %1222 = vmatprep.subr.bf16.mxu0 %v907
      %1223 = vmatpush1.bf16.msra.mxu0 %v906
      %1224 = vmatprep.subr.bf16.mxu0 %v911
      %1225 = vmatpush1.bf16.msra.mxu0 %v910
      %1226 = vmatprep.subr.bf16.mxu0 %v915
      %1227 = vmatpush1.bf16.msra.mxu0 %v914
      %1228 = vmatprep.subr.bf16.mxu0 %v919
      %1229 = vmatpush1.bf16.msra.mxu0 %v918
      %1230 = vmatprep.subr.bf16.mxu0 %v923
      %1231 = vmatpush1.bf16.msra.mxu0 %v922
      %1232 = vmatprep.subr.bf16.mxu0 %v927
      %1233 = vmatpush1.bf16.msra.mxu0 %v926
      %1234 = vmatprep.subr.bf16.mxu0 %v931
      %1235 = vmatpush1.bf16.msra.mxu0 %v930
      %1236 = vmatprep.subr.bf16.mxu0 %v935
      %1237 = vmatpush1.bf16.msra.mxu0 %v934
      %1238 = vmatprep.subr.bf16.mxu0 %v939
      %1239 = vmatpush1.bf16.msra.mxu0 %v938
      %1240 = vmatprep.subr.bf16.mxu0 %v943
      %1241 = vmatpush1.bf16.msra.mxu0 %v942
      %1242 = vmatprep.subr.bf16.mxu0 %v947
      %1243 = vmatpush1.bf16.msra.mxu0 %v946
      %1244 = vmatprep.subr.bf16.mxu0 %v951
      %1245 = vmatpush1.bf16.msra.mxu0 %v950
      %1246 = vmatprep.subr.bf16.mxu0 %v955
      %1247 = vmatpush1.bf16.msra.mxu0 %v954
      %1248 = vmatprep.subr.bf16.mxu0 %v959
      %1249 = vmatpush1.bf16.msra.mxu0 %v958
      %1250 = vmatprep.mubr.bf16.mxu0 %v409
      %1251 = vmatmul.mubr.bf16.gmra.mrb[0].mxu0 %v408
      %v1252 = vpop.f32.mrb[0].mxu0
      %v1253 = vadd.f32 0.0, %v1252
      %v1254 = vpop.f32.mrb[0].mxu0
      %v1255 = vadd.f32 0.0, %v1254
      %v1256 = vpop.f32.mrb[0].mxu0
      %v1257 = vpop.f32.mrb[0].mxu0
      %1258 = vdwg.mxu0
      %1259 = vmatprep.subr.bf16.mxu0 %v963
      %1260 = vmatpush1.bf16.msra.mxu0 %v962
      %1261 = vmatprep.subr.bf16.mxu0 %v967
      %1262 = vmatpush1.bf16.msra.mxu0 %v966
      %1263 = vmatprep.subr.bf16.mxu0 %v971
      %1264 = vmatpush1.bf16.msra.mxu0 %v970
      %1265 = vmatprep.subr.bf16.mxu0 %v975
      %1266 = vmatpush1.bf16.msra.mxu0 %v974
      %1267 = vmatprep.subr.bf16.mxu0 %v979
      %1268 = vmatpush1.bf16.msra.mxu0 %v978
      %1269 = vmatprep.subr.bf16.mxu0 %v983
      %1270 = vmatpush1.bf16.msra.mxu0 %v982
      %1271 = vmatprep.subr.bf16.mxu0 %v987
      %1272 = vmatpush1.bf16.msra.mxu0 %v986
      %1273 = vmatprep.subr.bf16.mxu0 %v991
      %1274 = vmatpush1.bf16.msra.mxu0 %v990
      %1275 = vmatprep.subr.bf16.mxu0 %v995
      %1276 = vmatpush1.bf16.msra.mxu0 %v994
      %1277 = vmatprep.subr.bf16.mxu0 %v999
      %1278 = vmatpush1.bf16.msra.mxu0 %v998
      %1279 = vmatprep.subr.bf16.mxu0 %v1003
      %1280 = vmatpush1.bf16.msra.mxu0 %v1002
      %1281 = vmatprep.subr.bf16.mxu0 %v1007
      %1282 = vmatpush1.bf16.msra.mxu0 %v1006
      %1283 = vmatprep.subr.bf16.mxu0 %v1011
      %1284 = vmatpush1.bf16.msra.mxu0 %v1010
      %1285 = vmatprep.subr.bf16.mxu0 %v1015
      %1286 = vmatpush1.bf16.msra.mxu0 %v1014
      %1287 = vmatprep.subr.bf16.mxu0 %v1019
      %1288 = vmatpush1.bf16.msra.mxu0 %v1018
      %1289 = vmatprep.subr.bf16.mxu0 %v1023
      %1290 = vmatpush1.bf16.msra.mxu0 %v1022
      %1291 = vmatprep.mubr.bf16.mxu0 %v411
      %1292 = vmatmul.mubr.bf16.gmra.mrb[0].mxu0 %v410
      %v1293 = vpop.f32.mrb[0].mxu0
      %v1294 = vadd.f32 %v1253, %v1293
      %v1295 = vpop.f32.mrb[0].mxu0
      %v1296 = vadd.f32 %v1255, %v1295
      %v1297 = vpop.f32.mrb[0].mxu0
      %v1298 = vpop.f32.mrb[0].mxu0
      %1299 = vdwg.mxu0
      %1300 = vmatprep.subr.bf16.mxu0 %v1027
      %1301 = vmatpush1.bf16.msra.mxu0 %v1026
      %1302 = vmatprep.subr.bf16.mxu0 %v1031
      %1303 = vmatpush1.bf16.msra.mxu0 %v1030
      %1304 = vmatprep.subr.bf16.mxu0 %v1035
      %1305 = vmatpush1.bf16.msra.mxu0 %v1034
      %1306 = vmatprep.subr.bf16.mxu0 %v1039
      %1307 = vmatpush1.bf16.msra.mxu0 %v1038
      %1308 = vmatprep.subr.bf16.mxu0 %v1043
      %1309 = vmatpush1.bf16.msra.mxu0 %v1042
      %1310 = vmatprep.subr.bf16.mxu0 %v1047
      %1311 = vmatpush1.bf16.msra.mxu0 %v1046
      %1312 = vmatprep.subr.bf16.mxu0 %v1051
      %1313 = vmatpush1.bf16.msra.mxu0 %v1050
      %1314 = vmatprep.subr.bf16.mxu0 %v1055
      %1315 = vmatpush1.bf16.msra.mxu0 %v1054
      %1316 = vmatprep.subr.bf16.mxu0 0
      %1317 = vmatpush1.bf16.msra.mxu0 0
      %1318 = vmatprep.subr.bf16.mxu0 0
      %1319 = vmatpush1.bf16.msra.mxu0 0
      %1320 = vmatprep.subr.bf16.mxu0 0
      %1321 = vmatpush1.bf16.msra.mxu0 0
      %1322 = vmatprep.subr.bf16.mxu0 0
      %1323 = vmatpush1.bf16.msra.mxu0 0
      %1324 = vmatprep.subr.bf16.mxu0 0
      %1325 = vmatpush1.bf16.msra.mxu0 0
      %1326 = vmatprep.subr.bf16.mxu0 0
      %1327 = vmatpush1.bf16.msra.mxu0 0
      %1328 = vmatprep.subr.bf16.mxu0 0
      %1329 = vmatpush1.bf16.msra.mxu0 0
      %1330 = vmatprep.subr.bf16.mxu0 0
      %1331 = vmatpush1.bf16.msra.mxu0 0
      %1332 = vmatprep.mubr.bf16.mxu0 0
      %1333 = vmatmul.mubr.bf16.gmra.mrb[0].mxu0 %v412
      %v1334 = vpop.f32.mrb[0].mxu0
      %v1335 = vadd.f32 %v1294, %v1334
      %v1336 = vpop.f32.mrb[0].mxu0
      %v1337 = vadd.f32 %v1296, %v1336
      %v1338 = vpop.f32.mrb[0].mxu0
      %v1339 = vpop.f32.mrb[0].mxu0
      %1340 = vdwg.mxu0
      %1341 = vmatprep.subr.bf16.mxu0 %v901
      %1342 = vmatpush1.bf16.msra.mxu0 %v900
      %1343 = vmatprep.subr.bf16.mxu0 %v905
      %1344 = vmatpush1.bf16.msra.mxu0 %v904
      %1345 = vmatprep.subr.bf16.mxu0 %v909
      %1346 = vmatpush1.bf16.msra.mxu0 %v908
      %1347 = vmatprep.subr.bf16.mxu0 %v913
      %1348 = vmatpush1.bf16.msra.mxu0 %v912
      %1349 = vmatprep.subr.bf16.mxu0 %v917
      %1350 = vmatpush1.bf16.msra.mxu0 %v916
      %1351 = vmatprep.subr.bf16.mxu0 %v921
      %1352 = vmatpush1.bf16.msra.mxu0 %v920
      %1353 = vmatprep.subr.bf16.mxu0 %v925
      %1354 = vmatpush1.bf16.msra.mxu0 %v924
      %1355 = vmatprep.subr.bf16.mxu0 %v929
      %1356 = vmatpush1.bf16.msra.mxu0 %v928
      %1357 = vmatprep.subr.bf16.mxu0 %v933
      %1358 = vmatpush1.bf16.msra.mxu0 %v932
      %1359 = vmatprep.subr.bf16.mxu0 %v937
      %1360 = vmatpush1.bf16.msra.mxu0 %v936
      %1361 = vmatprep.subr.bf16.mxu0 %v941
      %1362 = vmatpush1.bf16.msra.mxu0 %v940
      %1363 = vmatprep.subr.bf16.mxu0 %v945
      %1364 = vmatpush1.bf16.msra.mxu0 %v944
      %1365 = vmatprep.subr.bf16.mxu0 %v949
      %1366 = vmatpush1.bf16.msra.mxu0 %v948
      %1367 = vmatprep.subr.bf16.mxu0 %v953
      %1368 = vmatpush1.bf16.msra.mxu0 %v952
      %1369 = vmatprep.subr.bf16.mxu0 %v957
      %1370 = vmatpush1.bf16.msra.mxu0 %v956
      %1371 = vmatprep.subr.bf16.mxu0 %v961
      %1372 = vmatpush1.bf16.msra.mxu0 %v960
      %1373 = vmatprep.mubr.bf16.mxu0 %v409
      %1374 = vmatmul.mubr.bf16.gmra.mrb[0].mxu0 %v408
      %v1375 = vpop.f32.mrb[0].mxu0
      %v1376 = vadd.f32 0.0, %v1375
      %v1377 = vpop.f32.mrb[0].mxu0
      %v1378 = vadd.f32 0.0, %v1377
      %v1379 = vpop.f32.mrb[0].mxu0
      %v1380 = vpop.f32.mrb[0].mxu0
      %1381 = vdwg.mxu0
      %1382 = vmatprep.subr.bf16.mxu0 %v965
      %1383 = vmatpush1.bf16.msra.mxu0 %v964
      %1384 = vmatprep.subr.bf16.mxu0 %v969
      %1385 = vmatpush1.bf16.msra.mxu0 %v968
      %1386 = vmatprep.subr.bf16.mxu0 %v973
      %1387 = vmatpush1.bf16.msra.mxu0 %v972
      %1388 = vmatprep.subr.bf16.mxu0 %v977
      %1389 = vmatpush1.bf16.msra.mxu0 %v976
      %1390 = vmatprep.subr.bf16.mxu0 %v981
      %1391 = vmatpush1.bf16.msra.mxu0 %v980
      %1392 = vmatprep.subr.bf16.mxu0 %v985
      %1393 = vmatpush1.bf16.msra.mxu0 %v984
      %1394 = vmatprep.subr.bf16.mxu0 %v989
      %1395 = vmatpush1.bf16.msra.mxu0 %v988
      %1396 = vmatprep.subr.bf16.mxu0 %v993
      %1397 = vmatpush1.bf16.msra.mxu0 %v992
      %1398 = vmatprep.subr.bf16.mxu0 %v997
      %1399 = vmatpush1.bf16.msra.mxu0 %v996
      %1400 = vmatprep.subr.bf16.mxu0 %v1001
      %1401 = vmatpush1.bf16.msra.mxu0 %v1000
      %1402 = vmatprep.subr.bf16.mxu0 %v1005
      %1403 = vmatpush1.bf16.msra.mxu0 %v1004
      %1404 = vmatprep.subr.bf16.mxu0 %v1009
      %1405 = vmatpush1.bf16.msra.mxu0 %v1008
      %1406 = vmatprep.subr.bf16.mxu0 %v1013
      %1407 = vmatpush1.bf16.msra.mxu0 %v1012
      %1408 = vmatprep.subr.bf16.mxu0 %v1017
      %1409 = vmatpush1.bf16.msra.mxu0 %v1016
      %1410 = vmatprep.subr.bf16.mxu0 %v1021
      %1411 = vmatpush1.bf16.msra.mxu0 %v1020
      %1412 = vmatprep.subr.bf16.mxu0 %v1025
      %1413 = vmatpush1.bf16.msra.mxu0 %v1024
      %1414 = vmatprep.mubr.bf16.mxu0 %v411
      %1415 = vmatmul.mubr.bf16.gmra.mrb[0].mxu0 %v410
      %v1416 = vpop.f32.mrb[0].mxu0
      %v1417 = vadd.f32 %v1376, %v1416
      %v1418 = vpop.f32.mrb[0].mxu0
      %v1419 = vadd.f32 %v1378, %v1418
      %v1420 = vpop.f32.mrb[0].mxu0
      %v1421 = vpop.f32.mrb[0].mxu0
      %1422 = vdwg.mxu0
      %1423 = vmatprep.subr.bf16.mxu0 %v1029
      %1424 = vmatpush1.bf16.msra.mxu0 %v1028
      %1425 = vmatprep.subr.bf16.mxu0 %v1033
      %1426 = vmatpush1.bf16.msra.mxu0 %v1032
      %1427 = vmatprep.subr.bf16.mxu0 %v1037
      %1428 = vmatpush1.bf16.msra.mxu0 %v1036
      %1429 = vmatprep.subr.bf16.mxu0 %v1041
      %1430 = vmatpush1.bf16.msra.mxu0 %v1040
      %1431 = vmatprep.subr.bf16.mxu0 %v1045
      %1432 = vmatpush1.bf16.msra.mxu0 %v1044
      %1433 = vmatprep.subr.bf16.mxu0 %v1049
      %1434 = vmatpush1.bf16.msra.mxu0 %v1048
      %1435 = vmatprep.subr.bf16.mxu0 %v1053
      %1436 = vmatpush1.bf16.msra.mxu0 %v1052
      %1437 = vmatprep.subr.bf16.mxu0 %v1057
      %1438 = vmatpush1.bf16.msra.mxu0 %v1056
      %1439 = vmatprep.subr.bf16.mxu0 0
      %1440 = vmatpush1.bf16.msra.mxu0 0
      %1441 = vmatprep.subr.bf16.mxu0 0
      %1442 = vmatpush1.bf16.msra.mxu0 0
      %1443 = vmatprep.subr.bf16.mxu0 0
      %1444 = vmatpush1.bf16.msra.mxu0 0
      %1445 = vmatprep.subr.bf16.mxu0 0
      %1446 = vmatpush1.bf16.msra.mxu0 0
      %1447 = vmatprep.subr.bf16.mxu0 0
      %1448 = vmatpush1.bf16.msra.mxu0 0
      %1449 = vmatprep.subr.bf16.mxu0 0
      %1450 = vmatpush1.bf16.msra.mxu0 0
      %1451 = vmatprep.subr.bf16.mxu0 0
      %1452 = vmatpush1.bf16.msra.mxu0 0
      %1453 = vmatprep.subr.bf16.mxu0 0
      %1454 = vmatpush1.bf16.msra.mxu0 0
      %1455 = vmatprep.mubr.bf16.mxu0 0
      %1456 = vmatmul.mubr.bf16.gmra.mrb[0].mxu0 %v412
      %v1457 = vpop.f32.mrb[0].mxu0
      %v1458 = vadd.f32 %v1417, %v1457
      %v1459 = vpop.f32.mrb[0].mxu0
      %v1460 = vadd.f32 %v1419, %v1459
      %v1461 = vpop.f32.mrb[0].mxu0
      %v1462 = vpop.f32.mrb[0].mxu0
      %1463 = vdwg.mxu0
      %v1464 = vadd.f32 %v233, %v1335
      %v1465 = vadd.f32 %v234, %v1337
      %v1466 = vadd.f32 %v235, %v1458
      %v1467 = vadd.f32 %v236, %v1460
      %1468 = vst [vmem:[#allocation2] sm:$0xff] %v1464
      %1469 = vst [vmem:[#allocation2 + $0x8] sm:$0xff] %v1465
      %1470 = vst [vmem:[#allocation2 + $0x10] sm:$0xff] %v1466
      %1471 = vst [vmem:[#allocation2 + $0x18] sm:$0xff] %v1467
      %p1472 = scmp.eq.s32.totalorder %s19, 4
      // Predicated region
      $region37: #{nature_cnn_forward.7} parent=31 // pred_check
        %p1473 = pneg %p1472
      $region38: #{nature_cnn_forward.7} parent=31 // pred_check_branch
        %1475 = sbr.rel (%p1473) target = $region40
      $region39: #{nature_cnn_forward.7} parent=31 // pred_region
        %v1476 = vld [vmem:[#allocation2] sm:$0xff]
        %v1477 = vld [vmem:[#allocation2 + $0x8] sm:$0xff]
        %v1478 = vld [vmem:[#allocation2 + $0x10] sm:$0xff]
        %v1479 = vld [vmem:[#allocation2 + $0x18] sm:$0xff]
        %v1480 = vld [vmem:[%s2] sm:$0xf]
        %v1482 = vlaneseq
        %v1483 = vshrl.u32 %v1482, 7
        %v1484 = vsub.s32 0, %v1483
        %v1485 = vrot.slane %v1480, %v1484
        %v1486 = vlaneseq
        %v1487 = vshrl.u32 %v1486, 7
        %v1488 = vsub.s32 1, %v1487
        %v1489 = vrot.slane %v1480, %v1488
        %v1490 = vlaneseq
        %v1491 = vshrl.u32 %v1490, 7
        %v1492 = vsub.s32 2, %v1491
        %v1493 = vrot.slane %v1480, %v1492
        %v1494 = vlaneseq
        %v1495 = vshrl.u32 %v1494, 7
        %v1496 = vsub.s32 3, %v1495
        %v1497 = vrot.slane %v1480, %v1496
        %v1502 = vadd.f32 %v1476, %v1485
        %v1503 = vadd.f32 %v1477, %v1489
        %v1504 = vadd.f32 %v1478, %v1493
        %v1505 = vadd.f32 %v1479, %v1497
        %v1506 = vmax.f32 %v1502, 0.0
        %v1507 = vmax.f32 %v1503, 0.0
        %v1508 = vmax.f32 %v1504, 0.0
        %v1509 = vmax.f32 %v1505, 0.0
        %1510 = vst [vmem:[%s223] sm:$0xff] %v1506
        %1511 = vst [vmem:[%s223 + $0x8] sm:$0xff] %v1507
        %1512 = vst [vmem:[%s223 + $0x10] sm:$0xff] %v1508
        %1513 = vst [vmem:[%s223 + $0x18] sm:$0xff] %v1509
      $region40: #{nature_cnn_forward.7} parent=31 // pred_fallthru
        _
      %p1514 = scmp.lt.s32.totalorder %s18, 0
      %s1515 = scalar_select %p1514, %s18, 0
      %s1516 = smul.addr %s1515, 4
      %s1517 = smul.addr %s1516, 8
      %s1518 = scalar_lea.vmem %s3, %s1517
      // Predicated region
      $region41: #{nature_cnn_forward.7} parent=31 // pred_check
        %p1519 = pneg %p119
      $region42: #{nature_cnn_forward.7} parent=31 // pred_check_branch
        %1521 = sbr.rel (%p1519) target = $region44
      $region43: #{nature_cnn_forward.7} parent=31 // pred_region
        _
      $region44: #{nature_cnn_forward.7} parent=31 // pred_fallthru
        _
      // Predicated region
      $region45: #{nature_cnn_forward.7} parent=31 // pred_check
        %p1522 = pneg %p119
      $region46: #{nature_cnn_forward.7} parent=31 // pred_check_branch
        %1524 = sbr.rel (%p1522) target = $region48
      $region47: #{nature_cnn_forward.7} parent=31 // pred_region
        %p1525 = scmp.lt.s32.totalorder %s18, 0
        %s1526 = scalar_select %p1525, %s18, 0
        %s1527 = smul.addr %s1526, 4
        %s1528 = smul.addr %s1527, 8
        %s1529 = scalar_lea.vmem %s3, %s1528
      $region48: #{nature_cnn_forward.7} parent=31 // pred_fallthru
        _
    $region32: #{nature_cnn_forward.7} parent=5 // pred_fallthru
      _
    %p1530 = scmp.le.s32.totalorder 2, %s9
    // Predicated region
    $region49: #{nature_cnn_forward.7} parent=5 // pred_check
      %p1531 = pneg %p1530
    $region50: #{nature_cnn_forward.7} parent=5 // pred_check_branch
      %1533 = sbr.rel (%p1531) target = $region52
    $region51: #{nature_cnn_forward.7} parent=5 // pred_region
      %s1534 = ssub.s32 %s9, 2
    $region52: #{nature_cnn_forward.7} parent=5 // pred_fallthru
      _
  $region6: #{nature_cnn_forward.7} parent=0 // loop_footer
    %s13 = sadd.s32 1, %s9
  $region7: #{nature_cnn_forward.7} parent=0 // loop_footer_branch
    %8 = sbr.rel target = $region3
  $region8: #{nature_cnn_forward.7} parent=0 // loop_exit
    _

</llo_original>
